<compile_context>
chip_gen: v6e
topology: v6e:2x2x1
jax: 0.10.0
libtpu: 0.0.40
codegen_flags: <defaults>
</compile_context>

<pallas_src>
import functools

import jax
import jax.numpy as jnp
import numpy as np
from jax import lax
from jax.experimental import pallas as pl
from jax.experimental.pallas import tpu as pltpu

EPS = 1e-5

# MXU operand dtype. On v6e/v7x set to jnp.bfloat16 (~2x matmul rate; f32
# accumulation is kept via preferred_element_type) and relax the test
# tolerance; default f32 so the strict 1e-4 check below holds.
MXU_DTYPE = jnp.float32


# ----------------------------- Pallas kernel ------------------------------- #

def _conv_bn_relu_kernel(D, H, W, Cin, Cout_p, K, add_residual, *refs):
    """Fused KxKxK 'same' conv + folded-BN scale/shift + ReLU (+ residual add).

    refs (in order):
      x_ref     (1, D+K-1, H+K-1, W+K-1, Cin)  zero-padded input tile
      w_ref     (K^3*Cin, Cout_p)   weight, row = ((kd*K + kh)*K + kw)*Cin + ci
      scale_ref (1, Cout_p)         folded BN scale       (0 in padded lanes)
      shift_ref (1, Cout_p)         folded bias+BN shift  (0 in padded lanes)
      [rx_ref   (1, D, H, W, Cr)    residual-branch input ]
      [rw_ref   (Cr, Cout_p)        1x1x1 residual weight ]
      o_ref     (1, D, H, W, Cout_p) lane-dense output
    """
    if add_residual:
        x_ref, w_ref, scale_ref, shift_ref, rx_ref, rw_ref, o_ref = refs
    else:
        x_ref, w_ref, scale_ref, shift_ref, o_ref = refs

    xp = x_ref[0]                                    # (Dp, Hp, Wp, Cin)

    # Hierarchical im2col.  The expensive minor-axis (W / sublane) shifts are
    # done once (K slices), then H and D shifts only touch major dims.  All
    # concatenation is along the channel/lane axis, so the final channel index
    # is ((kd*K + kh)*K + kw)*Cin + ci — matching the weight layout.
    x = jnp.concatenate([xp[:, :, kw:kw + W, :] for kw in range(K)], axis=-1)
    x = jnp.concatenate([x[:, kh:kh + H, :, :] for kh in range(K)], axis=-1)
    x = jnp.concatenate([x[kd:kd + D] for kd in range(K)], axis=-1)
    patches = x.reshape(D * H * W, K * K * K * Cin)

    # Single large-contraction GEMM on the MXU, f32 accumulation, lane-dense N.
    acc = jnp.dot(patches.astype(MXU_DTYPE), w_ref[...],
                  preferred_element_type=jnp.float32)

    y = acc * scale_ref[...] + shift_ref[...]        # folded conv bias + BN
    y = jnp.maximum(y, 0.0)                          # ReLU
    if add_residual:                                 # fused 1x1x1 residual conv
        rx = rx_ref[0].reshape(D * H * W, -1).astype(MXU_DTYPE)
        y = y + jnp.dot(rx, rw_ref[...], preferred_element_type=jnp.float32)
    o_ref[...] = y.reshape(1, D, H, W, Cout_p).astype(o_ref.dtype)


# ------------------------------ JAX wrappers -------------------------------- #

def _conv3d_bn_relu(x, w2d, scale, shift, residual=None, K=3):
    """x: (B, D, H, W, Cin) NDHWC.  w2d: (K^3*Cin, Cout_p).  scale/shift: (1, Cout_p).
    residual: optional (rx (B,D,H,W,Cr), rw (Cr, Cout_p)), added after BN+ReLU.
    Returns (B, D, H, W, Cout_p) with zeros in the padded channel lanes."""
    B, D, H, W, Cin = x.shape
    Cout_p = w2d.shape[1]
    pad = K // 2
    xp = jnp.pad(x, ((0, 0), (pad, pad), (pad, pad), (pad, pad), (0, 0)))
    Dp, Hp, Wp = D + 2 * pad, H + 2 * pad, W + 2 * pad
    add_res = residual is not None

    kernel = functools.partial(_conv_bn_relu_kernel,
                               D, H, W, Cin, Cout_p, K, add_res)

    in_specs = [
        pl.BlockSpec((1, Dp, Hp, Wp, Cin), lambda b: (b, 0, 0, 0, 0)),
        pl.BlockSpec(w2d.shape, lambda b: (0, 0)),
        pl.BlockSpec((1, Cout_p), lambda b: (0, 0)),
        pl.BlockSpec((1, Cout_p), lambda b: (0, 0)),
    ]
    args = [xp, w2d, scale, shift]
    if add_res:
        rx, rw = residual
        in_specs += [
            pl.BlockSpec((1, D, H, W, rx.shape[-1]), lambda b: (b, 0, 0, 0, 0)),
            pl.BlockSpec(rw.shape, lambda b: (0, 0)),
        ]
        args += [rx, rw]

    return pl.pallas_call(
        kernel,
        out_shape=jax.ShapeDtypeStruct((B, D, H, W, Cout_p), x.dtype),
        grid_spec=pltpu.PrefetchScalarGridSpec(
            num_scalar_prefetch=0,
            grid=(B,),
            in_specs=in_specs,
            out_specs=pl.BlockSpec((1, D, H, W, Cout_p),
                                   lambda b: (b, 0, 0, 0, 0)),
        ),
        compiler_params=pltpu.CompilerParams(
            dimension_semantics=("parallel",)),
    )(*args)


def _round_up(n, m):
    return ((n + m - 1) // m) * m


def _fold_bn(bias, gamma, beta, mean, var, cout_p):
    scale = gamma / jnp.sqrt(var + EPS)
    shift = beta + (bias - mean) * scale
    cout = scale.shape[0]
    scale = jnp.pad(scale, (0, cout_p - cout))
    shift = jnp.pad(shift, (0, cout_p - cout))
    return scale.reshape(1, cout_p), shift.reshape(1, cout_p)


def _weight_to_gemm(w, cout_p):
    """(Cout, Cin, K, K, K) -> (K^3*Cin, Cout_p), row = ((kd*K+kh)*K+kw)*Cin+ci."""
    cout, cin, K, _, _ = w.shape
    w2d = jnp.transpose(w, (2, 3, 4, 1, 0)).reshape(K * K * K * cin, cout)
    return jnp.pad(w2d, ((0, 0), (0, cout_p - cout))).astype(MXU_DTYPE)


def conv3d_block_forward(x_ncdhw, p, residual=True):
    """Pallas implementation of Conv3D_Block.forward (eval-mode BatchNorm)."""
    x = jnp.transpose(x_ncdhw, (0, 2, 3, 4, 1))          # NCDHW -> NDHWC
    cout = p["w1"].shape[0]
    cout_p = _round_up(cout, 128)                        # lane-dense channel pad

    w1 = _weight_to_gemm(p["w1"], cout_p)
    w2 = _weight_to_gemm(p["w2"], cout_p)
    s1, sh1 = _fold_bn(p["b1"], p["g1"], p["be1"], p["m1"], p["v1"], cout_p)
    s2, sh2 = _fold_bn(p["b2"], p["g2"], p["be2"], p["m2"], p["v2"], cout_p)

    res = None
    if residual:
        wres = p["wres"][:, :, 0, 0, 0].T                # (Cin, Cout)
        wres = jnp.pad(wres, ((0, 0), (0, cout_p - cout))).astype(MXU_DTYPE)
        res = (x, wres)

    h = _conv3d_bn_relu(x, w1, s1, sh1)                  # conv1 + BN + ReLU
    # conv2 + BN + ReLU with the 1x1x1 residual conv fused into its epilogue;
    # the padded channel lanes of h are dropped inside the halo-pad copy.
    y = _conv3d_bn_relu(h[..., :cout], w2, s2, sh2, residual=res)

    return jnp.transpose(y[..., :cout], (0, 4, 1, 2, 3))  # drop pad, to NCDHW


# --------------------------- pure-JAX reference ----------------------------- #

def _ref_conv_bn_relu(x, w, b, gamma, beta, mean, var, pad):
    y = lax.conv_general_dilated(
        x, w, window_strides=(1, 1, 1),
        padding=[(pad, pad)] * 3,
        dimension_numbers=("NCDHW", "OIDHW", "NCDHW"))
    y = y + b.reshape(1, -1, 1, 1, 1)
    y = ((y - mean.reshape(1, -1, 1, 1, 1))
         / jnp.sqrt(var.reshape(1, -1, 1, 1, 1) + EPS)
         * gamma.reshape(1, -1, 1, 1, 1) + beta.reshape(1, -1, 1, 1, 1))
    return jnp.maximum(y, 0.0)


def ref_forward(x, p, residual=True):
    h = _ref_conv_bn_relu(x, p["w1"], p["b1"], p["g1"], p["be1"], p["m1"], p["v1"], 1)
    h = _ref_conv_bn_relu(h, p["w2"], p["b2"], p["g2"], p["be2"], p["m2"], p["v2"], 1)
    if residual:
        r = lax.conv_general_dilated(
            x, p["wres"], window_strides=(1, 1, 1), padding=[(0, 0)] * 3,
            dimension_numbers=("NCDHW", "OIDHW", "NCDHW"))
        h = h + r
    return h


# ----------------------------------- main ----------------------------------- #

def init_params(key, cin, cout, K=3):
    ks = jax.random.split(key, 11)
    p = {
        "w1": 0.1 * jax.random.normal(ks[0], (cout, cin, K, K, K), jnp.float32),
        "b1": 0.05 * jax.random.normal(ks[1], (cout,), jnp.float32),
        "g1": 1.0 + 0.1 * jax.random.normal(ks[2], (cout,), jnp.float32),
        "be1": 0.05 * jax.random.normal(ks[3], (cout,), jnp.float32),
        "m1": 0.05 * jax.random.normal(ks[4], (cout,), jnp.float32),
        "v1": 1.0 + 0.1 * jax.random.uniform(ks[5], (cout,), jnp.float32),
        "w2": 0.1 * jax.random.normal(ks[6], (cout, cout, K, K, K), jnp.float32),
        "b2": 0.05 * jax.random.normal(ks[7], (cout,), jnp.float32),
        "g2": 1.0 + 0.1 * jax.random.normal(ks[8], (cout,), jnp.float32),
        "be2": 0.05 * jax.random.normal(ks[9], (cout,), jnp.float32),
        "m2": jnp.zeros((cout,), jnp.float32),
        "v2": jnp.ones((cout,), jnp.float32),
        "wres": 0.1 * jax.random.normal(ks[10], (cout, cin, 1, 1, 1), jnp.float32),
    }
    return p


if __name__ == "__main__":
    key = jax.random.PRNGKey(0)
    k_x, k_p = jax.random.split(key)

    B, Cin, Cout, D, H, W = 2, 4, 8, 8, 8, 8
    x = jax.random.normal(k_x, (B, Cin, D, H, W), jnp.float32)  # PyTorch NCDHW
    params = init_params(k_p, Cin, Cout)

    out = conv3d_block_forward(x, params, residual=True)
    out = jax.block_until_ready(out)

    ref = jax.block_until_ready(ref_forward(x, params, residual=True))
    assert out.shape == (B, Cout, D, H, W), out.shape
    np.testing.assert_allclose(np.asarray(out), np.asarray(ref),
                               rtol=1e-4, atol=1e-4)

    print("KERNEL_OK")
</pallas_src>

<mosaic_0001>
module attributes {stable_mosaic.version = 11 : i64} {
  func.func @_conv_bn_relu_kernel(%arg0: i32, %arg1: memref<1x10x10x10x4xf32, #tpu.memory_space<vmem>>, %arg2: memref<108x128xf32, #tpu.memory_space<vmem>>, %arg3: memref<1x128xf32, #tpu.memory_space<vmem>>, %arg4: memref<1x128xf32, #tpu.memory_space<vmem>>, %arg5: memref<1x8x8x8x128xf32, #tpu.memory_space<vmem>>) attributes {dimension_semantics = [#tpu.dimension_semantics<parallel>], iteration_bounds = array<i64: 2>, scalar_prefetch = 0 : i64, scratch_operands = 0 : i64, tpu.core_type = #tpu.core_type<tc>, window_params = [{transform_indices = @transform_0, window_bounds = array<i64: 1, 10, 10, 10, 4>}, {pipeline_mode = #tpu.pipeline_mode<synchronous>, transform_indices = @transform_1, window_bounds = array<i64: 108, 128>}, {pipeline_mode = #tpu.pipeline_mode<synchronous>, transform_indices = @transform_2, window_bounds = array<i64: 1, 128>}, {pipeline_mode = #tpu.pipeline_mode<synchronous>, transform_indices = @transform_3, window_bounds = array<i64: 1, 128>}, {transform_indices = @transform_4, window_bounds = array<i64: 1, 8, 8, 8, 128>}]} {
    %c0 = arith.constant 0 : index
    %c0_0 = arith.constant 0 : index
    %c0_1 = arith.constant 0 : index
    %c0_2 = arith.constant 0 : index
    %c0_3 = arith.constant 0 : index
    %0 = vector.load %arg1[%c0, %c0_0, %c0_1, %c0_2, %c0_3] : memref<1x10x10x10x4xf32, #tpu.memory_space<vmem>>, vector<1x10x10x10x4xf32>
    %1 = vector.shape_cast %0 : vector<1x10x10x10x4xf32> to vector<10x10x10x4xf32>
    %2 = vector.extract_strided_slice %1 {offsets = [0, 0, 0, 0], sizes = [10, 10, 8, 4], strides = [1, 1, 1, 1]} : vector<10x10x10x4xf32> to vector<10x10x8x4xf32>
    %3 = vector.extract_strided_slice %1 {offsets = [0, 0, 1, 0], sizes = [10, 10, 8, 4], strides = [1, 1, 1, 1]} : vector<10x10x10x4xf32> to vector<10x10x8x4xf32>
    %4 = vector.extract_strided_slice %1 {offsets = [0, 0, 2, 0], sizes = [10, 10, 8, 4], strides = [1, 1, 1, 1]} : vector<10x10x10x4xf32> to vector<10x10x8x4xf32>
    %5 = tpu.concatenate %2, %3, %4 in 3 : vector<10x10x8x4xf32>, vector<10x10x8x4xf32>, vector<10x10x8x4xf32> -> vector<10x10x8x12xf32>
    %6 = vector.extract_strided_slice %5 {offsets = [0, 0, 0, 0], sizes = [10, 8, 8, 12], strides = [1, 1, 1, 1]} : vector<10x10x8x12xf32> to vector<10x8x8x12xf32>
    %7 = vector.extract_strided_slice %5 {offsets = [0, 1, 0, 0], sizes = [10, 8, 8, 12], strides = [1, 1, 1, 1]} : vector<10x10x8x12xf32> to vector<10x8x8x12xf32>
    %8 = vector.extract_strided_slice %5 {offsets = [0, 2, 0, 0], sizes = [10, 8, 8, 12], strides = [1, 1, 1, 1]} : vector<10x10x8x12xf32> to vector<10x8x8x12xf32>
    %9 = tpu.concatenate %6, %7, %8 in 3 : vector<10x8x8x12xf32>, vector<10x8x8x12xf32>, vector<10x8x8x12xf32> -> vector<10x8x8x36xf32>
    %10 = vector.extract_strided_slice %9 {offsets = [0, 0, 0, 0], sizes = [8, 8, 8, 36], strides = [1, 1, 1, 1]} : vector<10x8x8x36xf32> to vector<8x8x8x36xf32>
    %11 = vector.extract_strided_slice %9 {offsets = [1, 0, 0, 0], sizes = [8, 8, 8, 36], strides = [1, 1, 1, 1]} : vector<10x8x8x36xf32> to vector<8x8x8x36xf32>
    %12 = vector.extract_strided_slice %9 {offsets = [2, 0, 0, 0], sizes = [8, 8, 8, 36], strides = [1, 1, 1, 1]} : vector<10x8x8x36xf32> to vector<8x8x8x36xf32>
    %13 = tpu.concatenate %10, %11, %12 in 3 : vector<8x8x8x36xf32>, vector<8x8x8x36xf32>, vector<8x8x8x36xf32> -> vector<8x8x8x108xf32>
    %14 = vector.shape_cast %13 : vector<8x8x8x108xf32> to vector<512x108xf32>
    %c0_4 = arith.constant 0 : index
    %c0_5 = arith.constant 0 : index
    %15 = vector.load %arg2[%c0_4, %c0_5] : memref<108x128xf32, #tpu.memory_space<vmem>>, vector<108x128xf32>
    %cst = arith.constant dense<0.000000e+00> : vector<512x128xf32>
    %16 = tpu.matmul %14, %15, %cst {dimension_numbers = #tpu.dot_dimension_numbers<[1], [0], [0], [1], [0, 0, 1, 1], [], []>} : vector<512x108xf32>, vector<108x128xf32>, vector<512x128xf32> -> vector<512x128xf32>
    %c0_6 = arith.constant 0 : index
    %c0_7 = arith.constant 0 : index
    %17 = vector.load %arg3[%c0_6, %c0_7] : memref<1x128xf32, #tpu.memory_space<vmem>>, vector<1x128xf32>
    %18 = vector.broadcast %17 : vector<1x128xf32> to vector<512x128xf32>
    %19 = arith.mulf %16, %18 : vector<512x128xf32>
    %c0_8 = arith.constant 0 : index
    %c0_9 = arith.constant 0 : index
    %20 = vector.load %arg4[%c0_8, %c0_9] : memref<1x128xf32, #tpu.memory_space<vmem>>, vector<1x128xf32>
    %21 = vector.broadcast %20 : vector<1x128xf32> to vector<512x128xf32>
    %22 = arith.addf %19, %21 : vector<512x128xf32>
    %cst_10 = arith.constant 0.000000e+00 : f32
    %23 = vector.broadcast %cst_10 : f32 to vector<512x128xf32>
    %24 = arith.maximumf %22, %23 : vector<512x128xf32>
    %25 = vector.shape_cast %24 : vector<512x128xf32> to vector<1x8x8x8x128xf32>
    %c0_11 = arith.constant 0 : index
    %c0_12 = arith.constant 0 : index
    %c0_13 = arith.constant 0 : index
    %c0_14 = arith.constant 0 : index
    %c0_15 = arith.constant 0 : index
    %26 = vector.load %arg5[%c0_11, %c0_12, %c0_13, %c0_14, %c0_15] : memref<1x8x8x8x128xf32, #tpu.memory_space<vmem>>, vector<1x8x8x8x128xf32>
    tpu.vector_store %arg5[%c0_11, %c0_12, %c0_13, %c0_14, %c0_15], %25 {strides = array<i32>} : memref<1x8x8x8x128xf32, #tpu.memory_space<vmem>>, vector<1x8x8x8x128xf32>,
    return
  }
  func.func @transform_0(%arg0: i32) -> (i32, i32, i32, i32, i32) {
    %c0_i32 = arith.constant 0 : i32
    %c0_i32_0 = arith.constant 0 : i32
    %c0_i32_1 = arith.constant 0 : i32
    %c0_i32_2 = arith.constant 0 : i32
    %c0_i32_3 = arith.constant 0 : i32
    return %arg0, %c0_i32, %c0_i32_0, %c0_i32_1, %c0_i32_2 : i32, i32, i32, i32, i32
  }
  func.func @transform_1(%arg0: i32) -> (i32, i32) {
    %c0_i32 = arith.constant 0 : i32
    %c0_i32_0 = arith.constant 0 : i32
    %c0_i32_1 = arith.constant 0 : i32
    return %c0_i32, %c0_i32_0 : i32, i32
  }
  func.func @transform_2(%arg0: i32) -> (i32, i32) {
    %c0_i32 = arith.constant 0 : i32
    %c0_i32_0 = arith.constant 0 : i32
    %c0_i32_1 = arith.constant 0 : i32
    return %c0_i32, %c0_i32_0 : i32, i32
  }
  func.func @transform_3(%arg0: i32) -> (i32, i32) {
    %c0_i32 = arith.constant 0 : i32
    %c0_i32_0 = arith.constant 0 : i32
    %c0_i32_1 = arith.constant 0 : i32
    return %c0_i32, %c0_i32_0 : i32, i32
  }
  func.func @transform_4(%arg0: i32) -> (i32, i32, i32, i32, i32) {
    %c0_i32 = arith.constant 0 : i32
    %c0_i32_0 = arith.constant 0 : i32
    %c0_i32_1 = arith.constant 0 : i32
    %c0_i32_2 = arith.constant 0 : i32
    %c0_i32_3 = arith.constant 0 : i32
    return %arg0, %c0_i32, %c0_i32_0, %c0_i32_1, %c0_i32_2 : i32, i32, i32, i32, i32
  }
}

</mosaic_0001>

<llo_original>
// kernel: tpu_custom_call.1
$region0: #{tpu_custom_call.1}
  #allocation0 [shape = 'u32[]', space=smem, size = 0x4, offset = 0x4, fixed_abs, tag = 'smem constant byte address 0x4 - core index']
  #allocation1 [shape = 'u32[144,128]{1,0:T(1,128)}', space=vmem, size = 0x12000, scoped, tag = 'internal scratch']
  %s0 = inlined_call_operand.vmem [shape: f32[2,10,10,10,4], index: 0, kind: input, shape index: {}]
  %s1 = inlined_call_operand.vmem [shape: f32[108,128], index: 1, kind: input, shape index: {}]
  %s2 = inlined_call_operand.vmem [shape: f32[1,128], index: 2, kind: input, shape index: {}]
  %s3 = inlined_call_operand.vmem [shape: f32[1,128], index: 3, kind: input, shape index: {}]
  %s4 = inlined_call_operand.hbm [shape: f32[2,8,8,8,128], index: 4, kind: output, shape index: {}]
  %s5 = sld [smem:[#allocation0]]
  $region49: #{tpu_custom_call.1} parent=0
    _
  %s7 = ssub.s32 1, %s5
  %s8 = scalar_select 0, %s7, %s5
  $region1: #{tpu_custom_call.1} parent=0
    #allocation2 [shape = 'u8[524288]{0}', space=vmem, size = 0x80000, scoped, tag = 'output window, operand 0']
    #allocation3 [shape = 's32[2]{0}', space=sflag, size = 0x8, scoped, tag = 'scoped memory for tpu_custom_call.1']
    %9 = vsyncpa [#allocation3], 0
    %s10 = scalar_lea.sflag [#allocation3], 1
    %11 = vsyncpa %s10, 0
    loop: start=0, step=1, limit=4
    $region2: #{tpu_custom_call.1} parent=1 // loop_pre_header
      _
    $region3: #{tpu_custom_call.1} parent=1 // loop_header
      %s13 = sphi 0, %s17
      %p14 = scmp.ge.s32.totalorder %s13, 4
      %s23 = sphi 0, %s25
      %s26 = sphi 0, %s23
      %s27 = sphi 0, %s26
      %s43 = sphi 0, %s27
      %s47 = sphi 0, %s47
      %s49 = sphi 0, %s47
      %s50 = sphi 0, %s49
      %s64 = sphi 0, %s50
      %s68 = sphi 0, %s68
      %s70 = sphi 0, %s68
      %s71 = sphi 0, %s70
      %s85 = sphi 0, %s71
      %s89 = sphi 0, %s89
      %s91 = sphi 0, %s89
      %s92 = sphi 0, %s91
      %s106 = sphi 0, %s92
      %s112 = sphi 0, %s114
      %s115 = sphi 0, %s112
      %s116 = sphi 0, %s115
      %s132 = sphi 0, %s116
    $region4: #{tpu_custom_call.1} parent=1 // loop_header_branch
      %16 = sbr.rel (%p14) target = $region8
    $region5: #{tpu_custom_call.1} parent=1 // loop_body
      %s18 = ssub.s32 %s13, 1
      %s19 = ssub.s32 %s13, 2
      %s20 = sadd.s32 %s13, 1
      %s21 = ssub.s32 %s13, %s20
      %p22 = scmp.eq.s32.totalorder %s21, 0
      %s24 = sadd.s32 %s23, 1
      %s25 = scalar_select %p22, %s23, %s24
      %p28 = pneg %p22
      %p29 = scmp.eq.s32.totalorder %s13, 1
      %p30 = por %p28, %p29
      %p31 = scmp.ne.s32.totalorder %s23, %s26
      %p32 = scmp.eq.s32.totalorder %s13, 0
      %p33 = por %p31, %p32
      %p34 = scmp.ne.s32.totalorder %s23, %s26
      %p35 = scmp.eq.s32.totalorder %s18, 1
      %p36 = por %p34, %p35
      %p37 = scmp.ne.s32.totalorder %s26, %s27
      %p38 = scmp.eq.s32.totalorder %s18, 0
      %p39 = por %p37, %p38
      %p40 = scmp.ne.s32.totalorder %s26, %s27
      %p41 = scmp.eq.s32.totalorder %s19, 1
      %p42 = por %p40, %p41
      %p44 = scmp.ne.s32.totalorder %s27, %s43
      %p45 = scmp.eq.s32.totalorder %s19, 0
      %p46 = por %p44, %p45
      %s48 = sadd.s32 %s47, 1
      %p51 = scmp.eq.s32.totalorder %s13, 1
      %p52 = scmp.ne.s32.totalorder %s47, %s49
      %p53 = scmp.eq.s32.totalorder %s13, 0
      %p54 = por %p52, %p53
      %p55 = scmp.ne.s32.totalorder %s47, %s49
      %p56 = scmp.eq.s32.totalorder %s18, 1
      %p57 = por %p55, %p56
      %p58 = scmp.ne.s32.totalorder %s49, %s50
      %p59 = scmp.eq.s32.totalorder %s18, 0
      %p60 = por %p58, %p59
      %p61 = scmp.ne.s32.totalorder %s49, %s50
      %p62 = scmp.eq.s32.totalorder %s19, 1
      %p63 = por %p61, %p62
      %p65 = scmp.ne.s32.totalorder %s50, %s64
      %p66 = scmp.eq.s32.totalorder %s19, 0
      %p67 = por %p65, %p66
      %s69 = sadd.s32 %s68, 1
      %p72 = scmp.eq.s32.totalorder %s13, 1
      %p73 = scmp.ne.s32.totalorder %s68, %s70
      %p74 = scmp.eq.s32.totalorder %s13, 0
      %p75 = por %p73, %p74
      %p76 = scmp.ne.s32.totalorder %s68, %s70
      %p77 = scmp.eq.s32.totalorder %s18, 1
      %p78 = por %p76, %p77
      %p79 = scmp.ne.s32.totalorder %s70, %s71
      %p80 = scmp.eq.s32.totalorder %s18, 0
      %p81 = por %p79, %p80
      %p82 = scmp.ne.s32.totalorder %s70, %s71
      %p83 = scmp.eq.s32.totalorder %s19, 1
      %p84 = por %p82, %p83
      %p86 = scmp.ne.s32.totalorder %s71, %s85
      %p87 = scmp.eq.s32.totalorder %s19, 0
      %p88 = por %p86, %p87
      %s90 = sadd.s32 %s89, 1
      %p93 = scmp.eq.s32.totalorder %s13, 1
      %p94 = scmp.ne.s32.totalorder %s89, %s91
      %p95 = scmp.eq.s32.totalorder %s13, 0
      %p96 = por %p94, %p95
      %p97 = scmp.ne.s32.totalorder %s89, %s91
      %p98 = scmp.eq.s32.totalorder %s18, 1
      %p99 = por %p97, %p98
      %p100 = scmp.ne.s32.totalorder %s91, %s92
      %p101 = scmp.eq.s32.totalorder %s18, 0
      %p102 = por %p100, %p101
      %p103 = scmp.ne.s32.totalorder %s91, %s92
      %p104 = scmp.eq.s32.totalorder %s19, 1
      %p105 = por %p103, %p104
      %p107 = scmp.ne.s32.totalorder %s92, %s106
      %p108 = scmp.eq.s32.totalorder %s19, 0
      %p109 = por %p107, %p108
      %s110 = ssub.s32 %s13, %s20
      %p111 = scmp.eq.s32.totalorder %s110, 0
      %s113 = sadd.s32 %s112, 1
      %s114 = scalar_select %p111, %s112, %s113
      %p117 = pneg %p111
      %p118 = scmp.eq.s32.totalorder %s13, 1
      %p119 = por %p117, %p118
      %p120 = scmp.ne.s32.totalorder %s112, %s115
      %p121 = scmp.eq.s32.totalorder %s13, 0
      %p122 = por %p120, %p121
      %p123 = scmp.ne.s32.totalorder %s112, %s115
      %p124 = scmp.eq.s32.totalorder %s18, 1
      %p125 = por %p123, %p124
      %p126 = scmp.ne.s32.totalorder %s115, %s116
      %p127 = scmp.eq.s32.totalorder %s18, 0
      %p128 = por %p126, %p127
      %p129 = scmp.ne.s32.totalorder %s115, %s116
      %p130 = scmp.eq.s32.totalorder %s19, 1
      %p131 = por %p129, %p130
      %p133 = scmp.ne.s32.totalorder %s116, %s132
      %p134 = scmp.eq.s32.totalorder %s19, 0
      %p135 = por %p133, %p134
      %p136 = scmp.le.s32.totalorder 1, %s13
      %p137 = scmp.lt.s32.totalorder %s13, 3
      %p138 = pnand %p136, %p137
      %p139 = pneg %p138
      // Predicated region
      $region9: #{tpu_custom_call.1} parent=5 // pred_check
        _
      $region10: #{tpu_custom_call.1} parent=5 // pred_check_branch
        %141 = sbr.rel (%p138) target = $region12
      $region11: #{tpu_custom_call.1} parent=5 // pred_region
        %s142 = ssub.s32 %s13, 1
        // Predicated region
        $region13: #{tpu_custom_call.1} parent=11 // pred_check
          %p143 = pneg %p60
        $region14: #{tpu_custom_call.1} parent=11 // pred_check_branch
          %145 = sbr.rel (%p143) target = $region16
        $region15: #{tpu_custom_call.1} parent=11 // pred_region
          _
        $region16: #{tpu_custom_call.1} parent=11 // pred_fallthru
          _
        // Predicated region
        $region17: #{tpu_custom_call.1} parent=11 // pred_check
          %p146 = pneg %p81
        $region18: #{tpu_custom_call.1} parent=11 // pred_check_branch
          %148 = sbr.rel (%p146) target = $region20
        $region19: #{tpu_custom_call.1} parent=11 // pred_region
          _
        $region20: #{tpu_custom_call.1} parent=11 // pred_fallthru
          _
        // Predicated region
        $region21: #{tpu_custom_call.1} parent=11 // pred_check
          %p149 = pneg %p102
        $region22: #{tpu_custom_call.1} parent=11 // pred_check_branch
          %151 = sbr.rel (%p149) target = $region24
        $region23: #{tpu_custom_call.1} parent=11 // pred_region
          _
        $region24: #{tpu_custom_call.1} parent=11 // pred_fallthru
          _
      $region12: #{tpu_custom_call.1} parent=5 // pred_fallthru
        _
      %p152 = scmp.lt.s32.totalorder %s13, 2
      // Predicated region
      $region25: #{tpu_custom_call.1} parent=5 // pred_check
        %p153 = pneg %p152
      $region26: #{tpu_custom_call.1} parent=5 // pred_check_branch
        %155 = sbr.rel (%p153) target = $region28
      $region27: #{tpu_custom_call.1} parent=5 // pred_region
        // Predicated region
        $region29: #{tpu_custom_call.1} parent=27 // pred_check
          %p156 = pneg %p33
        $region30: #{tpu_custom_call.1} parent=27 // pred_check_branch
          %158 = sbr.rel (%p156) target = $region32
        $region31: #{tpu_custom_call.1} parent=27 // pred_region
          %p159 = scmp.lt.s32.totalorder %s13, 1
          %s160 = scalar_select %p159, %s13, 1
          %s161 = smul.addr %s160, 200
          %s162 = smul.addr %s161, 8
          %s163 = scalar_lea.vmem %s0, %s162
        $region32: #{tpu_custom_call.1} parent=27 // pred_fallthru
          _
      $region28: #{tpu_custom_call.1} parent=5 // pred_fallthru
        _
      %p164 = scmp.le.s32.totalorder 1, %s13
      %p165 = scmp.lt.s32.totalorder %s13, 3
      %p166 = pnand %p164, %p165
      %p167 = pneg %p166
      // Predicated region
      $region33: #{tpu_custom_call.1} parent=5 // pred_check
        _
      $region34: #{tpu_custom_call.1} parent=5 // pred_check_branch
        %169 = sbr.rel (%p166) target = $region36
      $region35: #{tpu_custom_call.1} parent=5 // pred_region
        %s170 = ssub.s32 %s13, 1
        %p171 = scmp.lt.s32.totalorder %s18, 1
        %s172 = scalar_select %p171, %s18, 1
        %s173 = smul.addr %s172, 200
        %s174 = smul.addr %s173, 8
        %s175 = scalar_lea.vmem %s0, %s174
        %p176 = pneg %p39
        %p177 = pneg %p36
        %p178 = pneg %p60
        %p179 = pneg %p57
        %p180 = pneg %p81
        %p181 = pneg %p78
        %p182 = pneg %p102
        %p183 = pneg %p99
        %p184 = pneg %p128
        %p185 = pneg %p125
        %s186 = sand.u32 %s115, 1
        %s187 = scalar_lea.sflag [#allocation3], %s186
        %s188 = sand.u32 %s115, 1
        %s189 = smul.addr %s188, 512
        %s190 = scalar_lea.vmem [#allocation2], %s189
        %p191 = scmp.lt.s32.totalorder %s18, 1
        %s192 = scalar_select %p191, %s18, 1
        %s193 = smul.addr %s192, 200
        %s194 = smul.addr %s193, 8
        %s195 = scalar_lea.vmem %s0, %s194
        %v196 = vld [vmem:[%s195] sm:$0xff]
        %v197 = vld [vmem:[%s195 + $0x8] sm:$0x3]
        %v198 = vld [vmem:[%s195 + $0x10] sm:$0xff]
        %v199 = vld [vmem:[%s195 + $0x18] sm:$0x3]
        %v200 = vld [vmem:[%s195 + $0x20] sm:$0xff]
        %v201 = vld [vmem:[%s195 + $0x28] sm:$0x3]
        %v202 = vld [vmem:[%s195 + $0x30] sm:$0xff]
        %v203 = vld [vmem:[%s195 + $0x38] sm:$0x3]
        %v204 = vld [vmem:[%s195 + $0x40] sm:$0xff]
        %v205 = vld [vmem:[%s195 + $0x48] sm:$0x3]
        %v206 = vld [vmem:[%s195 + $0x50] sm:$0xff]
        %v207 = vld [vmem:[%s195 + $0x58] sm:$0x3]
        %v208 = vld [vmem:[%s195 + $0x60] sm:$0xff]
        %v209 = vld [vmem:[%s195 + $0x68] sm:$0x3]
        %v210 = vld [vmem:[%s195 + $0x70] sm:$0xff]
        %v211 = vld [vmem:[%s195 + $0x78] sm:$0x3]
        %v212 = vld [vmem:[%s195 + $0x80] sm:$0xff]
        %v213 = vld [vmem:[%s195 + $0x88] sm:$0x3]
        %v214 = vld [vmem:[%s195 + $0x90] sm:$0xff]
        %v215 = vld [vmem:[%s195 + $0x98] sm:$0x3]
        %v216 = vld [vmem:[%s195 + $0xa0] sm:$0xff]
        %v217 = vld [vmem:[%s195 + $0xa8] sm:$0x3]
        %v218 = vld [vmem:[%s195 + $0xb0] sm:$0xff]
        %v219 = vld [vmem:[%s195 + $0xb8] sm:$0x3]
        %v220 = vld [vmem:[%s195 + $0xc0] sm:$0xff]
        %v221 = vld [vmem:[%s195 + $0xc8] sm:$0x3]
        %v222 = vld [vmem:[%s195 + $0xd0] sm:$0xff]
        %v223 = vld [vmem:[%s195 + $0xd8] sm:$0x3]
        %v224 = vld [vmem:[%s195 + $0xe0] sm:$0xff]
        %v225 = vld [vmem:[%s195 + $0xe8] sm:$0x3]
        %v226 = vld [vmem:[%s195 + $0xf0] sm:$0xff]
        %v227 = vld [vmem:[%s195 + $0xf8] sm:$0x3]
        %v228 = vld [vmem:[%s195 + $0x100] sm:$0xff]
        %v229 = vld [vmem:[%s195 + $0x108] sm:$0x3]
        %v230 = vld [vmem:[%s195 + $0x110] sm:$0xff]
        %v231 = vld [vmem:[%s195 + $0x118] sm:$0x3]
        %v232 = vld [vmem:[%s195 + $0x120] sm:$0xff]
        %v233 = vld [vmem:[%s195 + $0x128] sm:$0x3]
        %v234 = vld [vmem:[%s195 + $0x130] sm:$0xff]
        %v235 = vld [vmem:[%s195 + $0x138] sm:$0x3]
        %v236 = vld [vmem:[%s195 + $0x140] sm:$0xff]
        %v237 = vld [vmem:[%s195 + $0x148] sm:$0x3]
        %v238 = vld [vmem:[%s195 + $0x150] sm:$0xff]
        %v239 = vld [vmem:[%s195 + $0x158] sm:$0x3]
        %v240 = vld [vmem:[%s195 + $0x160] sm:$0xff]
        %v241 = vld [vmem:[%s195 + $0x168] sm:$0x3]
        %v242 = vld [vmem:[%s195 + $0x170] sm:$0xff]
        %v243 = vld [vmem:[%s195 + $0x178] sm:$0x3]
        %v244 = vld [vmem:[%s195 + $0x180] sm:$0xff]
        %v245 = vld [vmem:[%s195 + $0x188] sm:$0x3]
        %v246 = vld [vmem:[%s195 + $0x190] sm:$0xff]
        %v247 = vld [vmem:[%s195 + $0x198] sm:$0x3]
        %v248 = vld [vmem:[%s195 + $0x1a0] sm:$0xff]
        %v249 = vld [vmem:[%s195 + $0x1a8] sm:$0x3]
        %v250 = vld [vmem:[%s195 + $0x1b0] sm:$0xff]
        %v251 = vld [vmem:[%s195 + $0x1b8] sm:$0x3]
        %v252 = vld [vmem:[%s195 + $0x1c0] sm:$0xff]
        %v253 = vld [vmem:[%s195 + $0x1c8] sm:$0x3]
        %v254 = vld [vmem:[%s195 + $0x1d0] sm:$0xff]
        %v255 = vld [vmem:[%s195 + $0x1d8] sm:$0x3]
        %v256 = vld [vmem:[%s195 + $0x1e0] sm:$0xff]
        %v257 = vld [vmem:[%s195 + $0x1e8] sm:$0x3]
        %v258 = vld [vmem:[%s195 + $0x1f0] sm:$0xff]
        %v259 = vld [vmem:[%s195 + $0x1f8] sm:$0x3]
        %v260 = vld [vmem:[%s195 + $0x200] sm:$0xff]
        %v261 = vld [vmem:[%s195 + $0x208] sm:$0x3]
        %v262 = vld [vmem:[%s195 + $0x210] sm:$0xff]
        %v263 = vld [vmem:[%s195 + $0x218] sm:$0x3]
        %v264 = vld [vmem:[%s195 + $0x220] sm:$0xff]
        %v265 = vld [vmem:[%s195 + $0x228] sm:$0x3]
        %v266 = vld [vmem:[%s195 + $0x230] sm:$0xff]
        %v267 = vld [vmem:[%s195 + $0x238] sm:$0x3]
        %v268 = vld [vmem:[%s195 + $0x240] sm:$0xff]
        %v269 = vld [vmem:[%s195 + $0x248] sm:$0x3]
        %v270 = vld [vmem:[%s195 + $0x250] sm:$0xff]
        %v271 = vld [vmem:[%s195 + $0x258] sm:$0x3]
        %v272 = vld [vmem:[%s195 + $0x260] sm:$0xff]
        %v273 = vld [vmem:[%s195 + $0x268] sm:$0x3]
        %v274 = vld [vmem:[%s195 + $0x270] sm:$0xff]
        %v275 = vld [vmem:[%s195 + $0x278] sm:$0x3]
        %v276 = vld [vmem:[%s195 + $0x280] sm:$0xff]
        %v277 = vld [vmem:[%s195 + $0x288] sm:$0x3]
        %v278 = vld [vmem:[%s195 + $0x290] sm:$0xff]
        %v279 = vld [vmem:[%s195 + $0x298] sm:$0x3]
        %v280 = vld [vmem:[%s195 + $0x2a0] sm:$0xff]
        %v281 = vld [vmem:[%s195 + $0x2a8] sm:$0x3]
        %v282 = vld [vmem:[%s195 + $0x2b0] sm:$0xff]
        %v283 = vld [vmem:[%s195 + $0x2b8] sm:$0x3]
        %v284 = vld [vmem:[%s195 + $0x2c0] sm:$0xff]
        %v285 = vld [vmem:[%s195 + $0x2c8] sm:$0x3]
        %v286 = vld [vmem:[%s195 + $0x2d0] sm:$0xff]
        %v287 = vld [vmem:[%s195 + $0x2d8] sm:$0x3]
        %v288 = vld [vmem:[%s195 + $0x2e0] sm:$0xff]
        %v289 = vld [vmem:[%s195 + $0x2e8] sm:$0x3]
        %v290 = vld [vmem:[%s195 + $0x2f0] sm:$0xff]
        %v291 = vld [vmem:[%s195 + $0x2f8] sm:$0x3]
        %v292 = vld [vmem:[%s195 + $0x300] sm:$0xff]
        %v293 = vld [vmem:[%s195 + $0x308] sm:$0x3]
        %v294 = vld [vmem:[%s195 + $0x310] sm:$0xff]
        %v295 = vld [vmem:[%s195 + $0x318] sm:$0x3]
        %v296 = vld [vmem:[%s195 + $0x320] sm:$0xff]
        %v297 = vld [vmem:[%s195 + $0x328] sm:$0x3]
        %v298 = vld [vmem:[%s195 + $0x330] sm:$0xff]
        %v299 = vld [vmem:[%s195 + $0x338] sm:$0x3]
        %v300 = vld [vmem:[%s195 + $0x340] sm:$0xff]
        %v301 = vld [vmem:[%s195 + $0x348] sm:$0x3]
        %v302 = vld [vmem:[%s195 + $0x350] sm:$0xff]
        %v303 = vld [vmem:[%s195 + $0x358] sm:$0x3]
        %v304 = vld [vmem:[%s195 + $0x360] sm:$0xff]
        %v305 = vld [vmem:[%s195 + $0x368] sm:$0x3]
        %v306 = vld [vmem:[%s195 + $0x370] sm:$0xff]
        %v307 = vld [vmem:[%s195 + $0x378] sm:$0x3]
        %v308 = vld [vmem:[%s195 + $0x380] sm:$0xff]
        %v309 = vld [vmem:[%s195 + $0x388] sm:$0x3]
        %v310 = vld [vmem:[%s195 + $0x390] sm:$0xff]
        %v311 = vld [vmem:[%s195 + $0x398] sm:$0x3]
        %v312 = vld [vmem:[%s195 + $0x3a0] sm:$0xff]
        %v313 = vld [vmem:[%s195 + $0x3a8] sm:$0x3]
        %v314 = vld [vmem:[%s195 + $0x3b0] sm:$0xff]
        %v315 = vld [vmem:[%s195 + $0x3b8] sm:$0x3]
        %v316 = vld [vmem:[%s195 + $0x3c0] sm:$0xff]
        %v317 = vld [vmem:[%s195 + $0x3c8] sm:$0x3]
        %v318 = vld [vmem:[%s195 + $0x3d0] sm:$0xff]
        %v319 = vld [vmem:[%s195 + $0x3d8] sm:$0x3]
        %v320 = vld [vmem:[%s195 + $0x3e0] sm:$0xff]
        %v321 = vld [vmem:[%s195 + $0x3e8] sm:$0x3]
        %v322 = vld [vmem:[%s195 + $0x3f0] sm:$0xff]
        %v323 = vld [vmem:[%s195 + $0x3f8] sm:$0x3]
        %v324 = vld [vmem:[%s195 + $0x400] sm:$0xff]
        %v325 = vld [vmem:[%s195 + $0x408] sm:$0x3]
        %v326 = vld [vmem:[%s195 + $0x410] sm:$0xff]
        %v327 = vld [vmem:[%s195 + $0x418] sm:$0x3]
        %v328 = vld [vmem:[%s195 + $0x420] sm:$0xff]
        %v329 = vld [vmem:[%s195 + $0x428] sm:$0x3]
        %v330 = vld [vmem:[%s195 + $0x430] sm:$0xff]
        %v331 = vld [vmem:[%s195 + $0x438] sm:$0x3]
        %v332 = vld [vmem:[%s195 + $0x440] sm:$0xff]
        %v333 = vld [vmem:[%s195 + $0x448] sm:$0x3]
        %v334 = vld [vmem:[%s195 + $0x450] sm:$0xff]
        %v335 = vld [vmem:[%s195 + $0x458] sm:$0x3]
        %v336 = vld [vmem:[%s195 + $0x460] sm:$0xff]
        %v337 = vld [vmem:[%s195 + $0x468] sm:$0x3]
        %v338 = vld [vmem:[%s195 + $0x470] sm:$0xff]
        %v339 = vld [vmem:[%s195 + $0x478] sm:$0x3]
        %v340 = vld [vmem:[%s195 + $0x480] sm:$0xff]
        %v341 = vld [vmem:[%s195 + $0x488] sm:$0x3]
        %v342 = vld [vmem:[%s195 + $0x490] sm:$0xff]
        %v343 = vld [vmem:[%s195 + $0x498] sm:$0x3]
        %v344 = vld [vmem:[%s195 + $0x4a0] sm:$0xff]
        %v345 = vld [vmem:[%s195 + $0x4a8] sm:$0x3]
        %v346 = vld [vmem:[%s195 + $0x4b0] sm:$0xff]
        %v347 = vld [vmem:[%s195 + $0x4b8] sm:$0x3]
        %v348 = vld [vmem:[%s195 + $0x4c0] sm:$0xff]
        %v349 = vld [vmem:[%s195 + $0x4c8] sm:$0x3]
        %v350 = vld [vmem:[%s195 + $0x4d0] sm:$0xff]
        %v351 = vld [vmem:[%s195 + $0x4d8] sm:$0x3]
        %v352 = vld [vmem:[%s195 + $0x4e0] sm:$0xff]
        %v353 = vld [vmem:[%s195 + $0x4e8] sm:$0x3]
        %v354 = vld [vmem:[%s195 + $0x4f0] sm:$0xff]
        %v355 = vld [vmem:[%s195 + $0x4f8] sm:$0x3]
        %v356 = vld [vmem:[%s195 + $0x500] sm:$0xff]
        %v357 = vld [vmem:[%s195 + $0x508] sm:$0x3]
        %v358 = vld [vmem:[%s195 + $0x510] sm:$0xff]
        %v359 = vld [vmem:[%s195 + $0x518] sm:$0x3]
        %v360 = vld [vmem:[%s195 + $0x520] sm:$0xff]
        %v361 = vld [vmem:[%s195 + $0x528] sm:$0x3]
        %v362 = vld [vmem:[%s195 + $0x530] sm:$0xff]
        %v363 = vld [vmem:[%s195 + $0x538] sm:$0x3]
        %v364 = vld [vmem:[%s195 + $0x540] sm:$0xff]
        %v365 = vld [vmem:[%s195 + $0x548] sm:$0x3]
        %v366 = vld [vmem:[%s195 + $0x550] sm:$0xff]
        %v367 = vld [vmem:[%s195 + $0x558] sm:$0x3]
        %v368 = vld [vmem:[%s195 + $0x560] sm:$0xff]
        %v369 = vld [vmem:[%s195 + $0x568] sm:$0x3]
        %v370 = vld [vmem:[%s195 + $0x570] sm:$0xff]
        %v371 = vld [vmem:[%s195 + $0x578] sm:$0x3]
        %v372 = vld [vmem:[%s195 + $0x580] sm:$0xff]
        %v373 = vld [vmem:[%s195 + $0x588] sm:$0x3]
        %v374 = vld [vmem:[%s195 + $0x590] sm:$0xff]
        %v375 = vld [vmem:[%s195 + $0x598] sm:$0x3]
        %v376 = vld [vmem:[%s195 + $0x5a0] sm:$0xff]
        %v377 = vld [vmem:[%s195 + $0x5a8] sm:$0x3]
        %v378 = vld [vmem:[%s195 + $0x5b0] sm:$0xff]
        %v379 = vld [vmem:[%s195 + $0x5b8] sm:$0x3]
        %v380 = vld [vmem:[%s195 + $0x5c0] sm:$0xff]
        %v381 = vld [vmem:[%s195 + $0x5c8] sm:$0x3]
        %v382 = vld [vmem:[%s195 + $0x5d0] sm:$0xff]
        %v383 = vld [vmem:[%s195 + $0x5d8] sm:$0x3]
        %v384 = vld [vmem:[%s195 + $0x5e0] sm:$0xff]
        %v385 = vld [vmem:[%s195 + $0x5e8] sm:$0x3]
        %v386 = vld [vmem:[%s195 + $0x5f0] sm:$0xff]
        %v387 = vld [vmem:[%s195 + $0x5f8] sm:$0x3]
        %v388 = vld [vmem:[%s195 + $0x600] sm:$0xff]
        %v389 = vld [vmem:[%s195 + $0x608] sm:$0x3]
        %v390 = vld [vmem:[%s195 + $0x610] sm:$0xff]
        %v391 = vld [vmem:[%s195 + $0x618] sm:$0x3]
        %v392 = vld [vmem:[%s195 + $0x620] sm:$0xff]
        %v393 = vld [vmem:[%s195 + $0x628] sm:$0x3]
        %v394 = vld [vmem:[%s195 + $0x630] sm:$0xff]
        %v395 = vld [vmem:[%s195 + $0x638] sm:$0x3]
        %vm596 = vcmask 1046528
        %v597 = vrot.slane %v196, 1
        %v598 = vrot.slane %v197, 1
        %v599 = vsel %vm596, %v597, %v598
        %v600 = vrot.slane %v198, 1
        %v601 = vrot.slane %v199, 1
        %v602 = vsel %vm596, %v600, %v601
        %v603 = vrot.slane %v200, 1
        %v604 = vrot.slane %v201, 1
        %v605 = vsel %vm596, %v603, %v604
        %v606 = vrot.slane %v202, 1
        %v607 = vrot.slane %v203, 1
        %v608 = vsel %vm596, %v606, %v607
        %v609 = vrot.slane %v204, 1
        %v610 = vrot.slane %v205, 1
        %v611 = vsel %vm596, %v609, %v610
        %v612 = vrot.slane %v206, 1
        %v613 = vrot.slane %v207, 1
        %v614 = vsel %vm596, %v612, %v613
        %v615 = vrot.slane %v208, 1
        %v616 = vrot.slane %v209, 1
        %v617 = vsel %vm596, %v615, %v616
        %v618 = vrot.slane %v210, 1
        %v619 = vrot.slane %v211, 1
        %v620 = vsel %vm596, %v618, %v619
        %v621 = vrot.slane %v212, 1
        %v622 = vrot.slane %v213, 1
        %v623 = vsel %vm596, %v621, %v622
        %v624 = vrot.slane %v214, 1
        %v625 = vrot.slane %v215, 1
        %v626 = vsel %vm596, %v624, %v625
        %v627 = vrot.slane %v216, 1
        %v628 = vrot.slane %v217, 1
        %v629 = vsel %vm596, %v627, %v628
        %v630 = vrot.slane %v218, 1
        %v631 = vrot.slane %v219, 1
        %v632 = vsel %vm596, %v630, %v631
        %v633 = vrot.slane %v220, 1
        %v634 = vrot.slane %v221, 1
        %v635 = vsel %vm596, %v633, %v634
        %v636 = vrot.slane %v222, 1
        %v637 = vrot.slane %v223, 1
        %v638 = vsel %vm596, %v636, %v637
        %v639 = vrot.slane %v224, 1
        %v640 = vrot.slane %v225, 1
        %v641 = vsel %vm596, %v639, %v640
        %v642 = vrot.slane %v226, 1
        %v643 = vrot.slane %v227, 1
        %v644 = vsel %vm596, %v642, %v643
        %v645 = vrot.slane %v228, 1
        %v646 = vrot.slane %v229, 1
        %v647 = vsel %vm596, %v645, %v646
        %v648 = vrot.slane %v230, 1
        %v649 = vrot.slane %v231, 1
        %v650 = vsel %vm596, %v648, %v649
        %v651 = vrot.slane %v232, 1
        %v652 = vrot.slane %v233, 1
        %v653 = vsel %vm596, %v651, %v652
        %v654 = vrot.slane %v234, 1
        %v655 = vrot.slane %v235, 1
        %v656 = vsel %vm596, %v654, %v655
        %v657 = vrot.slane %v236, 1
        %v658 = vrot.slane %v237, 1
        %v659 = vsel %vm596, %v657, %v658
        %v660 = vrot.slane %v238, 1
        %v661 = vrot.slane %v239, 1
        %v662 = vsel %vm596, %v660, %v661
        %v663 = vrot.slane %v240, 1
        %v664 = vrot.slane %v241, 1
        %v665 = vsel %vm596, %v663, %v664
        %v666 = vrot.slane %v242, 1
        %v667 = vrot.slane %v243, 1
        %v668 = vsel %vm596, %v666, %v667
        %v669 = vrot.slane %v244, 1
        %v670 = vrot.slane %v245, 1
        %v671 = vsel %vm596, %v669, %v670
        %v672 = vrot.slane %v246, 1
        %v673 = vrot.slane %v247, 1
        %v674 = vsel %vm596, %v672, %v673
        %v675 = vrot.slane %v248, 1
        %v676 = vrot.slane %v249, 1
        %v677 = vsel %vm596, %v675, %v676
        %v678 = vrot.slane %v250, 1
        %v679 = vrot.slane %v251, 1
        %v680 = vsel %vm596, %v678, %v679
        %v681 = vrot.slane %v252, 1
        %v682 = vrot.slane %v253, 1
        %v683 = vsel %vm596, %v681, %v682
        %v684 = vrot.slane %v254, 1
        %v685 = vrot.slane %v255, 1
        %v686 = vsel %vm596, %v684, %v685
        %v687 = vrot.slane %v256, 1
        %v688 = vrot.slane %v257, 1
        %v689 = vsel %vm596, %v687, %v688
        %v690 = vrot.slane %v258, 1
        %v691 = vrot.slane %v259, 1
        %v692 = vsel %vm596, %v690, %v691
        %v693 = vrot.slane %v260, 1
        %v694 = vrot.slane %v261, 1
        %v695 = vsel %vm596, %v693, %v694
        %v696 = vrot.slane %v262, 1
        %v697 = vrot.slane %v263, 1
        %v698 = vsel %vm596, %v696, %v697
        %v699 = vrot.slane %v264, 1
        %v700 = vrot.slane %v265, 1
        %v701 = vsel %vm596, %v699, %v700
        %v702 = vrot.slane %v266, 1
        %v703 = vrot.slane %v267, 1
        %v704 = vsel %vm596, %v702, %v703
        %v705 = vrot.slane %v268, 1
        %v706 = vrot.slane %v269, 1
        %v707 = vsel %vm596, %v705, %v706
        %v708 = vrot.slane %v270, 1
        %v709 = vrot.slane %v271, 1
        %v710 = vsel %vm596, %v708, %v709
        %v711 = vrot.slane %v272, 1
        %v712 = vrot.slane %v273, 1
        %v713 = vsel %vm596, %v711, %v712
        %v714 = vrot.slane %v274, 1
        %v715 = vrot.slane %v275, 1
        %v716 = vsel %vm596, %v714, %v715
        %v717 = vrot.slane %v276, 1
        %v718 = vrot.slane %v277, 1
        %v719 = vsel %vm596, %v717, %v718
        %v720 = vrot.slane %v278, 1
        %v721 = vrot.slane %v279, 1
        %v722 = vsel %vm596, %v720, %v721
        %v723 = vrot.slane %v280, 1
        %v724 = vrot.slane %v281, 1
        %v725 = vsel %vm596, %v723, %v724
        %v726 = vrot.slane %v282, 1
        %v727 = vrot.slane %v283, 1
        %v728 = vsel %vm596, %v726, %v727
        %v729 = vrot.slane %v284, 1
        %v730 = vrot.slane %v285, 1
        %v731 = vsel %vm596, %v729, %v730
        %v732 = vrot.slane %v286, 1
        %v733 = vrot.slane %v287, 1
        %v734 = vsel %vm596, %v732, %v733
        %v735 = vrot.slane %v288, 1
        %v736 = vrot.slane %v289, 1
        %v737 = vsel %vm596, %v735, %v736
        %v738 = vrot.slane %v290, 1
        %v739 = vrot.slane %v291, 1
        %v740 = vsel %vm596, %v738, %v739
        %v741 = vrot.slane %v292, 1
        %v742 = vrot.slane %v293, 1
        %v743 = vsel %vm596, %v741, %v742
        %v744 = vrot.slane %v294, 1
        %v745 = vrot.slane %v295, 1
        %v746 = vsel %vm596, %v744, %v745
        %v747 = vrot.slane %v296, 1
        %v748 = vrot.slane %v297, 1
        %v749 = vsel %vm596, %v747, %v748
        %v750 = vrot.slane %v298, 1
        %v751 = vrot.slane %v299, 1
        %v752 = vsel %vm596, %v750, %v751
        %v753 = vrot.slane %v300, 1
        %v754 = vrot.slane %v301, 1
        %v755 = vsel %vm596, %v753, %v754
        %v756 = vrot.slane %v302, 1
        %v757 = vrot.slane %v303, 1
        %v758 = vsel %vm596, %v756, %v757
        %v759 = vrot.slane %v304, 1
        %v760 = vrot.slane %v305, 1
        %v761 = vsel %vm596, %v759, %v760
        %v762 = vrot.slane %v306, 1
        %v763 = vrot.slane %v307, 1
        %v764 = vsel %vm596, %v762, %v763
        %v765 = vrot.slane %v308, 1
        %v766 = vrot.slane %v309, 1
        %v767 = vsel %vm596, %v765, %v766
        %v768 = vrot.slane %v310, 1
        %v769 = vrot.slane %v311, 1
        %v770 = vsel %vm596, %v768, %v769
        %v771 = vrot.slane %v312, 1
        %v772 = vrot.slane %v313, 1
        %v773 = vsel %vm596, %v771, %v772
        %v774 = vrot.slane %v314, 1
        %v775 = vrot.slane %v315, 1
        %v776 = vsel %vm596, %v774, %v775
        %v777 = vrot.slane %v316, 1
        %v778 = vrot.slane %v317, 1
        %v779 = vsel %vm596, %v777, %v778
        %v780 = vrot.slane %v318, 1
        %v781 = vrot.slane %v319, 1
        %v782 = vsel %vm596, %v780, %v781
        %v783 = vrot.slane %v320, 1
        %v784 = vrot.slane %v321, 1
        %v785 = vsel %vm596, %v783, %v784
        %v786 = vrot.slane %v322, 1
        %v787 = vrot.slane %v323, 1
        %v788 = vsel %vm596, %v786, %v787
        %v789 = vrot.slane %v324, 1
        %v790 = vrot.slane %v325, 1
        %v791 = vsel %vm596, %v789, %v790
        %v792 = vrot.slane %v326, 1
        %v793 = vrot.slane %v327, 1
        %v794 = vsel %vm596, %v792, %v793
        %v795 = vrot.slane %v328, 1
        %v796 = vrot.slane %v329, 1
        %v797 = vsel %vm596, %v795, %v796
        %v798 = vrot.slane %v330, 1
        %v799 = vrot.slane %v331, 1
        %v800 = vsel %vm596, %v798, %v799
        %v801 = vrot.slane %v332, 1
        %v802 = vrot.slane %v333, 1
        %v803 = vsel %vm596, %v801, %v802
        %v804 = vrot.slane %v334, 1
        %v805 = vrot.slane %v335, 1
        %v806 = vsel %vm596, %v804, %v805
        %v807 = vrot.slane %v336, 1
        %v808 = vrot.slane %v337, 1
        %v809 = vsel %vm596, %v807, %v808
        %v810 = vrot.slane %v338, 1
        %v811 = vrot.slane %v339, 1
        %v812 = vsel %vm596, %v810, %v811
        %v813 = vrot.slane %v340, 1
        %v814 = vrot.slane %v341, 1
        %v815 = vsel %vm596, %v813, %v814
        %v816 = vrot.slane %v342, 1
        %v817 = vrot.slane %v343, 1
        %v818 = vsel %vm596, %v816, %v817
        %v819 = vrot.slane %v344, 1
        %v820 = vrot.slane %v345, 1
        %v821 = vsel %vm596, %v819, %v820
        %v822 = vrot.slane %v346, 1
        %v823 = vrot.slane %v347, 1
        %v824 = vsel %vm596, %v822, %v823
        %v825 = vrot.slane %v348, 1
        %v826 = vrot.slane %v349, 1
        %v827 = vsel %vm596, %v825, %v826
        %v828 = vrot.slane %v350, 1
        %v829 = vrot.slane %v351, 1
        %v830 = vsel %vm596, %v828, %v829
        %v831 = vrot.slane %v352, 1
        %v832 = vrot.slane %v353, 1
        %v833 = vsel %vm596, %v831, %v832
        %v834 = vrot.slane %v354, 1
        %v835 = vrot.slane %v355, 1
        %v836 = vsel %vm596, %v834, %v835
        %v837 = vrot.slane %v356, 1
        %v838 = vrot.slane %v357, 1
        %v839 = vsel %vm596, %v837, %v838
        %v840 = vrot.slane %v358, 1
        %v841 = vrot.slane %v359, 1
        %v842 = vsel %vm596, %v840, %v841
        %v843 = vrot.slane %v360, 1
        %v844 = vrot.slane %v361, 1
        %v845 = vsel %vm596, %v843, %v844
        %v846 = vrot.slane %v362, 1
        %v847 = vrot.slane %v363, 1
        %v848 = vsel %vm596, %v846, %v847
        %v849 = vrot.slane %v364, 1
        %v850 = vrot.slane %v365, 1
        %v851 = vsel %vm596, %v849, %v850
        %v852 = vrot.slane %v366, 1
        %v853 = vrot.slane %v367, 1
        %v854 = vsel %vm596, %v852, %v853
        %v855 = vrot.slane %v368, 1
        %v856 = vrot.slane %v369, 1
        %v857 = vsel %vm596, %v855, %v856
        %v858 = vrot.slane %v370, 1
        %v859 = vrot.slane %v371, 1
        %v860 = vsel %vm596, %v858, %v859
        %v861 = vrot.slane %v372, 1
        %v862 = vrot.slane %v373, 1
        %v863 = vsel %vm596, %v861, %v862
        %v864 = vrot.slane %v374, 1
        %v865 = vrot.slane %v375, 1
        %v866 = vsel %vm596, %v864, %v865
        %v867 = vrot.slane %v376, 1
        %v868 = vrot.slane %v377, 1
        %v869 = vsel %vm596, %v867, %v868
        %v870 = vrot.slane %v378, 1
        %v871 = vrot.slane %v379, 1
        %v872 = vsel %vm596, %v870, %v871
        %v873 = vrot.slane %v380, 1
        %v874 = vrot.slane %v381, 1
        %v875 = vsel %vm596, %v873, %v874
        %v876 = vrot.slane %v382, 1
        %v877 = vrot.slane %v383, 1
        %v878 = vsel %vm596, %v876, %v877
        %v879 = vrot.slane %v384, 1
        %v880 = vrot.slane %v385, 1
        %v881 = vsel %vm596, %v879, %v880
        %v882 = vrot.slane %v386, 1
        %v883 = vrot.slane %v387, 1
        %v884 = vsel %vm596, %v882, %v883
        %v885 = vrot.slane %v388, 1
        %v886 = vrot.slane %v389, 1
        %v887 = vsel %vm596, %v885, %v886
        %v888 = vrot.slane %v390, 1
        %v889 = vrot.slane %v391, 1
        %v890 = vsel %vm596, %v888, %v889
        %v891 = vrot.slane %v392, 1
        %v892 = vrot.slane %v393, 1
        %v893 = vsel %vm596, %v891, %v892
        %v894 = vrot.slane %v394, 1
        %v895 = vrot.slane %v395, 1
        %v896 = vsel %vm596, %v894, %v895
        %897 = vrot.lane.b32.xlu0 %v599, 4
        %v898 = vpop.permute.xlu0 %897
        %899 = vrot.lane.b32.xlu0 %v602, 4
        %v900 = vpop.permute.xlu0 %899
        %901 = vrot.lane.b32.xlu0 %v605, 4
        %v902 = vpop.permute.xlu0 %901
        %903 = vrot.lane.b32.xlu0 %v608, 4
        %v904 = vpop.permute.xlu0 %903
        %905 = vrot.lane.b32.xlu0 %v611, 4
        %v906 = vpop.permute.xlu0 %905
        %907 = vrot.lane.b32.xlu0 %v614, 4
        %v908 = vpop.permute.xlu0 %907
        %909 = vrot.lane.b32.xlu0 %v617, 4
        %v910 = vpop.permute.xlu0 %909
        %911 = vrot.lane.b32.xlu0 %v620, 4
        %v912 = vpop.permute.xlu0 %911
        %913 = vrot.lane.b32.xlu0 %v623, 4
        %v914 = vpop.permute.xlu0 %913
        %915 = vrot.lane.b32.xlu0 %v626, 4
        %v916 = vpop.permute.xlu0 %915
        %917 = vrot.lane.b32.xlu0 %v629, 4
        %v918 = vpop.permute.xlu0 %917
        %919 = vrot.lane.b32.xlu0 %v632, 4
        %v920 = vpop.permute.xlu0 %919
        %921 = vrot.lane.b32.xlu0 %v635, 4
        %v922 = vpop.permute.xlu0 %921
        %923 = vrot.lane.b32.xlu0 %v638, 4
        %v924 = vpop.permute.xlu0 %923
        %925 = vrot.lane.b32.xlu0 %v641, 4
        %v926 = vpop.permute.xlu0 %925
        %927 = vrot.lane.b32.xlu0 %v644, 4
        %v928 = vpop.permute.xlu0 %927
        %929 = vrot.lane.b32.xlu0 %v647, 4
        %v930 = vpop.permute.xlu0 %929
        %931 = vrot.lane.b32.xlu0 %v650, 4
        %v932 = vpop.permute.xlu0 %931
        %933 = vrot.lane.b32.xlu0 %v653, 4
        %v934 = vpop.permute.xlu0 %933
        %935 = vrot.lane.b32.xlu0 %v656, 4
        %v936 = vpop.permute.xlu0 %935
        %937 = vrot.lane.b32.xlu0 %v659, 4
        %v938 = vpop.permute.xlu0 %937
        %939 = vrot.lane.b32.xlu0 %v662, 4
        %v940 = vpop.permute.xlu0 %939
        %941 = vrot.lane.b32.xlu0 %v665, 4
        %v942 = vpop.permute.xlu0 %941
        %943 = vrot.lane.b32.xlu0 %v668, 4
        %v944 = vpop.permute.xlu0 %943
        %945 = vrot.lane.b32.xlu0 %v671, 4
        %v946 = vpop.permute.xlu0 %945
        %947 = vrot.lane.b32.xlu0 %v674, 4
        %v948 = vpop.permute.xlu0 %947
        %949 = vrot.lane.b32.xlu0 %v677, 4
        %v950 = vpop.permute.xlu0 %949
        %951 = vrot.lane.b32.xlu0 %v680, 4
        %v952 = vpop.permute.xlu0 %951
        %953 = vrot.lane.b32.xlu0 %v683, 4
        %v954 = vpop.permute.xlu0 %953
        %955 = vrot.lane.b32.xlu0 %v686, 4
        %v956 = vpop.permute.xlu0 %955
        %957 = vrot.lane.b32.xlu0 %v689, 4
        %v958 = vpop.permute.xlu0 %957
        %959 = vrot.lane.b32.xlu0 %v692, 4
        %v960 = vpop.permute.xlu0 %959
        %961 = vrot.lane.b32.xlu0 %v695, 4
        %v962 = vpop.permute.xlu0 %961
        %963 = vrot.lane.b32.xlu0 %v698, 4
        %v964 = vpop.permute.xlu0 %963
        %965 = vrot.lane.b32.xlu0 %v701, 4
        %v966 = vpop.permute.xlu0 %965
        %967 = vrot.lane.b32.xlu0 %v704, 4
        %v968 = vpop.permute.xlu0 %967
        %969 = vrot.lane.b32.xlu0 %v707, 4
        %v970 = vpop.permute.xlu0 %969
        %971 = vrot.lane.b32.xlu0 %v710, 4
        %v972 = vpop.permute.xlu0 %971
        %973 = vrot.lane.b32.xlu0 %v713, 4
        %v974 = vpop.permute.xlu0 %973
        %975 = vrot.lane.b32.xlu0 %v716, 4
        %v976 = vpop.permute.xlu0 %975
        %977 = vrot.lane.b32.xlu0 %v719, 4
        %v978 = vpop.permute.xlu0 %977
        %979 = vrot.lane.b32.xlu0 %v722, 4
        %v980 = vpop.permute.xlu0 %979
        %981 = vrot.lane.b32.xlu0 %v725, 4
        %v982 = vpop.permute.xlu0 %981
        %983 = vrot.lane.b32.xlu0 %v728, 4
        %v984 = vpop.permute.xlu0 %983
        %985 = vrot.lane.b32.xlu0 %v731, 4
        %v986 = vpop.permute.xlu0 %985
        %987 = vrot.lane.b32.xlu0 %v734, 4
        %v988 = vpop.permute.xlu0 %987
        %989 = vrot.lane.b32.xlu0 %v737, 4
        %v990 = vpop.permute.xlu0 %989
        %991 = vrot.lane.b32.xlu0 %v740, 4
        %v992 = vpop.permute.xlu0 %991
        %993 = vrot.lane.b32.xlu0 %v743, 4
        %v994 = vpop.permute.xlu0 %993
        %995 = vrot.lane.b32.xlu0 %v746, 4
        %v996 = vpop.permute.xlu0 %995
        %997 = vrot.lane.b32.xlu0 %v749, 4
        %v998 = vpop.permute.xlu0 %997
        %999 = vrot.lane.b32.xlu0 %v752, 4
        %v1000 = vpop.permute.xlu0 %999
        %1001 = vrot.lane.b32.xlu0 %v755, 4
        %v1002 = vpop.permute.xlu0 %1001
        %1003 = vrot.lane.b32.xlu0 %v758, 4
        %v1004 = vpop.permute.xlu0 %1003
        %1005 = vrot.lane.b32.xlu0 %v761, 4
        %v1006 = vpop.permute.xlu0 %1005
        %1007 = vrot.lane.b32.xlu0 %v764, 4
        %v1008 = vpop.permute.xlu0 %1007
        %1009 = vrot.lane.b32.xlu0 %v767, 4
        %v1010 = vpop.permute.xlu0 %1009
        %1011 = vrot.lane.b32.xlu0 %v770, 4
        %v1012 = vpop.permute.xlu0 %1011
        %1013 = vrot.lane.b32.xlu0 %v773, 4
        %v1014 = vpop.permute.xlu0 %1013
        %1015 = vrot.lane.b32.xlu0 %v776, 4
        %v1016 = vpop.permute.xlu0 %1015
        %1017 = vrot.lane.b32.xlu0 %v779, 4
        %v1018 = vpop.permute.xlu0 %1017
        %1019 = vrot.lane.b32.xlu0 %v782, 4
        %v1020 = vpop.permute.xlu0 %1019
        %1021 = vrot.lane.b32.xlu0 %v785, 4
        %v1022 = vpop.permute.xlu0 %1021
        %1023 = vrot.lane.b32.xlu0 %v788, 4
        %v1024 = vpop.permute.xlu0 %1023
        %1025 = vrot.lane.b32.xlu0 %v791, 4
        %v1026 = vpop.permute.xlu0 %1025
        %1027 = vrot.lane.b32.xlu0 %v794, 4
        %v1028 = vpop.permute.xlu0 %1027
        %1029 = vrot.lane.b32.xlu0 %v797, 4
        %v1030 = vpop.permute.xlu0 %1029
        %1031 = vrot.lane.b32.xlu0 %v800, 4
        %v1032 = vpop.permute.xlu0 %1031
        %1033 = vrot.lane.b32.xlu0 %v803, 4
        %v1034 = vpop.permute.xlu0 %1033
        %1035 = vrot.lane.b32.xlu0 %v806, 4
        %v1036 = vpop.permute.xlu0 %1035
        %1037 = vrot.lane.b32.xlu0 %v809, 4
        %v1038 = vpop.permute.xlu0 %1037
        %1039 = vrot.lane.b32.xlu0 %v812, 4
        %v1040 = vpop.permute.xlu0 %1039
        %1041 = vrot.lane.b32.xlu0 %v815, 4
        %v1042 = vpop.permute.xlu0 %1041
        %1043 = vrot.lane.b32.xlu0 %v818, 4
        %v1044 = vpop.permute.xlu0 %1043
        %1045 = vrot.lane.b32.xlu0 %v821, 4
        %v1046 = vpop.permute.xlu0 %1045
        %1047 = vrot.lane.b32.xlu0 %v824, 4
        %v1048 = vpop.permute.xlu0 %1047
        %1049 = vrot.lane.b32.xlu0 %v827, 4
        %v1050 = vpop.permute.xlu0 %1049
        %1051 = vrot.lane.b32.xlu0 %v830, 4
        %v1052 = vpop.permute.xlu0 %1051
        %1053 = vrot.lane.b32.xlu0 %v833, 4
        %v1054 = vpop.permute.xlu0 %1053
        %1055 = vrot.lane.b32.xlu0 %v836, 4
        %v1056 = vpop.permute.xlu0 %1055
        %1057 = vrot.lane.b32.xlu0 %v839, 4
        %v1058 = vpop.permute.xlu0 %1057
        %1059 = vrot.lane.b32.xlu0 %v842, 4
        %v1060 = vpop.permute.xlu0 %1059
        %1061 = vrot.lane.b32.xlu0 %v845, 4
        %v1062 = vpop.permute.xlu0 %1061
        %1063 = vrot.lane.b32.xlu0 %v848, 4
        %v1064 = vpop.permute.xlu0 %1063
        %1065 = vrot.lane.b32.xlu0 %v851, 4
        %v1066 = vpop.permute.xlu0 %1065
        %1067 = vrot.lane.b32.xlu0 %v854, 4
        %v1068 = vpop.permute.xlu0 %1067
        %1069 = vrot.lane.b32.xlu0 %v857, 4
        %v1070 = vpop.permute.xlu0 %1069
        %1071 = vrot.lane.b32.xlu0 %v860, 4
        %v1072 = vpop.permute.xlu0 %1071
        %1073 = vrot.lane.b32.xlu0 %v863, 4
        %v1074 = vpop.permute.xlu0 %1073
        %1075 = vrot.lane.b32.xlu0 %v866, 4
        %v1076 = vpop.permute.xlu0 %1075
        %1077 = vrot.lane.b32.xlu0 %v869, 4
        %v1078 = vpop.permute.xlu0 %1077
        %1079 = vrot.lane.b32.xlu0 %v872, 4
        %v1080 = vpop.permute.xlu0 %1079
        %1081 = vrot.lane.b32.xlu0 %v875, 4
        %v1082 = vpop.permute.xlu0 %1081
        %1083 = vrot.lane.b32.xlu0 %v878, 4
        %v1084 = vpop.permute.xlu0 %1083
        %1085 = vrot.lane.b32.xlu0 %v881, 4
        %v1086 = vpop.permute.xlu0 %1085
        %1087 = vrot.lane.b32.xlu0 %v884, 4
        %v1088 = vpop.permute.xlu0 %1087
        %1089 = vrot.lane.b32.xlu0 %v887, 4
        %v1090 = vpop.permute.xlu0 %1089
        %1091 = vrot.lane.b32.xlu0 %v890, 4
        %v1092 = vpop.permute.xlu0 %1091
        %1093 = vrot.lane.b32.xlu0 %v893, 4
        %v1094 = vpop.permute.xlu0 %1093
        %1095 = vrot.lane.b32.xlu0 %v896, 4
        %v1096 = vpop.permute.xlu0 %1095
        %vm1197 = vcmask 1045504
        %v1198 = vrot.slane %v196, 2
        %v1199 = vrot.slane %v197, 2
        %v1200 = vsel %vm1197, %v1198, %v1199
        %v1201 = vrot.slane %v198, 2
        %v1202 = vrot.slane %v199, 2
        %v1203 = vsel %vm1197, %v1201, %v1202
        %v1204 = vrot.slane %v200, 2
        %v1205 = vrot.slane %v201, 2
        %v1206 = vsel %vm1197, %v1204, %v1205
        %v1207 = vrot.slane %v202, 2
        %v1208 = vrot.slane %v203, 2
        %v1209 = vsel %vm1197, %v1207, %v1208
        %v1210 = vrot.slane %v204, 2
        %v1211 = vrot.slane %v205, 2
        %v1212 = vsel %vm1197, %v1210, %v1211
        %v1213 = vrot.slane %v206, 2
        %v1214 = vrot.slane %v207, 2
        %v1215 = vsel %vm1197, %v1213, %v1214
        %v1216 = vrot.slane %v208, 2
        %v1217 = vrot.slane %v209, 2
        %v1218 = vsel %vm1197, %v1216, %v1217
        %v1219 = vrot.slane %v210, 2
        %v1220 = vrot.slane %v211, 2
        %v1221 = vsel %vm1197, %v1219, %v1220
        %v1222 = vrot.slane %v212, 2
        %v1223 = vrot.slane %v213, 2
        %v1224 = vsel %vm1197, %v1222, %v1223
        %v1225 = vrot.slane %v214, 2
        %v1226 = vrot.slane %v215, 2
        %v1227 = vsel %vm1197, %v1225, %v1226
        %v1228 = vrot.slane %v216, 2
        %v1229 = vrot.slane %v217, 2
        %v1230 = vsel %vm1197, %v1228, %v1229
        %v1231 = vrot.slane %v218, 2
        %v1232 = vrot.slane %v219, 2
        %v1233 = vsel %vm1197, %v1231, %v1232
        %v1234 = vrot.slane %v220, 2
        %v1235 = vrot.slane %v221, 2
        %v1236 = vsel %vm1197, %v1234, %v1235
        %v1237 = vrot.slane %v222, 2
        %v1238 = vrot.slane %v223, 2
        %v1239 = vsel %vm1197, %v1237, %v1238
        %v1240 = vrot.slane %v224, 2
        %v1241 = vrot.slane %v225, 2
        %v1242 = vsel %vm1197, %v1240, %v1241
        %v1243 = vrot.slane %v226, 2
        %v1244 = vrot.slane %v227, 2
        %v1245 = vsel %vm1197, %v1243, %v1244
        %v1246 = vrot.slane %v228, 2
        %v1247 = vrot.slane %v229, 2
        %v1248 = vsel %vm1197, %v1246, %v1247
        %v1249 = vrot.slane %v230, 2
        %v1250 = vrot.slane %v231, 2
        %v1251 = vsel %vm1197, %v1249, %v1250
        %v1252 = vrot.slane %v232, 2
        %v1253 = vrot.slane %v233, 2
        %v1254 = vsel %vm1197, %v1252, %v1253
        %v1255 = vrot.slane %v234, 2
        %v1256 = vrot.slane %v235, 2
        %v1257 = vsel %vm1197, %v1255, %v1256
        %v1258 = vrot.slane %v236, 2
        %v1259 = vrot.slane %v237, 2
        %v1260 = vsel %vm1197, %v1258, %v1259
        %v1261 = vrot.slane %v238, 2
        %v1262 = vrot.slane %v239, 2
        %v1263 = vsel %vm1197, %v1261, %v1262
        %v1264 = vrot.slane %v240, 2
        %v1265 = vrot.slane %v241, 2
        %v1266 = vsel %vm1197, %v1264, %v1265
        %v1267 = vrot.slane %v242, 2
        %v1268 = vrot.slane %v243, 2
        %v1269 = vsel %vm1197, %v1267, %v1268
        %v1270 = vrot.slane %v244, 2
        %v1271 = vrot.slane %v245, 2
        %v1272 = vsel %vm1197, %v1270, %v1271
        %v1273 = vrot.slane %v246, 2
        %v1274 = vrot.slane %v247, 2
        %v1275 = vsel %vm1197, %v1273, %v1274
        %v1276 = vrot.slane %v248, 2
        %v1277 = vrot.slane %v249, 2
        %v1278 = vsel %vm1197, %v1276, %v1277
        %v1279 = vrot.slane %v250, 2
        %v1280 = vrot.slane %v251, 2
        %v1281 = vsel %vm1197, %v1279, %v1280
        %v1282 = vrot.slane %v252, 2
        %v1283 = vrot.slane %v253, 2
        %v1284 = vsel %vm1197, %v1282, %v1283
        %v1285 = vrot.slane %v254, 2
        %v1286 = vrot.slane %v255, 2
        %v1287 = vsel %vm1197, %v1285, %v1286
        %v1288 = vrot.slane %v256, 2
        %v1289 = vrot.slane %v257, 2
        %v1290 = vsel %vm1197, %v1288, %v1289
        %v1291 = vrot.slane %v258, 2
        %v1292 = vrot.slane %v259, 2
        %v1293 = vsel %vm1197, %v1291, %v1292
        %v1294 = vrot.slane %v260, 2
        %v1295 = vrot.slane %v261, 2
        %v1296 = vsel %vm1197, %v1294, %v1295
        %v1297 = vrot.slane %v262, 2
        %v1298 = vrot.slane %v263, 2
        %v1299 = vsel %vm1197, %v1297, %v1298
        %v1300 = vrot.slane %v264, 2
        %v1301 = vrot.slane %v265, 2
        %v1302 = vsel %vm1197, %v1300, %v1301
        %v1303 = vrot.slane %v266, 2
        %v1304 = vrot.slane %v267, 2
        %v1305 = vsel %vm1197, %v1303, %v1304
        %v1306 = vrot.slane %v268, 2
        %v1307 = vrot.slane %v269, 2
        %v1308 = vsel %vm1197, %v1306, %v1307
        %v1309 = vrot.slane %v270, 2
        %v1310 = vrot.slane %v271, 2
        %v1311 = vsel %vm1197, %v1309, %v1310
        %v1312 = vrot.slane %v272, 2
        %v1313 = vrot.slane %v273, 2
        %v1314 = vsel %vm1197, %v1312, %v1313
        %v1315 = vrot.slane %v274, 2
        %v1316 = vrot.slane %v275, 2
        %v1317 = vsel %vm1197, %v1315, %v1316
        %v1318 = vrot.slane %v276, 2
        %v1319 = vrot.slane %v277, 2
        %v1320 = vsel %vm1197, %v1318, %v1319
        %v1321 = vrot.slane %v278, 2
        %v1322 = vrot.slane %v279, 2
        %v1323 = vsel %vm1197, %v1321, %v1322
        %v1324 = vrot.slane %v280, 2
        %v1325 = vrot.slane %v281, 2
        %v1326 = vsel %vm1197, %v1324, %v1325
        %v1327 = vrot.slane %v282, 2
        %v1328 = vrot.slane %v283, 2
        %v1329 = vsel %vm1197, %v1327, %v1328
        %v1330 = vrot.slane %v284, 2
        %v1331 = vrot.slane %v285, 2
        %v1332 = vsel %vm1197, %v1330, %v1331
        %v1333 = vrot.slane %v286, 2
        %v1334 = vrot.slane %v287, 2
        %v1335 = vsel %vm1197, %v1333, %v1334
        %v1336 = vrot.slane %v288, 2
        %v1337 = vrot.slane %v289, 2
        %v1338 = vsel %vm1197, %v1336, %v1337
        %v1339 = vrot.slane %v290, 2
        %v1340 = vrot.slane %v291, 2
        %v1341 = vsel %vm1197, %v1339, %v1340
        %v1342 = vrot.slane %v292, 2
        %v1343 = vrot.slane %v293, 2
        %v1344 = vsel %vm1197, %v1342, %v1343
        %v1345 = vrot.slane %v294, 2
        %v1346 = vrot.slane %v295, 2
        %v1347 = vsel %vm1197, %v1345, %v1346
        %v1348 = vrot.slane %v296, 2
        %v1349 = vrot.slane %v297, 2
        %v1350 = vsel %vm1197, %v1348, %v1349
        %v1351 = vrot.slane %v298, 2
        %v1352 = vrot.slane %v299, 2
        %v1353 = vsel %vm1197, %v1351, %v1352
        %v1354 = vrot.slane %v300, 2
        %v1355 = vrot.slane %v301, 2
        %v1356 = vsel %vm1197, %v1354, %v1355
        %v1357 = vrot.slane %v302, 2
        %v1358 = vrot.slane %v303, 2
        %v1359 = vsel %vm1197, %v1357, %v1358
        %v1360 = vrot.slane %v304, 2
        %v1361 = vrot.slane %v305, 2
        %v1362 = vsel %vm1197, %v1360, %v1361
        %v1363 = vrot.slane %v306, 2
        %v1364 = vrot.slane %v307, 2
        %v1365 = vsel %vm1197, %v1363, %v1364
        %v1366 = vrot.slane %v308, 2
        %v1367 = vrot.slane %v309, 2
        %v1368 = vsel %vm1197, %v1366, %v1367
        %v1369 = vrot.slane %v310, 2
        %v1370 = vrot.slane %v311, 2
        %v1371 = vsel %vm1197, %v1369, %v1370
        %v1372 = vrot.slane %v312, 2
        %v1373 = vrot.slane %v313, 2
        %v1374 = vsel %vm1197, %v1372, %v1373
        %v1375 = vrot.slane %v314, 2
        %v1376 = vrot.slane %v315, 2
        %v1377 = vsel %vm1197, %v1375, %v1376
        %v1378 = vrot.slane %v316, 2
        %v1379 = vrot.slane %v317, 2
        %v1380 = vsel %vm1197, %v1378, %v1379
        %v1381 = vrot.slane %v318, 2
        %v1382 = vrot.slane %v319, 2
        %v1383 = vsel %vm1197, %v1381, %v1382
        %v1384 = vrot.slane %v320, 2
        %v1385 = vrot.slane %v321, 2
        %v1386 = vsel %vm1197, %v1384, %v1385
        %v1387 = vrot.slane %v322, 2
        %v1388 = vrot.slane %v323, 2
        %v1389 = vsel %vm1197, %v1387, %v1388
        %v1390 = vrot.slane %v324, 2
        %v1391 = vrot.slane %v325, 2
        %v1392 = vsel %vm1197, %v1390, %v1391
        %v1393 = vrot.slane %v326, 2
        %v1394 = vrot.slane %v327, 2
        %v1395 = vsel %vm1197, %v1393, %v1394
        %v1396 = vrot.slane %v328, 2
        %v1397 = vrot.slane %v329, 2
        %v1398 = vsel %vm1197, %v1396, %v1397
        %v1399 = vrot.slane %v330, 2
        %v1400 = vrot.slane %v331, 2
        %v1401 = vsel %vm1197, %v1399, %v1400
        %v1402 = vrot.slane %v332, 2
        %v1403 = vrot.slane %v333, 2
        %v1404 = vsel %vm1197, %v1402, %v1403
        %v1405 = vrot.slane %v334, 2
        %v1406 = vrot.slane %v335, 2
        %v1407 = vsel %vm1197, %v1405, %v1406
        %v1408 = vrot.slane %v336, 2
        %v1409 = vrot.slane %v337, 2
        %v1410 = vsel %vm1197, %v1408, %v1409
        %v1411 = vrot.slane %v338, 2
        %v1412 = vrot.slane %v339, 2
        %v1413 = vsel %vm1197, %v1411, %v1412
        %v1414 = vrot.slane %v340, 2
        %v1415 = vrot.slane %v341, 2
        %v1416 = vsel %vm1197, %v1414, %v1415
        %v1417 = vrot.slane %v342, 2
        %v1418 = vrot.slane %v343, 2
        %v1419 = vsel %vm1197, %v1417, %v1418
        %v1420 = vrot.slane %v344, 2
        %v1421 = vrot.slane %v345, 2
        %v1422 = vsel %vm1197, %v1420, %v1421
        %v1423 = vrot.slane %v346, 2
        %v1424 = vrot.slane %v347, 2
        %v1425 = vsel %vm1197, %v1423, %v1424
        %v1426 = vrot.slane %v348, 2
        %v1427 = vrot.slane %v349, 2
        %v1428 = vsel %vm1197, %v1426, %v1427
        %v1429 = vrot.slane %v350, 2
        %v1430 = vrot.slane %v351, 2
        %v1431 = vsel %vm1197, %v1429, %v1430
        %v1432 = vrot.slane %v352, 2
        %v1433 = vrot.slane %v353, 2
        %v1434 = vsel %vm1197, %v1432, %v1433
        %v1435 = vrot.slane %v354, 2
        %v1436 = vrot.slane %v355, 2
        %v1437 = vsel %vm1197, %v1435, %v1436
        %v1438 = vrot.slane %v356, 2
        %v1439 = vrot.slane %v357, 2
        %v1440 = vsel %vm1197, %v1438, %v1439
        %v1441 = vrot.slane %v358, 2
        %v1442 = vrot.slane %v359, 2
        %v1443 = vsel %vm1197, %v1441, %v1442
        %v1444 = vrot.slane %v360, 2
        %v1445 = vrot.slane %v361, 2
        %v1446 = vsel %vm1197, %v1444, %v1445
        %v1447 = vrot.slane %v362, 2
        %v1448 = vrot.slane %v363, 2
        %v1449 = vsel %vm1197, %v1447, %v1448
        %v1450 = vrot.slane %v364, 2
        %v1451 = vrot.slane %v365, 2
        %v1452 = vsel %vm1197, %v1450, %v1451
        %v1453 = vrot.slane %v366, 2
        %v1454 = vrot.slane %v367, 2
        %v1455 = vsel %vm1197, %v1453, %v1454
        %v1456 = vrot.slane %v368, 2
        %v1457 = vrot.slane %v369, 2
        %v1458 = vsel %vm1197, %v1456, %v1457
        %v1459 = vrot.slane %v370, 2
        %v1460 = vrot.slane %v371, 2
        %v1461 = vsel %vm1197, %v1459, %v1460
        %v1462 = vrot.slane %v372, 2
        %v1463 = vrot.slane %v373, 2
        %v1464 = vsel %vm1197, %v1462, %v1463
        %v1465 = vrot.slane %v374, 2
        %v1466 = vrot.slane %v375, 2
        %v1467 = vsel %vm1197, %v1465, %v1466
        %v1468 = vrot.slane %v376, 2
        %v1469 = vrot.slane %v377, 2
        %v1470 = vsel %vm1197, %v1468, %v1469
        %v1471 = vrot.slane %v378, 2
        %v1472 = vrot.slane %v379, 2
        %v1473 = vsel %vm1197, %v1471, %v1472
        %v1474 = vrot.slane %v380, 2
        %v1475 = vrot.slane %v381, 2
        %v1476 = vsel %vm1197, %v1474, %v1475
        %v1477 = vrot.slane %v382, 2
        %v1478 = vrot.slane %v383, 2
        %v1479 = vsel %vm1197, %v1477, %v1478
        %v1480 = vrot.slane %v384, 2
        %v1481 = vrot.slane %v385, 2
        %v1482 = vsel %vm1197, %v1480, %v1481
        %v1483 = vrot.slane %v386, 2
        %v1484 = vrot.slane %v387, 2
        %v1485 = vsel %vm1197, %v1483, %v1484
        %v1486 = vrot.slane %v388, 2
        %v1487 = vrot.slane %v389, 2
        %v1488 = vsel %vm1197, %v1486, %v1487
        %v1489 = vrot.slane %v390, 2
        %v1490 = vrot.slane %v391, 2
        %v1491 = vsel %vm1197, %v1489, %v1490
        %v1492 = vrot.slane %v392, 2
        %v1493 = vrot.slane %v393, 2
        %v1494 = vsel %vm1197, %v1492, %v1493
        %v1495 = vrot.slane %v394, 2
        %v1496 = vrot.slane %v395, 2
        %v1497 = vsel %vm1197, %v1495, %v1496
        %1498 = vrot.lane.b32.xlu0 %v1200, 8
        %v1499 = vpop.permute.xlu0 %1498
        %1500 = vrot.lane.b32.xlu0 %v1203, 8
        %v1501 = vpop.permute.xlu0 %1500
        %1502 = vrot.lane.b32.xlu0 %v1206, 8
        %v1503 = vpop.permute.xlu0 %1502
        %1504 = vrot.lane.b32.xlu0 %v1209, 8
        %v1505 = vpop.permute.xlu0 %1504
        %1506 = vrot.lane.b32.xlu0 %v1212, 8
        %v1507 = vpop.permute.xlu0 %1506
        %1508 = vrot.lane.b32.xlu0 %v1215, 8
        %v1509 = vpop.permute.xlu0 %1508
        %1510 = vrot.lane.b32.xlu0 %v1218, 8
        %v1511 = vpop.permute.xlu0 %1510
        %1512 = vrot.lane.b32.xlu0 %v1221, 8
        %v1513 = vpop.permute.xlu0 %1512
        %1514 = vrot.lane.b32.xlu0 %v1224, 8
        %v1515 = vpop.permute.xlu0 %1514
        %1516 = vrot.lane.b32.xlu0 %v1227, 8
        %v1517 = vpop.permute.xlu0 %1516
        %1518 = vrot.lane.b32.xlu0 %v1230, 8
        %v1519 = vpop.permute.xlu0 %1518
        %1520 = vrot.lane.b32.xlu0 %v1233, 8
        %v1521 = vpop.permute.xlu0 %1520
        %1522 = vrot.lane.b32.xlu0 %v1236, 8
        %v1523 = vpop.permute.xlu0 %1522
        %1524 = vrot.lane.b32.xlu0 %v1239, 8
        %v1525 = vpop.permute.xlu0 %1524
        %1526 = vrot.lane.b32.xlu0 %v1242, 8
        %v1527 = vpop.permute.xlu0 %1526
        %1528 = vrot.lane.b32.xlu0 %v1245, 8
        %v1529 = vpop.permute.xlu0 %1528
        %1530 = vrot.lane.b32.xlu0 %v1248, 8
        %v1531 = vpop.permute.xlu0 %1530
        %1532 = vrot.lane.b32.xlu0 %v1251, 8
        %v1533 = vpop.permute.xlu0 %1532
        %1534 = vrot.lane.b32.xlu0 %v1254, 8
        %v1535 = vpop.permute.xlu0 %1534
        %1536 = vrot.lane.b32.xlu0 %v1257, 8
        %v1537 = vpop.permute.xlu0 %1536
        %1538 = vrot.lane.b32.xlu0 %v1260, 8
        %v1539 = vpop.permute.xlu0 %1538
        %1540 = vrot.lane.b32.xlu0 %v1263, 8
        %v1541 = vpop.permute.xlu0 %1540
        %1542 = vrot.lane.b32.xlu0 %v1266, 8
        %v1543 = vpop.permute.xlu0 %1542
        %1544 = vrot.lane.b32.xlu0 %v1269, 8
        %v1545 = vpop.permute.xlu0 %1544
        %1546 = vrot.lane.b32.xlu0 %v1272, 8
        %v1547 = vpop.permute.xlu0 %1546
        %1548 = vrot.lane.b32.xlu0 %v1275, 8
        %v1549 = vpop.permute.xlu0 %1548
        %1550 = vrot.lane.b32.xlu0 %v1278, 8
        %v1551 = vpop.permute.xlu0 %1550
        %1552 = vrot.lane.b32.xlu0 %v1281, 8
        %v1553 = vpop.permute.xlu0 %1552
        %1554 = vrot.lane.b32.xlu0 %v1284, 8
        %v1555 = vpop.permute.xlu0 %1554
        %1556 = vrot.lane.b32.xlu0 %v1287, 8
        %v1557 = vpop.permute.xlu0 %1556
        %1558 = vrot.lane.b32.xlu0 %v1290, 8
        %v1559 = vpop.permute.xlu0 %1558
        %1560 = vrot.lane.b32.xlu0 %v1293, 8
        %v1561 = vpop.permute.xlu0 %1560
        %1562 = vrot.lane.b32.xlu0 %v1296, 8
        %v1563 = vpop.permute.xlu0 %1562
        %1564 = vrot.lane.b32.xlu0 %v1299, 8
        %v1565 = vpop.permute.xlu0 %1564
        %1566 = vrot.lane.b32.xlu0 %v1302, 8
        %v1567 = vpop.permute.xlu0 %1566
        %1568 = vrot.lane.b32.xlu0 %v1305, 8
        %v1569 = vpop.permute.xlu0 %1568
        %1570 = vrot.lane.b32.xlu0 %v1308, 8
        %v1571 = vpop.permute.xlu0 %1570
        %1572 = vrot.lane.b32.xlu0 %v1311, 8
        %v1573 = vpop.permute.xlu0 %1572
        %1574 = vrot.lane.b32.xlu0 %v1314, 8
        %v1575 = vpop.permute.xlu0 %1574
        %1576 = vrot.lane.b32.xlu0 %v1317, 8
        %v1577 = vpop.permute.xlu0 %1576
        %1578 = vrot.lane.b32.xlu0 %v1320, 8
        %v1579 = vpop.permute.xlu0 %1578
        %1580 = vrot.lane.b32.xlu0 %v1323, 8
        %v1581 = vpop.permute.xlu0 %1580
        %1582 = vrot.lane.b32.xlu0 %v1326, 8
        %v1583 = vpop.permute.xlu0 %1582
        %1584 = vrot.lane.b32.xlu0 %v1329, 8
        %v1585 = vpop.permute.xlu0 %1584
        %1586 = vrot.lane.b32.xlu0 %v1332, 8
        %v1587 = vpop.permute.xlu0 %1586
        %1588 = vrot.lane.b32.xlu0 %v1335, 8
        %v1589 = vpop.permute.xlu0 %1588
        %1590 = vrot.lane.b32.xlu0 %v1338, 8
        %v1591 = vpop.permute.xlu0 %1590
        %1592 = vrot.lane.b32.xlu0 %v1341, 8
        %v1593 = vpop.permute.xlu0 %1592
        %1594 = vrot.lane.b32.xlu0 %v1344, 8
        %v1595 = vpop.permute.xlu0 %1594
        %1596 = vrot.lane.b32.xlu0 %v1347, 8
        %v1597 = vpop.permute.xlu0 %1596
        %1598 = vrot.lane.b32.xlu0 %v1350, 8
        %v1599 = vpop.permute.xlu0 %1598
        %1600 = vrot.lane.b32.xlu0 %v1353, 8
        %v1601 = vpop.permute.xlu0 %1600
        %1602 = vrot.lane.b32.xlu0 %v1356, 8
        %v1603 = vpop.permute.xlu0 %1602
        %1604 = vrot.lane.b32.xlu0 %v1359, 8
        %v1605 = vpop.permute.xlu0 %1604
        %1606 = vrot.lane.b32.xlu0 %v1362, 8
        %v1607 = vpop.permute.xlu0 %1606
        %1608 = vrot.lane.b32.xlu0 %v1365, 8
        %v1609 = vpop.permute.xlu0 %1608
        %1610 = vrot.lane.b32.xlu0 %v1368, 8
        %v1611 = vpop.permute.xlu0 %1610
        %1612 = vrot.lane.b32.xlu0 %v1371, 8
        %v1613 = vpop.permute.xlu0 %1612
        %1614 = vrot.lane.b32.xlu0 %v1374, 8
        %v1615 = vpop.permute.xlu0 %1614
        %1616 = vrot.lane.b32.xlu0 %v1377, 8
        %v1617 = vpop.permute.xlu0 %1616
        %1618 = vrot.lane.b32.xlu0 %v1380, 8
        %v1619 = vpop.permute.xlu0 %1618
        %1620 = vrot.lane.b32.xlu0 %v1383, 8
        %v1621 = vpop.permute.xlu0 %1620
        %1622 = vrot.lane.b32.xlu0 %v1386, 8
        %v1623 = vpop.permute.xlu0 %1622
        %1624 = vrot.lane.b32.xlu0 %v1389, 8
        %v1625 = vpop.permute.xlu0 %1624
        %1626 = vrot.lane.b32.xlu0 %v1392, 8
        %v1627 = vpop.permute.xlu0 %1626
        %1628 = vrot.lane.b32.xlu0 %v1395, 8
        %v1629 = vpop.permute.xlu0 %1628
        %1630 = vrot.lane.b32.xlu0 %v1398, 8
        %v1631 = vpop.permute.xlu0 %1630
        %1632 = vrot.lane.b32.xlu0 %v1401, 8
        %v1633 = vpop.permute.xlu0 %1632
        %1634 = vrot.lane.b32.xlu0 %v1404, 8
        %v1635 = vpop.permute.xlu0 %1634
        %1636 = vrot.lane.b32.xlu0 %v1407, 8
        %v1637 = vpop.permute.xlu0 %1636
        %1638 = vrot.lane.b32.xlu0 %v1410, 8
        %v1639 = vpop.permute.xlu0 %1638
        %1640 = vrot.lane.b32.xlu0 %v1413, 8
        %v1641 = vpop.permute.xlu0 %1640
        %1642 = vrot.lane.b32.xlu0 %v1416, 8
        %v1643 = vpop.permute.xlu0 %1642
        %1644 = vrot.lane.b32.xlu0 %v1419, 8
        %v1645 = vpop.permute.xlu0 %1644
        %1646 = vrot.lane.b32.xlu0 %v1422, 8
        %v1647 = vpop.permute.xlu0 %1646
        %1648 = vrot.lane.b32.xlu0 %v1425, 8
        %v1649 = vpop.permute.xlu0 %1648
        %1650 = vrot.lane.b32.xlu0 %v1428, 8
        %v1651 = vpop.permute.xlu0 %1650
        %1652 = vrot.lane.b32.xlu0 %v1431, 8
        %v1653 = vpop.permute.xlu0 %1652
        %1654 = vrot.lane.b32.xlu0 %v1434, 8
        %v1655 = vpop.permute.xlu0 %1654
        %1656 = vrot.lane.b32.xlu0 %v1437, 8
        %v1657 = vpop.permute.xlu0 %1656
        %1658 = vrot.lane.b32.xlu0 %v1440, 8
        %v1659 = vpop.permute.xlu0 %1658
        %1660 = vrot.lane.b32.xlu0 %v1443, 8
        %v1661 = vpop.permute.xlu0 %1660
        %1662 = vrot.lane.b32.xlu0 %v1446, 8
        %v1663 = vpop.permute.xlu0 %1662
        %1664 = vrot.lane.b32.xlu0 %v1449, 8
        %v1665 = vpop.permute.xlu0 %1664
        %1666 = vrot.lane.b32.xlu0 %v1452, 8
        %v1667 = vpop.permute.xlu0 %1666
        %1668 = vrot.lane.b32.xlu0 %v1455, 8
        %v1669 = vpop.permute.xlu0 %1668
        %1670 = vrot.lane.b32.xlu0 %v1458, 8
        %v1671 = vpop.permute.xlu0 %1670
        %1672 = vrot.lane.b32.xlu0 %v1461, 8
        %v1673 = vpop.permute.xlu0 %1672
        %1674 = vrot.lane.b32.xlu0 %v1464, 8
        %v1675 = vpop.permute.xlu0 %1674
        %1676 = vrot.lane.b32.xlu0 %v1467, 8
        %v1677 = vpop.permute.xlu0 %1676
        %1678 = vrot.lane.b32.xlu0 %v1470, 8
        %v1679 = vpop.permute.xlu0 %1678
        %1680 = vrot.lane.b32.xlu0 %v1473, 8
        %v1681 = vpop.permute.xlu0 %1680
        %1682 = vrot.lane.b32.xlu0 %v1476, 8
        %v1683 = vpop.permute.xlu0 %1682
        %1684 = vrot.lane.b32.xlu0 %v1479, 8
        %v1685 = vpop.permute.xlu0 %1684
        %1686 = vrot.lane.b32.xlu0 %v1482, 8
        %v1687 = vpop.permute.xlu0 %1686
        %1688 = vrot.lane.b32.xlu0 %v1485, 8
        %v1689 = vpop.permute.xlu0 %1688
        %1690 = vrot.lane.b32.xlu0 %v1488, 8
        %v1691 = vpop.permute.xlu0 %1690
        %1692 = vrot.lane.b32.xlu0 %v1491, 8
        %v1693 = vpop.permute.xlu0 %1692
        %1694 = vrot.lane.b32.xlu0 %v1494, 8
        %v1695 = vpop.permute.xlu0 %1694
        %1696 = vrot.lane.b32.xlu0 %v1497, 8
        %v1697 = vpop.permute.xlu0 %1696
        %vm1798 = vcmask 31744
        %v1799 = vsel %vm1798, %v196, %v898
        %v1800 = vsel %vm1798, %v198, %v900
        %v1801 = vsel %vm1798, %v200, %v902
        %v1802 = vsel %vm1798, %v202, %v904
        %v1803 = vsel %vm1798, %v204, %v906
        %v1804 = vsel %vm1798, %v206, %v908
        %v1805 = vsel %vm1798, %v208, %v910
        %v1806 = vsel %vm1798, %v210, %v912
        %v1807 = vsel %vm1798, %v212, %v914
        %v1808 = vsel %vm1798, %v214, %v916
        %v1809 = vsel %vm1798, %v216, %v918
        %v1810 = vsel %vm1798, %v218, %v920
        %v1811 = vsel %vm1798, %v220, %v922
        %v1812 = vsel %vm1798, %v222, %v924
        %v1813 = vsel %vm1798, %v224, %v926
        %v1814 = vsel %vm1798, %v226, %v928
        %v1815 = vsel %vm1798, %v228, %v930
        %v1816 = vsel %vm1798, %v230, %v932
        %v1817 = vsel %vm1798, %v232, %v934
        %v1818 = vsel %vm1798, %v234, %v936
        %v1819 = vsel %vm1798, %v236, %v938
        %v1820 = vsel %vm1798, %v238, %v940
        %v1821 = vsel %vm1798, %v240, %v942
        %v1822 = vsel %vm1798, %v242, %v944
        %v1823 = vsel %vm1798, %v244, %v946
        %v1824 = vsel %vm1798, %v246, %v948
        %v1825 = vsel %vm1798, %v248, %v950
        %v1826 = vsel %vm1798, %v250, %v952
        %v1827 = vsel %vm1798, %v252, %v954
        %v1828 = vsel %vm1798, %v254, %v956
        %v1829 = vsel %vm1798, %v256, %v958
        %v1830 = vsel %vm1798, %v258, %v960
        %v1831 = vsel %vm1798, %v260, %v962
        %v1832 = vsel %vm1798, %v262, %v964
        %v1833 = vsel %vm1798, %v264, %v966
        %v1834 = vsel %vm1798, %v266, %v968
        %v1835 = vsel %vm1798, %v268, %v970
        %v1836 = vsel %vm1798, %v270, %v972
        %v1837 = vsel %vm1798, %v272, %v974
        %v1838 = vsel %vm1798, %v274, %v976
        %v1839 = vsel %vm1798, %v276, %v978
        %v1840 = vsel %vm1798, %v278, %v980
        %v1841 = vsel %vm1798, %v280, %v982
        %v1842 = vsel %vm1798, %v282, %v984
        %v1843 = vsel %vm1798, %v284, %v986
        %v1844 = vsel %vm1798, %v286, %v988
        %v1845 = vsel %vm1798, %v288, %v990
        %v1846 = vsel %vm1798, %v290, %v992
        %v1847 = vsel %vm1798, %v292, %v994
        %v1848 = vsel %vm1798, %v294, %v996
        %v1849 = vsel %vm1798, %v296, %v998
        %v1850 = vsel %vm1798, %v298, %v1000
        %v1851 = vsel %vm1798, %v300, %v1002
        %v1852 = vsel %vm1798, %v302, %v1004
        %v1853 = vsel %vm1798, %v304, %v1006
        %v1854 = vsel %vm1798, %v306, %v1008
        %v1855 = vsel %vm1798, %v308, %v1010
        %v1856 = vsel %vm1798, %v310, %v1012
        %v1857 = vsel %vm1798, %v312, %v1014
        %v1858 = vsel %vm1798, %v314, %v1016
        %v1859 = vsel %vm1798, %v316, %v1018
        %v1860 = vsel %vm1798, %v318, %v1020
        %v1861 = vsel %vm1798, %v320, %v1022
        %v1862 = vsel %vm1798, %v322, %v1024
        %v1863 = vsel %vm1798, %v324, %v1026
        %v1864 = vsel %vm1798, %v326, %v1028
        %v1865 = vsel %vm1798, %v328, %v1030
        %v1866 = vsel %vm1798, %v330, %v1032
        %v1867 = vsel %vm1798, %v332, %v1034
        %v1868 = vsel %vm1798, %v334, %v1036
        %v1869 = vsel %vm1798, %v336, %v1038
        %v1870 = vsel %vm1798, %v338, %v1040
        %v1871 = vsel %vm1798, %v340, %v1042
        %v1872 = vsel %vm1798, %v342, %v1044
        %v1873 = vsel %vm1798, %v344, %v1046
        %v1874 = vsel %vm1798, %v346, %v1048
        %v1875 = vsel %vm1798, %v348, %v1050
        %v1876 = vsel %vm1798, %v350, %v1052
        %v1877 = vsel %vm1798, %v352, %v1054
        %v1878 = vsel %vm1798, %v354, %v1056
        %v1879 = vsel %vm1798, %v356, %v1058
        %v1880 = vsel %vm1798, %v358, %v1060
        %v1881 = vsel %vm1798, %v360, %v1062
        %v1882 = vsel %vm1798, %v362, %v1064
        %v1883 = vsel %vm1798, %v364, %v1066
        %v1884 = vsel %vm1798, %v366, %v1068
        %v1885 = vsel %vm1798, %v368, %v1070
        %v1886 = vsel %vm1798, %v370, %v1072
        %v1887 = vsel %vm1798, %v372, %v1074
        %v1888 = vsel %vm1798, %v374, %v1076
        %v1889 = vsel %vm1798, %v376, %v1078
        %v1890 = vsel %vm1798, %v378, %v1080
        %v1891 = vsel %vm1798, %v380, %v1082
        %v1892 = vsel %vm1798, %v382, %v1084
        %v1893 = vsel %vm1798, %v384, %v1086
        %v1894 = vsel %vm1798, %v386, %v1088
        %v1895 = vsel %vm1798, %v388, %v1090
        %v1896 = vsel %vm1798, %v390, %v1092
        %v1897 = vsel %vm1798, %v392, %v1094
        %v1898 = vsel %vm1798, %v394, %v1096
        %vm1899 = vcmask 64512
        %v1900 = vsel %vm1899, %v1799, %v1499
        %v1901 = vsel %vm1899, %v1800, %v1501
        %v1902 = vsel %vm1899, %v1801, %v1503
        %v1903 = vsel %vm1899, %v1802, %v1505
        %v1904 = vsel %vm1899, %v1803, %v1507
        %v1905 = vsel %vm1899, %v1804, %v1509
        %v1906 = vsel %vm1899, %v1805, %v1511
        %v1907 = vsel %vm1899, %v1806, %v1513
        %v1908 = vsel %vm1899, %v1807, %v1515
        %v1909 = vsel %vm1899, %v1808, %v1517
        %v1910 = vsel %vm1899, %v1809, %v1519
        %v1911 = vsel %vm1899, %v1810, %v1521
        %v1912 = vsel %vm1899, %v1811, %v1523
        %v1913 = vsel %vm1899, %v1812, %v1525
        %v1914 = vsel %vm1899, %v1813, %v1527
        %v1915 = vsel %vm1899, %v1814, %v1529
        %v1916 = vsel %vm1899, %v1815, %v1531
        %v1917 = vsel %vm1899, %v1816, %v1533
        %v1918 = vsel %vm1899, %v1817, %v1535
        %v1919 = vsel %vm1899, %v1818, %v1537
        %v1920 = vsel %vm1899, %v1819, %v1539
        %v1921 = vsel %vm1899, %v1820, %v1541
        %v1922 = vsel %vm1899, %v1821, %v1543
        %v1923 = vsel %vm1899, %v1822, %v1545
        %v1924 = vsel %vm1899, %v1823, %v1547
        %v1925 = vsel %vm1899, %v1824, %v1549
        %v1926 = vsel %vm1899, %v1825, %v1551
        %v1927 = vsel %vm1899, %v1826, %v1553
        %v1928 = vsel %vm1899, %v1827, %v1555
        %v1929 = vsel %vm1899, %v1828, %v1557
        %v1930 = vsel %vm1899, %v1829, %v1559
        %v1931 = vsel %vm1899, %v1830, %v1561
        %v1932 = vsel %vm1899, %v1831, %v1563
        %v1933 = vsel %vm1899, %v1832, %v1565
        %v1934 = vsel %vm1899, %v1833, %v1567
        %v1935 = vsel %vm1899, %v1834, %v1569
        %v1936 = vsel %vm1899, %v1835, %v1571
        %v1937 = vsel %vm1899, %v1836, %v1573
        %v1938 = vsel %vm1899, %v1837, %v1575
        %v1939 = vsel %vm1899, %v1838, %v1577
        %v1940 = vsel %vm1899, %v1839, %v1579
        %v1941 = vsel %vm1899, %v1840, %v1581
        %v1942 = vsel %vm1899, %v1841, %v1583
        %v1943 = vsel %vm1899, %v1842, %v1585
        %v1944 = vsel %vm1899, %v1843, %v1587
        %v1945 = vsel %vm1899, %v1844, %v1589
        %v1946 = vsel %vm1899, %v1845, %v1591
        %v1947 = vsel %vm1899, %v1846, %v1593
        %v1948 = vsel %vm1899, %v1847, %v1595
        %v1949 = vsel %vm1899, %v1848, %v1597
        %v1950 = vsel %vm1899, %v1849, %v1599
        %v1951 = vsel %vm1899, %v1850, %v1601
        %v1952 = vsel %vm1899, %v1851, %v1603
        %v1953 = vsel %vm1899, %v1852, %v1605
        %v1954 = vsel %vm1899, %v1853, %v1607
        %v1955 = vsel %vm1899, %v1854, %v1609
        %v1956 = vsel %vm1899, %v1855, %v1611
        %v1957 = vsel %vm1899, %v1856, %v1613
        %v1958 = vsel %vm1899, %v1857, %v1615
        %v1959 = vsel %vm1899, %v1858, %v1617
        %v1960 = vsel %vm1899, %v1859, %v1619
        %v1961 = vsel %vm1899, %v1860, %v1621
        %v1962 = vsel %vm1899, %v1861, %v1623
        %v1963 = vsel %vm1899, %v1862, %v1625
        %v1964 = vsel %vm1899, %v1863, %v1627
        %v1965 = vsel %vm1899, %v1864, %v1629
        %v1966 = vsel %vm1899, %v1865, %v1631
        %v1967 = vsel %vm1899, %v1866, %v1633
        %v1968 = vsel %vm1899, %v1867, %v1635
        %v1969 = vsel %vm1899, %v1868, %v1637
        %v1970 = vsel %vm1899, %v1869, %v1639
        %v1971 = vsel %vm1899, %v1870, %v1641
        %v1972 = vsel %vm1899, %v1871, %v1643
        %v1973 = vsel %vm1899, %v1872, %v1645
        %v1974 = vsel %vm1899, %v1873, %v1647
        %v1975 = vsel %vm1899, %v1874, %v1649
        %v1976 = vsel %vm1899, %v1875, %v1651
        %v1977 = vsel %vm1899, %v1876, %v1653
        %v1978 = vsel %vm1899, %v1877, %v1655
        %v1979 = vsel %vm1899, %v1878, %v1657
        %v1980 = vsel %vm1899, %v1879, %v1659
        %v1981 = vsel %vm1899, %v1880, %v1661
        %v1982 = vsel %vm1899, %v1881, %v1663
        %v1983 = vsel %vm1899, %v1882, %v1665
        %v1984 = vsel %vm1899, %v1883, %v1667
        %v1985 = vsel %vm1899, %v1884, %v1669
        %v1986 = vsel %vm1899, %v1885, %v1671
        %v1987 = vsel %vm1899, %v1886, %v1673
        %v1988 = vsel %vm1899, %v1887, %v1675
        %v1989 = vsel %vm1899, %v1888, %v1677
        %v1990 = vsel %vm1899, %v1889, %v1679
        %v1991 = vsel %vm1899, %v1890, %v1681
        %v1992 = vsel %vm1899, %v1891, %v1683
        %v1993 = vsel %vm1899, %v1892, %v1685
        %v1994 = vsel %vm1899, %v1893, %v1687
        %v1995 = vsel %vm1899, %v1894, %v1689
        %v1996 = vsel %vm1899, %v1895, %v1691
        %v1997 = vsel %vm1899, %v1896, %v1693
        %v1998 = vsel %vm1899, %v1897, %v1695
        %v1999 = vsel %vm1899, %v1898, %v1697
        %2080 = vrot.lane.b32.xlu0 %v1901, 12
        %v2081 = vpop.permute.xlu0 %2080
        %2082 = vrot.lane.b32.xlu0 %v1902, 12
        %v2083 = vpop.permute.xlu0 %2082
        %2084 = vrot.lane.b32.xlu0 %v1903, 12
        %v2085 = vpop.permute.xlu0 %2084
        %2086 = vrot.lane.b32.xlu0 %v1904, 12
        %v2087 = vpop.permute.xlu0 %2086
        %2088 = vrot.lane.b32.xlu0 %v1905, 12
        %v2089 = vpop.permute.xlu0 %2088
        %2090 = vrot.lane.b32.xlu0 %v1906, 12
        %v2091 = vpop.permute.xlu0 %2090
        %2092 = vrot.lane.b32.xlu0 %v1907, 12
        %v2093 = vpop.permute.xlu0 %2092
        %2094 = vrot.lane.b32.xlu0 %v1908, 12
        %v2095 = vpop.permute.xlu0 %2094
        %2096 = vrot.lane.b32.xlu0 %v1911, 12
        %v2097 = vpop.permute.xlu0 %2096
        %2098 = vrot.lane.b32.xlu0 %v1912, 12
        %v2099 = vpop.permute.xlu0 %2098
        %2100 = vrot.lane.b32.xlu0 %v1913, 12
        %v2101 = vpop.permute.xlu0 %2100
        %2102 = vrot.lane.b32.xlu0 %v1914, 12
        %v2103 = vpop.permute.xlu0 %2102
        %2104 = vrot.lane.b32.xlu0 %v1915, 12
        %v2105 = vpop.permute.xlu0 %2104
        %2106 = vrot.lane.b32.xlu0 %v1916, 12
        %v2107 = vpop.permute.xlu0 %2106
        %2108 = vrot.lane.b32.xlu0 %v1917, 12
        %v2109 = vpop.permute.xlu0 %2108
        %2110 = vrot.lane.b32.xlu0 %v1918, 12
        %v2111 = vpop.permute.xlu0 %2110
        %2112 = vrot.lane.b32.xlu0 %v1921, 12
        %v2113 = vpop.permute.xlu0 %2112
        %2114 = vrot.lane.b32.xlu0 %v1922, 12
        %v2115 = vpop.permute.xlu0 %2114
        %2116 = vrot.lane.b32.xlu0 %v1923, 12
        %v2117 = vpop.permute.xlu0 %2116
        %2118 = vrot.lane.b32.xlu0 %v1924, 12
        %v2119 = vpop.permute.xlu0 %2118
        %2120 = vrot.lane.b32.xlu0 %v1925, 12
        %v2121 = vpop.permute.xlu0 %2120
        %2122 = vrot.lane.b32.xlu0 %v1926, 12
        %v2123 = vpop.permute.xlu0 %2122
        %2124 = vrot.lane.b32.xlu0 %v1927, 12
        %v2125 = vpop.permute.xlu0 %2124
        %2126 = vrot.lane.b32.xlu0 %v1928, 12
        %v2127 = vpop.permute.xlu0 %2126
        %2128 = vrot.lane.b32.xlu0 %v1931, 12
        %v2129 = vpop.permute.xlu0 %2128
        %2130 = vrot.lane.b32.xlu0 %v1932, 12
        %v2131 = vpop.permute.xlu0 %2130
        %2132 = vrot.lane.b32.xlu0 %v1933, 12
        %v2133 = vpop.permute.xlu0 %2132
        %2134 = vrot.lane.b32.xlu0 %v1934, 12
        %v2135 = vpop.permute.xlu0 %2134
        %2136 = vrot.lane.b32.xlu0 %v1935, 12
        %v2137 = vpop.permute.xlu0 %2136
        %2138 = vrot.lane.b32.xlu0 %v1936, 12
        %v2139 = vpop.permute.xlu0 %2138
        %2140 = vrot.lane.b32.xlu0 %v1937, 12
        %v2141 = vpop.permute.xlu0 %2140
        %2142 = vrot.lane.b32.xlu0 %v1938, 12
        %v2143 = vpop.permute.xlu0 %2142
        %2144 = vrot.lane.b32.xlu0 %v1941, 12
        %v2145 = vpop.permute.xlu0 %2144
        %2146 = vrot.lane.b32.xlu0 %v1942, 12
        %v2147 = vpop.permute.xlu0 %2146
        %2148 = vrot.lane.b32.xlu0 %v1943, 12
        %v2149 = vpop.permute.xlu0 %2148
        %2150 = vrot.lane.b32.xlu0 %v1944, 12
        %v2151 = vpop.permute.xlu0 %2150
        %2152 = vrot.lane.b32.xlu0 %v1945, 12
        %v2153 = vpop.permute.xlu0 %2152
        %2154 = vrot.lane.b32.xlu0 %v1946, 12
        %v2155 = vpop.permute.xlu0 %2154
        %2156 = vrot.lane.b32.xlu0 %v1947, 12
        %v2157 = vpop.permute.xlu0 %2156
        %2158 = vrot.lane.b32.xlu0 %v1948, 12
        %v2159 = vpop.permute.xlu0 %2158
        %2160 = vrot.lane.b32.xlu0 %v1951, 12
        %v2161 = vpop.permute.xlu0 %2160
        %2162 = vrot.lane.b32.xlu0 %v1952, 12
        %v2163 = vpop.permute.xlu0 %2162
        %2164 = vrot.lane.b32.xlu0 %v1953, 12
        %v2165 = vpop.permute.xlu0 %2164
        %2166 = vrot.lane.b32.xlu0 %v1954, 12
        %v2167 = vpop.permute.xlu0 %2166
        %2168 = vrot.lane.b32.xlu0 %v1955, 12
        %v2169 = vpop.permute.xlu0 %2168
        %2170 = vrot.lane.b32.xlu0 %v1956, 12
        %v2171 = vpop.permute.xlu0 %2170
        %2172 = vrot.lane.b32.xlu0 %v1957, 12
        %v2173 = vpop.permute.xlu0 %2172
        %2174 = vrot.lane.b32.xlu0 %v1958, 12
        %v2175 = vpop.permute.xlu0 %2174
        %2176 = vrot.lane.b32.xlu0 %v1961, 12
        %v2177 = vpop.permute.xlu0 %2176
        %2178 = vrot.lane.b32.xlu0 %v1962, 12
        %v2179 = vpop.permute.xlu0 %2178
        %2180 = vrot.lane.b32.xlu0 %v1963, 12
        %v2181 = vpop.permute.xlu0 %2180
        %2182 = vrot.lane.b32.xlu0 %v1964, 12
        %v2183 = vpop.permute.xlu0 %2182
        %2184 = vrot.lane.b32.xlu0 %v1965, 12
        %v2185 = vpop.permute.xlu0 %2184
        %2186 = vrot.lane.b32.xlu0 %v1966, 12
        %v2187 = vpop.permute.xlu0 %2186
        %2188 = vrot.lane.b32.xlu0 %v1967, 12
        %v2189 = vpop.permute.xlu0 %2188
        %2190 = vrot.lane.b32.xlu0 %v1968, 12
        %v2191 = vpop.permute.xlu0 %2190
        %2192 = vrot.lane.b32.xlu0 %v1971, 12
        %v2193 = vpop.permute.xlu0 %2192
        %2194 = vrot.lane.b32.xlu0 %v1972, 12
        %v2195 = vpop.permute.xlu0 %2194
        %2196 = vrot.lane.b32.xlu0 %v1973, 12
        %v2197 = vpop.permute.xlu0 %2196
        %2198 = vrot.lane.b32.xlu0 %v1974, 12
        %v2199 = vpop.permute.xlu0 %2198
        %2200 = vrot.lane.b32.xlu0 %v1975, 12
        %v2201 = vpop.permute.xlu0 %2200
        %2202 = vrot.lane.b32.xlu0 %v1976, 12
        %v2203 = vpop.permute.xlu0 %2202
        %2204 = vrot.lane.b32.xlu0 %v1977, 12
        %v2205 = vpop.permute.xlu0 %2204
        %2206 = vrot.lane.b32.xlu0 %v1978, 12
        %v2207 = vpop.permute.xlu0 %2206
        %2208 = vrot.lane.b32.xlu0 %v1981, 12
        %v2209 = vpop.permute.xlu0 %2208
        %2210 = vrot.lane.b32.xlu0 %v1982, 12
        %v2211 = vpop.permute.xlu0 %2210
        %2212 = vrot.lane.b32.xlu0 %v1983, 12
        %v2213 = vpop.permute.xlu0 %2212
        %2214 = vrot.lane.b32.xlu0 %v1984, 12
        %v2215 = vpop.permute.xlu0 %2214
        %2216 = vrot.lane.b32.xlu0 %v1985, 12
        %v2217 = vpop.permute.xlu0 %2216
        %2218 = vrot.lane.b32.xlu0 %v1986, 12
        %v2219 = vpop.permute.xlu0 %2218
        %2220 = vrot.lane.b32.xlu0 %v1987, 12
        %v2221 = vpop.permute.xlu0 %2220
        %2222 = vrot.lane.b32.xlu0 %v1988, 12
        %v2223 = vpop.permute.xlu0 %2222
        %2224 = vrot.lane.b32.xlu0 %v1991, 12
        %v2225 = vpop.permute.xlu0 %2224
        %2226 = vrot.lane.b32.xlu0 %v1992, 12
        %v2227 = vpop.permute.xlu0 %2226
        %2228 = vrot.lane.b32.xlu0 %v1993, 12
        %v2229 = vpop.permute.xlu0 %2228
        %2230 = vrot.lane.b32.xlu0 %v1994, 12
        %v2231 = vpop.permute.xlu0 %2230
        %2232 = vrot.lane.b32.xlu0 %v1995, 12
        %v2233 = vpop.permute.xlu0 %2232
        %2234 = vrot.lane.b32.xlu0 %v1996, 12
        %v2235 = vpop.permute.xlu0 %2234
        %2236 = vrot.lane.b32.xlu0 %v1997, 12
        %v2237 = vpop.permute.xlu0 %2236
        %2238 = vrot.lane.b32.xlu0 %v1998, 12
        %v2239 = vpop.permute.xlu0 %2238
        %2330 = vrot.lane.b32.xlu0 %v1902, 24
        %v2331 = vpop.permute.xlu0 %2330
        %2332 = vrot.lane.b32.xlu0 %v1903, 24
        %v2333 = vpop.permute.xlu0 %2332
        %2334 = vrot.lane.b32.xlu0 %v1904, 24
        %v2335 = vpop.permute.xlu0 %2334
        %2336 = vrot.lane.b32.xlu0 %v1905, 24
        %v2337 = vpop.permute.xlu0 %2336
        %2338 = vrot.lane.b32.xlu0 %v1906, 24
        %v2339 = vpop.permute.xlu0 %2338
        %2340 = vrot.lane.b32.xlu0 %v1907, 24
        %v2341 = vpop.permute.xlu0 %2340
        %2342 = vrot.lane.b32.xlu0 %v1908, 24
        %v2343 = vpop.permute.xlu0 %2342
        %2344 = vrot.lane.b32.xlu0 %v1909, 24
        %v2345 = vpop.permute.xlu0 %2344
        %2346 = vrot.lane.b32.xlu0 %v1912, 24
        %v2347 = vpop.permute.xlu0 %2346
        %2348 = vrot.lane.b32.xlu0 %v1913, 24
        %v2349 = vpop.permute.xlu0 %2348
        %2350 = vrot.lane.b32.xlu0 %v1914, 24
        %v2351 = vpop.permute.xlu0 %2350
        %2352 = vrot.lane.b32.xlu0 %v1915, 24
        %v2353 = vpop.permute.xlu0 %2352
        %2354 = vrot.lane.b32.xlu0 %v1916, 24
        %v2355 = vpop.permute.xlu0 %2354
        %2356 = vrot.lane.b32.xlu0 %v1917, 24
        %v2357 = vpop.permute.xlu0 %2356
        %2358 = vrot.lane.b32.xlu0 %v1918, 24
        %v2359 = vpop.permute.xlu0 %2358
        %2360 = vrot.lane.b32.xlu0 %v1919, 24
        %v2361 = vpop.permute.xlu0 %2360
        %2362 = vrot.lane.b32.xlu0 %v1922, 24
        %v2363 = vpop.permute.xlu0 %2362
        %2364 = vrot.lane.b32.xlu0 %v1923, 24
        %v2365 = vpop.permute.xlu0 %2364
        %2366 = vrot.lane.b32.xlu0 %v1924, 24
        %v2367 = vpop.permute.xlu0 %2366
        %2368 = vrot.lane.b32.xlu0 %v1925, 24
        %v2369 = vpop.permute.xlu0 %2368
        %2370 = vrot.lane.b32.xlu0 %v1926, 24
        %v2371 = vpop.permute.xlu0 %2370
        %2372 = vrot.lane.b32.xlu0 %v1927, 24
        %v2373 = vpop.permute.xlu0 %2372
        %2374 = vrot.lane.b32.xlu0 %v1928, 24
        %v2375 = vpop.permute.xlu0 %2374
        %2376 = vrot.lane.b32.xlu0 %v1929, 24
        %v2377 = vpop.permute.xlu0 %2376
        %2378 = vrot.lane.b32.xlu0 %v1932, 24
        %v2379 = vpop.permute.xlu0 %2378
        %2380 = vrot.lane.b32.xlu0 %v1933, 24
        %v2381 = vpop.permute.xlu0 %2380
        %2382 = vrot.lane.b32.xlu0 %v1934, 24
        %v2383 = vpop.permute.xlu0 %2382
        %2384 = vrot.lane.b32.xlu0 %v1935, 24
        %v2385 = vpop.permute.xlu0 %2384
        %2386 = vrot.lane.b32.xlu0 %v1936, 24
        %v2387 = vpop.permute.xlu0 %2386
        %2388 = vrot.lane.b32.xlu0 %v1937, 24
        %v2389 = vpop.permute.xlu0 %2388
        %2390 = vrot.lane.b32.xlu0 %v1938, 24
        %v2391 = vpop.permute.xlu0 %2390
        %2392 = vrot.lane.b32.xlu0 %v1939, 24
        %v2393 = vpop.permute.xlu0 %2392
        %2394 = vrot.lane.b32.xlu0 %v1942, 24
        %v2395 = vpop.permute.xlu0 %2394
        %2396 = vrot.lane.b32.xlu0 %v1943, 24
        %v2397 = vpop.permute.xlu0 %2396
        %2398 = vrot.lane.b32.xlu0 %v1944, 24
        %v2399 = vpop.permute.xlu0 %2398
        %2400 = vrot.lane.b32.xlu0 %v1945, 24
        %v2401 = vpop.permute.xlu0 %2400
        %2402 = vrot.lane.b32.xlu0 %v1946, 24
        %v2403 = vpop.permute.xlu0 %2402
        %2404 = vrot.lane.b32.xlu0 %v1947, 24
        %v2405 = vpop.permute.xlu0 %2404
        %2406 = vrot.lane.b32.xlu0 %v1948, 24
        %v2407 = vpop.permute.xlu0 %2406
        %2408 = vrot.lane.b32.xlu0 %v1949, 24
        %v2409 = vpop.permute.xlu0 %2408
        %2410 = vrot.lane.b32.xlu0 %v1952, 24
        %v2411 = vpop.permute.xlu0 %2410
        %2412 = vrot.lane.b32.xlu0 %v1953, 24
        %v2413 = vpop.permute.xlu0 %2412
        %2414 = vrot.lane.b32.xlu0 %v1954, 24
        %v2415 = vpop.permute.xlu0 %2414
        %2416 = vrot.lane.b32.xlu0 %v1955, 24
        %v2417 = vpop.permute.xlu0 %2416
        %2418 = vrot.lane.b32.xlu0 %v1956, 24
        %v2419 = vpop.permute.xlu0 %2418
        %2420 = vrot.lane.b32.xlu0 %v1957, 24
        %v2421 = vpop.permute.xlu0 %2420
        %2422 = vrot.lane.b32.xlu0 %v1958, 24
        %v2423 = vpop.permute.xlu0 %2422
        %2424 = vrot.lane.b32.xlu0 %v1959, 24
        %v2425 = vpop.permute.xlu0 %2424
        %2426 = vrot.lane.b32.xlu0 %v1962, 24
        %v2427 = vpop.permute.xlu0 %2426
        %2428 = vrot.lane.b32.xlu0 %v1963, 24
        %v2429 = vpop.permute.xlu0 %2428
        %2430 = vrot.lane.b32.xlu0 %v1964, 24
        %v2431 = vpop.permute.xlu0 %2430
        %2432 = vrot.lane.b32.xlu0 %v1965, 24
        %v2433 = vpop.permute.xlu0 %2432
        %2434 = vrot.lane.b32.xlu0 %v1966, 24
        %v2435 = vpop.permute.xlu0 %2434
        %2436 = vrot.lane.b32.xlu0 %v1967, 24
        %v2437 = vpop.permute.xlu0 %2436
        %2438 = vrot.lane.b32.xlu0 %v1968, 24
        %v2439 = vpop.permute.xlu0 %2438
        %2440 = vrot.lane.b32.xlu0 %v1969, 24
        %v2441 = vpop.permute.xlu0 %2440
        %2442 = vrot.lane.b32.xlu0 %v1972, 24
        %v2443 = vpop.permute.xlu0 %2442
        %2444 = vrot.lane.b32.xlu0 %v1973, 24
        %v2445 = vpop.permute.xlu0 %2444
        %2446 = vrot.lane.b32.xlu0 %v1974, 24
        %v2447 = vpop.permute.xlu0 %2446
        %2448 = vrot.lane.b32.xlu0 %v1975, 24
        %v2449 = vpop.permute.xlu0 %2448
        %2450 = vrot.lane.b32.xlu0 %v1976, 24
        %v2451 = vpop.permute.xlu0 %2450
        %2452 = vrot.lane.b32.xlu0 %v1977, 24
        %v2453 = vpop.permute.xlu0 %2452
        %2454 = vrot.lane.b32.xlu0 %v1978, 24
        %v2455 = vpop.permute.xlu0 %2454
        %2456 = vrot.lane.b32.xlu0 %v1979, 24
        %v2457 = vpop.permute.xlu0 %2456
        %2458 = vrot.lane.b32.xlu0 %v1982, 24
        %v2459 = vpop.permute.xlu0 %2458
        %2460 = vrot.lane.b32.xlu0 %v1983, 24
        %v2461 = vpop.permute.xlu0 %2460
        %2462 = vrot.lane.b32.xlu0 %v1984, 24
        %v2463 = vpop.permute.xlu0 %2462
        %2464 = vrot.lane.b32.xlu0 %v1985, 24
        %v2465 = vpop.permute.xlu0 %2464
        %2466 = vrot.lane.b32.xlu0 %v1986, 24
        %v2467 = vpop.permute.xlu0 %2466
        %2468 = vrot.lane.b32.xlu0 %v1987, 24
        %v2469 = vpop.permute.xlu0 %2468
        %2470 = vrot.lane.b32.xlu0 %v1988, 24
        %v2471 = vpop.permute.xlu0 %2470
        %2472 = vrot.lane.b32.xlu0 %v1989, 24
        %v2473 = vpop.permute.xlu0 %2472
        %2474 = vrot.lane.b32.xlu0 %v1992, 24
        %v2475 = vpop.permute.xlu0 %2474
        %2476 = vrot.lane.b32.xlu0 %v1993, 24
        %v2477 = vpop.permute.xlu0 %2476
        %2478 = vrot.lane.b32.xlu0 %v1994, 24
        %v2479 = vpop.permute.xlu0 %2478
        %2480 = vrot.lane.b32.xlu0 %v1995, 24
        %v2481 = vpop.permute.xlu0 %2480
        %2482 = vrot.lane.b32.xlu0 %v1996, 24
        %v2483 = vpop.permute.xlu0 %2482
        %2484 = vrot.lane.b32.xlu0 %v1997, 24
        %v2485 = vpop.permute.xlu0 %2484
        %2486 = vrot.lane.b32.xlu0 %v1998, 24
        %v2487 = vpop.permute.xlu0 %2486
        %2488 = vrot.lane.b32.xlu0 %v1999, 24
        %v2489 = vpop.permute.xlu0 %2488
        %vm2570 = vcmask 97280
        %v2571 = vsel %vm2570, %v1900, %v2081
        %v2572 = vsel %vm2570, %v1901, %v2083
        %v2573 = vsel %vm2570, %v1902, %v2085
        %v2574 = vsel %vm2570, %v1903, %v2087
        %v2575 = vsel %vm2570, %v1904, %v2089
        %v2576 = vsel %vm2570, %v1905, %v2091
        %v2577 = vsel %vm2570, %v1906, %v2093
        %v2578 = vsel %vm2570, %v1907, %v2095
        %v2579 = vsel %vm2570, %v1910, %v2097
        %v2580 = vsel %vm2570, %v1911, %v2099
        %v2581 = vsel %vm2570, %v1912, %v2101
        %v2582 = vsel %vm2570, %v1913, %v2103
        %v2583 = vsel %vm2570, %v1914, %v2105
        %v2584 = vsel %vm2570, %v1915, %v2107
        %v2585 = vsel %vm2570, %v1916, %v2109
        %v2586 = vsel %vm2570, %v1917, %v2111
        %v2587 = vsel %vm2570, %v1920, %v2113
        %v2588 = vsel %vm2570, %v1921, %v2115
        %v2589 = vsel %vm2570, %v1922, %v2117
        %v2590 = vsel %vm2570, %v1923, %v2119
        %v2591 = vsel %vm2570, %v1924, %v2121
        %v2592 = vsel %vm2570, %v1925, %v2123
        %v2593 = vsel %vm2570, %v1926, %v2125
        %v2594 = vsel %vm2570, %v1927, %v2127
        %v2595 = vsel %vm2570, %v1930, %v2129
        %v2596 = vsel %vm2570, %v1931, %v2131
        %v2597 = vsel %vm2570, %v1932, %v2133
        %v2598 = vsel %vm2570, %v1933, %v2135
        %v2599 = vsel %vm2570, %v1934, %v2137
        %v2600 = vsel %vm2570, %v1935, %v2139
        %v2601 = vsel %vm2570, %v1936, %v2141
        %v2602 = vsel %vm2570, %v1937, %v2143
        %v2603 = vsel %vm2570, %v1940, %v2145
        %v2604 = vsel %vm2570, %v1941, %v2147
        %v2605 = vsel %vm2570, %v1942, %v2149
        %v2606 = vsel %vm2570, %v1943, %v2151
        %v2607 = vsel %vm2570, %v1944, %v2153
        %v2608 = vsel %vm2570, %v1945, %v2155
        %v2609 = vsel %vm2570, %v1946, %v2157
        %v2610 = vsel %vm2570, %v1947, %v2159
        %v2611 = vsel %vm2570, %v1950, %v2161
        %v2612 = vsel %vm2570, %v1951, %v2163
        %v2613 = vsel %vm2570, %v1952, %v2165
        %v2614 = vsel %vm2570, %v1953, %v2167
        %v2615 = vsel %vm2570, %v1954, %v2169
        %v2616 = vsel %vm2570, %v1955, %v2171
        %v2617 = vsel %vm2570, %v1956, %v2173
        %v2618 = vsel %vm2570, %v1957, %v2175
        %v2619 = vsel %vm2570, %v1960, %v2177
        %v2620 = vsel %vm2570, %v1961, %v2179
        %v2621 = vsel %vm2570, %v1962, %v2181
        %v2622 = vsel %vm2570, %v1963, %v2183
        %v2623 = vsel %vm2570, %v1964, %v2185
        %v2624 = vsel %vm2570, %v1965, %v2187
        %v2625 = vsel %vm2570, %v1966, %v2189
        %v2626 = vsel %vm2570, %v1967, %v2191
        %v2627 = vsel %vm2570, %v1970, %v2193
        %v2628 = vsel %vm2570, %v1971, %v2195
        %v2629 = vsel %vm2570, %v1972, %v2197
        %v2630 = vsel %vm2570, %v1973, %v2199
        %v2631 = vsel %vm2570, %v1974, %v2201
        %v2632 = vsel %vm2570, %v1975, %v2203
        %v2633 = vsel %vm2570, %v1976, %v2205
        %v2634 = vsel %vm2570, %v1977, %v2207
        %v2635 = vsel %vm2570, %v1980, %v2209
        %v2636 = vsel %vm2570, %v1981, %v2211
        %v2637 = vsel %vm2570, %v1982, %v2213
        %v2638 = vsel %vm2570, %v1983, %v2215
        %v2639 = vsel %vm2570, %v1984, %v2217
        %v2640 = vsel %vm2570, %v1985, %v2219
        %v2641 = vsel %vm2570, %v1986, %v2221
        %v2642 = vsel %vm2570, %v1987, %v2223
        %v2643 = vsel %vm2570, %v1990, %v2225
        %v2644 = vsel %vm2570, %v1991, %v2227
        %v2645 = vsel %vm2570, %v1992, %v2229
        %v2646 = vsel %vm2570, %v1993, %v2231
        %v2647 = vsel %vm2570, %v1994, %v2233
        %v2648 = vsel %vm2570, %v1995, %v2235
        %v2649 = vsel %vm2570, %v1996, %v2237
        %v2650 = vsel %vm2570, %v1997, %v2239
        %vm2651 = vcmask 195584
        %v2652 = vsel %vm2651, %v2571, %v2331
        %v2653 = vsel %vm2651, %v2572, %v2333
        %v2654 = vsel %vm2651, %v2573, %v2335
        %v2655 = vsel %vm2651, %v2574, %v2337
        %v2656 = vsel %vm2651, %v2575, %v2339
        %v2657 = vsel %vm2651, %v2576, %v2341
        %v2658 = vsel %vm2651, %v2577, %v2343
        %v2659 = vsel %vm2651, %v2578, %v2345
        %v2660 = vsel %vm2651, %v2579, %v2347
        %v2661 = vsel %vm2651, %v2580, %v2349
        %v2662 = vsel %vm2651, %v2581, %v2351
        %v2663 = vsel %vm2651, %v2582, %v2353
        %v2664 = vsel %vm2651, %v2583, %v2355
        %v2665 = vsel %vm2651, %v2584, %v2357
        %v2666 = vsel %vm2651, %v2585, %v2359
        %v2667 = vsel %vm2651, %v2586, %v2361
        %v2668 = vsel %vm2651, %v2587, %v2363
        %v2669 = vsel %vm2651, %v2588, %v2365
        %v2670 = vsel %vm2651, %v2589, %v2367
        %v2671 = vsel %vm2651, %v2590, %v2369
        %v2672 = vsel %vm2651, %v2591, %v2371
        %v2673 = vsel %vm2651, %v2592, %v2373
        %v2674 = vsel %vm2651, %v2593, %v2375
        %v2675 = vsel %vm2651, %v2594, %v2377
        %v2676 = vsel %vm2651, %v2595, %v2379
        %v2677 = vsel %vm2651, %v2596, %v2381
        %v2678 = vsel %vm2651, %v2597, %v2383
        %v2679 = vsel %vm2651, %v2598, %v2385
        %v2680 = vsel %vm2651, %v2599, %v2387
        %v2681 = vsel %vm2651, %v2600, %v2389
        %v2682 = vsel %vm2651, %v2601, %v2391
        %v2683 = vsel %vm2651, %v2602, %v2393
        %v2684 = vsel %vm2651, %v2603, %v2395
        %v2685 = vsel %vm2651, %v2604, %v2397
        %v2686 = vsel %vm2651, %v2605, %v2399
        %v2687 = vsel %vm2651, %v2606, %v2401
        %v2688 = vsel %vm2651, %v2607, %v2403
        %v2689 = vsel %vm2651, %v2608, %v2405
        %v2690 = vsel %vm2651, %v2609, %v2407
        %v2691 = vsel %vm2651, %v2610, %v2409
        %v2692 = vsel %vm2651, %v2611, %v2411
        %v2693 = vsel %vm2651, %v2612, %v2413
        %v2694 = vsel %vm2651, %v2613, %v2415
        %v2695 = vsel %vm2651, %v2614, %v2417
        %v2696 = vsel %vm2651, %v2615, %v2419
        %v2697 = vsel %vm2651, %v2616, %v2421
        %v2698 = vsel %vm2651, %v2617, %v2423
        %v2699 = vsel %vm2651, %v2618, %v2425
        %v2700 = vsel %vm2651, %v2619, %v2427
        %v2701 = vsel %vm2651, %v2620, %v2429
        %v2702 = vsel %vm2651, %v2621, %v2431
        %v2703 = vsel %vm2651, %v2622, %v2433
        %v2704 = vsel %vm2651, %v2623, %v2435
        %v2705 = vsel %vm2651, %v2624, %v2437
        %v2706 = vsel %vm2651, %v2625, %v2439
        %v2707 = vsel %vm2651, %v2626, %v2441
        %v2708 = vsel %vm2651, %v2627, %v2443
        %v2709 = vsel %vm2651, %v2628, %v2445
        %v2710 = vsel %vm2651, %v2629, %v2447
        %v2711 = vsel %vm2651, %v2630, %v2449
        %v2712 = vsel %vm2651, %v2631, %v2451
        %v2713 = vsel %vm2651, %v2632, %v2453
        %v2714 = vsel %vm2651, %v2633, %v2455
        %v2715 = vsel %vm2651, %v2634, %v2457
        %v2716 = vsel %vm2651, %v2635, %v2459
        %v2717 = vsel %vm2651, %v2636, %v2461
        %v2718 = vsel %vm2651, %v2637, %v2463
        %v2719 = vsel %vm2651, %v2638, %v2465
        %v2720 = vsel %vm2651, %v2639, %v2467
        %v2721 = vsel %vm2651, %v2640, %v2469
        %v2722 = vsel %vm2651, %v2641, %v2471
        %v2723 = vsel %vm2651, %v2642, %v2473
        %v2724 = vsel %vm2651, %v2643, %v2475
        %v2725 = vsel %vm2651, %v2644, %v2477
        %v2726 = vsel %vm2651, %v2645, %v2479
        %v2727 = vsel %vm2651, %v2646, %v2481
        %v2728 = vsel %vm2651, %v2647, %v2483
        %v2729 = vsel %vm2651, %v2648, %v2485
        %v2730 = vsel %vm2651, %v2649, %v2487
        %v2731 = vsel %vm2651, %v2650, %v2489
        %2796 = vrot.lane.b32.xlu0 %v2660, 36
        %v2797 = vpop.permute.xlu0 %2796
        %2798 = vrot.lane.b32.xlu0 %v2661, 36
        %v2799 = vpop.permute.xlu0 %2798
        %2800 = vrot.lane.b32.xlu0 %v2662, 36
        %v2801 = vpop.permute.xlu0 %2800
        %2802 = vrot.lane.b32.xlu0 %v2663, 36
        %v2803 = vpop.permute.xlu0 %2802
        %2804 = vrot.lane.b32.xlu0 %v2664, 36
        %v2805 = vpop.permute.xlu0 %2804
        %2806 = vrot.lane.b32.xlu0 %v2665, 36
        %v2807 = vpop.permute.xlu0 %2806
        %2808 = vrot.lane.b32.xlu0 %v2666, 36
        %v2809 = vpop.permute.xlu0 %2808
        %2810 = vrot.lane.b32.xlu0 %v2667, 36
        %v2811 = vpop.permute.xlu0 %2810
        %2812 = vrot.lane.b32.xlu0 %v2668, 36
        %v2813 = vpop.permute.xlu0 %2812
        %2814 = vrot.lane.b32.xlu0 %v2669, 36
        %v2815 = vpop.permute.xlu0 %2814
        %2816 = vrot.lane.b32.xlu0 %v2670, 36
        %v2817 = vpop.permute.xlu0 %2816
        %2818 = vrot.lane.b32.xlu0 %v2671, 36
        %v2819 = vpop.permute.xlu0 %2818
        %2820 = vrot.lane.b32.xlu0 %v2672, 36
        %v2821 = vpop.permute.xlu0 %2820
        %2822 = vrot.lane.b32.xlu0 %v2673, 36
        %v2823 = vpop.permute.xlu0 %2822
        %2824 = vrot.lane.b32.xlu0 %v2674, 36
        %v2825 = vpop.permute.xlu0 %2824
        %2826 = vrot.lane.b32.xlu0 %v2675, 36
        %v2827 = vpop.permute.xlu0 %2826
        %2828 = vrot.lane.b32.xlu0 %v2676, 36
        %v2829 = vpop.permute.xlu0 %2828
        %2830 = vrot.lane.b32.xlu0 %v2677, 36
        %v2831 = vpop.permute.xlu0 %2830
        %2832 = vrot.lane.b32.xlu0 %v2678, 36
        %v2833 = vpop.permute.xlu0 %2832
        %2834 = vrot.lane.b32.xlu0 %v2679, 36
        %v2835 = vpop.permute.xlu0 %2834
        %2836 = vrot.lane.b32.xlu0 %v2680, 36
        %v2837 = vpop.permute.xlu0 %2836
        %2838 = vrot.lane.b32.xlu0 %v2681, 36
        %v2839 = vpop.permute.xlu0 %2838
        %2840 = vrot.lane.b32.xlu0 %v2682, 36
        %v2841 = vpop.permute.xlu0 %2840
        %2842 = vrot.lane.b32.xlu0 %v2683, 36
        %v2843 = vpop.permute.xlu0 %2842
        %2844 = vrot.lane.b32.xlu0 %v2684, 36
        %v2845 = vpop.permute.xlu0 %2844
        %2846 = vrot.lane.b32.xlu0 %v2685, 36
        %v2847 = vpop.permute.xlu0 %2846
        %2848 = vrot.lane.b32.xlu0 %v2686, 36
        %v2849 = vpop.permute.xlu0 %2848
        %2850 = vrot.lane.b32.xlu0 %v2687, 36
        %v2851 = vpop.permute.xlu0 %2850
        %2852 = vrot.lane.b32.xlu0 %v2688, 36
        %v2853 = vpop.permute.xlu0 %2852
        %2854 = vrot.lane.b32.xlu0 %v2689, 36
        %v2855 = vpop.permute.xlu0 %2854
        %2856 = vrot.lane.b32.xlu0 %v2690, 36
        %v2857 = vpop.permute.xlu0 %2856
        %2858 = vrot.lane.b32.xlu0 %v2691, 36
        %v2859 = vpop.permute.xlu0 %2858
        %2860 = vrot.lane.b32.xlu0 %v2692, 36
        %v2861 = vpop.permute.xlu0 %2860
        %2862 = vrot.lane.b32.xlu0 %v2693, 36
        %v2863 = vpop.permute.xlu0 %2862
        %2864 = vrot.lane.b32.xlu0 %v2694, 36
        %v2865 = vpop.permute.xlu0 %2864
        %2866 = vrot.lane.b32.xlu0 %v2695, 36
        %v2867 = vpop.permute.xlu0 %2866
        %2868 = vrot.lane.b32.xlu0 %v2696, 36
        %v2869 = vpop.permute.xlu0 %2868
        %2870 = vrot.lane.b32.xlu0 %v2697, 36
        %v2871 = vpop.permute.xlu0 %2870
        %2872 = vrot.lane.b32.xlu0 %v2698, 36
        %v2873 = vpop.permute.xlu0 %2872
        %2874 = vrot.lane.b32.xlu0 %v2699, 36
        %v2875 = vpop.permute.xlu0 %2874
        %2876 = vrot.lane.b32.xlu0 %v2700, 36
        %v2877 = vpop.permute.xlu0 %2876
        %2878 = vrot.lane.b32.xlu0 %v2701, 36
        %v2879 = vpop.permute.xlu0 %2878
        %2880 = vrot.lane.b32.xlu0 %v2702, 36
        %v2881 = vpop.permute.xlu0 %2880
        %2882 = vrot.lane.b32.xlu0 %v2703, 36
        %v2883 = vpop.permute.xlu0 %2882
        %2884 = vrot.lane.b32.xlu0 %v2704, 36
        %v2885 = vpop.permute.xlu0 %2884
        %2886 = vrot.lane.b32.xlu0 %v2705, 36
        %v2887 = vpop.permute.xlu0 %2886
        %2888 = vrot.lane.b32.xlu0 %v2706, 36
        %v2889 = vpop.permute.xlu0 %2888
        %2890 = vrot.lane.b32.xlu0 %v2707, 36
        %v2891 = vpop.permute.xlu0 %2890
        %2892 = vrot.lane.b32.xlu0 %v2708, 36
        %v2893 = vpop.permute.xlu0 %2892
        %2894 = vrot.lane.b32.xlu0 %v2709, 36
        %v2895 = vpop.permute.xlu0 %2894
        %2896 = vrot.lane.b32.xlu0 %v2710, 36
        %v2897 = vpop.permute.xlu0 %2896
        %2898 = vrot.lane.b32.xlu0 %v2711, 36
        %v2899 = vpop.permute.xlu0 %2898
        %2900 = vrot.lane.b32.xlu0 %v2712, 36
        %v2901 = vpop.permute.xlu0 %2900
        %2902 = vrot.lane.b32.xlu0 %v2713, 36
        %v2903 = vpop.permute.xlu0 %2902
        %2904 = vrot.lane.b32.xlu0 %v2714, 36
        %v2905 = vpop.permute.xlu0 %2904
        %2906 = vrot.lane.b32.xlu0 %v2715, 36
        %v2907 = vpop.permute.xlu0 %2906
        %2908 = vrot.lane.b32.xlu0 %v2716, 36
        %v2909 = vpop.permute.xlu0 %2908
        %2910 = vrot.lane.b32.xlu0 %v2717, 36
        %v2911 = vpop.permute.xlu0 %2910
        %2912 = vrot.lane.b32.xlu0 %v2718, 36
        %v2913 = vpop.permute.xlu0 %2912
        %2914 = vrot.lane.b32.xlu0 %v2719, 36
        %v2915 = vpop.permute.xlu0 %2914
        %2916 = vrot.lane.b32.xlu0 %v2720, 36
        %v2917 = vpop.permute.xlu0 %2916
        %2918 = vrot.lane.b32.xlu0 %v2721, 36
        %v2919 = vpop.permute.xlu0 %2918
        %2920 = vrot.lane.b32.xlu0 %v2722, 36
        %v2921 = vpop.permute.xlu0 %2920
        %2922 = vrot.lane.b32.xlu0 %v2723, 36
        %v2923 = vpop.permute.xlu0 %2922
        %2996 = vrot.lane.b32.xlu0 %v2668, 72
        %v2997 = vpop.permute.xlu0 %2996
        %2998 = vrot.lane.b32.xlu0 %v2669, 72
        %v2999 = vpop.permute.xlu0 %2998
        %3000 = vrot.lane.b32.xlu0 %v2670, 72
        %v3001 = vpop.permute.xlu0 %3000
        %3002 = vrot.lane.b32.xlu0 %v2671, 72
        %v3003 = vpop.permute.xlu0 %3002
        %3004 = vrot.lane.b32.xlu0 %v2672, 72
        %v3005 = vpop.permute.xlu0 %3004
        %3006 = vrot.lane.b32.xlu0 %v2673, 72
        %v3007 = vpop.permute.xlu0 %3006
        %3008 = vrot.lane.b32.xlu0 %v2674, 72
        %v3009 = vpop.permute.xlu0 %3008
        %3010 = vrot.lane.b32.xlu0 %v2675, 72
        %v3011 = vpop.permute.xlu0 %3010
        %3012 = vrot.lane.b32.xlu0 %v2676, 72
        %v3013 = vpop.permute.xlu0 %3012
        %3014 = vrot.lane.b32.xlu0 %v2677, 72
        %v3015 = vpop.permute.xlu0 %3014
        %3016 = vrot.lane.b32.xlu0 %v2678, 72
        %v3017 = vpop.permute.xlu0 %3016
        %3018 = vrot.lane.b32.xlu0 %v2679, 72
        %v3019 = vpop.permute.xlu0 %3018
        %3020 = vrot.lane.b32.xlu0 %v2680, 72
        %v3021 = vpop.permute.xlu0 %3020
        %3022 = vrot.lane.b32.xlu0 %v2681, 72
        %v3023 = vpop.permute.xlu0 %3022
        %3024 = vrot.lane.b32.xlu0 %v2682, 72
        %v3025 = vpop.permute.xlu0 %3024
        %3026 = vrot.lane.b32.xlu0 %v2683, 72
        %v3027 = vpop.permute.xlu0 %3026
        %3028 = vrot.lane.b32.xlu0 %v2684, 72
        %v3029 = vpop.permute.xlu0 %3028
        %3030 = vrot.lane.b32.xlu0 %v2685, 72
        %v3031 = vpop.permute.xlu0 %3030
        %3032 = vrot.lane.b32.xlu0 %v2686, 72
        %v3033 = vpop.permute.xlu0 %3032
        %3034 = vrot.lane.b32.xlu0 %v2687, 72
        %v3035 = vpop.permute.xlu0 %3034
        %3036 = vrot.lane.b32.xlu0 %v2688, 72
        %v3037 = vpop.permute.xlu0 %3036
        %3038 = vrot.lane.b32.xlu0 %v2689, 72
        %v3039 = vpop.permute.xlu0 %3038
        %3040 = vrot.lane.b32.xlu0 %v2690, 72
        %v3041 = vpop.permute.xlu0 %3040
        %3042 = vrot.lane.b32.xlu0 %v2691, 72
        %v3043 = vpop.permute.xlu0 %3042
        %3044 = vrot.lane.b32.xlu0 %v2692, 72
        %v3045 = vpop.permute.xlu0 %3044
        %3046 = vrot.lane.b32.xlu0 %v2693, 72
        %v3047 = vpop.permute.xlu0 %3046
        %3048 = vrot.lane.b32.xlu0 %v2694, 72
        %v3049 = vpop.permute.xlu0 %3048
        %3050 = vrot.lane.b32.xlu0 %v2695, 72
        %v3051 = vpop.permute.xlu0 %3050
        %3052 = vrot.lane.b32.xlu0 %v2696, 72
        %v3053 = vpop.permute.xlu0 %3052
        %3054 = vrot.lane.b32.xlu0 %v2697, 72
        %v3055 = vpop.permute.xlu0 %3054
        %3056 = vrot.lane.b32.xlu0 %v2698, 72
        %v3057 = vpop.permute.xlu0 %3056
        %3058 = vrot.lane.b32.xlu0 %v2699, 72
        %v3059 = vpop.permute.xlu0 %3058
        %3060 = vrot.lane.b32.xlu0 %v2700, 72
        %v3061 = vpop.permute.xlu0 %3060
        %3062 = vrot.lane.b32.xlu0 %v2701, 72
        %v3063 = vpop.permute.xlu0 %3062
        %3064 = vrot.lane.b32.xlu0 %v2702, 72
        %v3065 = vpop.permute.xlu0 %3064
        %3066 = vrot.lane.b32.xlu0 %v2703, 72
        %v3067 = vpop.permute.xlu0 %3066
        %3068 = vrot.lane.b32.xlu0 %v2704, 72
        %v3069 = vpop.permute.xlu0 %3068
        %3070 = vrot.lane.b32.xlu0 %v2705, 72
        %v3071 = vpop.permute.xlu0 %3070
        %3072 = vrot.lane.b32.xlu0 %v2706, 72
        %v3073 = vpop.permute.xlu0 %3072
        %3074 = vrot.lane.b32.xlu0 %v2707, 72
        %v3075 = vpop.permute.xlu0 %3074
        %3076 = vrot.lane.b32.xlu0 %v2708, 72
        %v3077 = vpop.permute.xlu0 %3076
        %3078 = vrot.lane.b32.xlu0 %v2709, 72
        %v3079 = vpop.permute.xlu0 %3078
        %3080 = vrot.lane.b32.xlu0 %v2710, 72
        %v3081 = vpop.permute.xlu0 %3080
        %3082 = vrot.lane.b32.xlu0 %v2711, 72
        %v3083 = vpop.permute.xlu0 %3082
        %3084 = vrot.lane.b32.xlu0 %v2712, 72
        %v3085 = vpop.permute.xlu0 %3084
        %3086 = vrot.lane.b32.xlu0 %v2713, 72
        %v3087 = vpop.permute.xlu0 %3086
        %3088 = vrot.lane.b32.xlu0 %v2714, 72
        %v3089 = vpop.permute.xlu0 %3088
        %3090 = vrot.lane.b32.xlu0 %v2715, 72
        %v3091 = vpop.permute.xlu0 %3090
        %3092 = vrot.lane.b32.xlu0 %v2716, 72
        %v3093 = vpop.permute.xlu0 %3092
        %3094 = vrot.lane.b32.xlu0 %v2717, 72
        %v3095 = vpop.permute.xlu0 %3094
        %3096 = vrot.lane.b32.xlu0 %v2718, 72
        %v3097 = vpop.permute.xlu0 %3096
        %3098 = vrot.lane.b32.xlu0 %v2719, 72
        %v3099 = vpop.permute.xlu0 %3098
        %3100 = vrot.lane.b32.xlu0 %v2720, 72
        %v3101 = vpop.permute.xlu0 %3100
        %3102 = vrot.lane.b32.xlu0 %v2721, 72
        %v3103 = vpop.permute.xlu0 %3102
        %3104 = vrot.lane.b32.xlu0 %v2722, 72
        %v3105 = vpop.permute.xlu0 %3104
        %3106 = vrot.lane.b32.xlu0 %v2723, 72
        %v3107 = vpop.permute.xlu0 %3106
        %3108 = vrot.lane.b32.xlu0 %v2724, 72
        %v3109 = vpop.permute.xlu0 %3108
        %3110 = vrot.lane.b32.xlu0 %v2725, 72
        %v3111 = vpop.permute.xlu0 %3110
        %3112 = vrot.lane.b32.xlu0 %v2726, 72
        %v3113 = vpop.permute.xlu0 %3112
        %3114 = vrot.lane.b32.xlu0 %v2727, 72
        %v3115 = vpop.permute.xlu0 %3114
        %3116 = vrot.lane.b32.xlu0 %v2728, 72
        %v3117 = vpop.permute.xlu0 %3116
        %3118 = vrot.lane.b32.xlu0 %v2729, 72
        %v3119 = vpop.permute.xlu0 %3118
        %3120 = vrot.lane.b32.xlu0 %v2730, 72
        %v3121 = vpop.permute.xlu0 %3120
        %3122 = vrot.lane.b32.xlu0 %v2731, 72
        %v3123 = vpop.permute.xlu0 %3122
        %vm3188 = vcmask 293888
        %v3189 = vsel %vm3188, %v2652, %v2797
        %v3190 = vsel %vm3188, %v2653, %v2799
        %v3191 = vsel %vm3188, %v2654, %v2801
        %v3192 = vsel %vm3188, %v2655, %v2803
        %v3193 = vsel %vm3188, %v2656, %v2805
        %v3194 = vsel %vm3188, %v2657, %v2807
        %v3195 = vsel %vm3188, %v2658, %v2809
        %v3196 = vsel %vm3188, %v2659, %v2811
        %v3197 = vsel %vm3188, %v2660, %v2813
        %v3198 = vsel %vm3188, %v2661, %v2815
        %v3199 = vsel %vm3188, %v2662, %v2817
        %v3200 = vsel %vm3188, %v2663, %v2819
        %v3201 = vsel %vm3188, %v2664, %v2821
        %v3202 = vsel %vm3188, %v2665, %v2823
        %v3203 = vsel %vm3188, %v2666, %v2825
        %v3204 = vsel %vm3188, %v2667, %v2827
        %v3205 = vsel %vm3188, %v2668, %v2829
        %v3206 = vsel %vm3188, %v2669, %v2831
        %v3207 = vsel %vm3188, %v2670, %v2833
        %v3208 = vsel %vm3188, %v2671, %v2835
        %v3209 = vsel %vm3188, %v2672, %v2837
        %v3210 = vsel %vm3188, %v2673, %v2839
        %v3211 = vsel %vm3188, %v2674, %v2841
        %v3212 = vsel %vm3188, %v2675, %v2843
        %v3213 = vsel %vm3188, %v2676, %v2845
        %v3214 = vsel %vm3188, %v2677, %v2847
        %v3215 = vsel %vm3188, %v2678, %v2849
        %v3216 = vsel %vm3188, %v2679, %v2851
        %v3217 = vsel %vm3188, %v2680, %v2853
        %v3218 = vsel %vm3188, %v2681, %v2855
        %v3219 = vsel %vm3188, %v2682, %v2857
        %v3220 = vsel %vm3188, %v2683, %v2859
        %v3221 = vsel %vm3188, %v2684, %v2861
        %v3222 = vsel %vm3188, %v2685, %v2863
        %v3223 = vsel %vm3188, %v2686, %v2865
        %v3224 = vsel %vm3188, %v2687, %v2867
        %v3225 = vsel %vm3188, %v2688, %v2869
        %v3226 = vsel %vm3188, %v2689, %v2871
        %v3227 = vsel %vm3188, %v2690, %v2873
        %v3228 = vsel %vm3188, %v2691, %v2875
        %v3229 = vsel %vm3188, %v2692, %v2877
        %v3230 = vsel %vm3188, %v2693, %v2879
        %v3231 = vsel %vm3188, %v2694, %v2881
        %v3232 = vsel %vm3188, %v2695, %v2883
        %v3233 = vsel %vm3188, %v2696, %v2885
        %v3234 = vsel %vm3188, %v2697, %v2887
        %v3235 = vsel %vm3188, %v2698, %v2889
        %v3236 = vsel %vm3188, %v2699, %v2891
        %v3237 = vsel %vm3188, %v2700, %v2893
        %v3238 = vsel %vm3188, %v2701, %v2895
        %v3239 = vsel %vm3188, %v2702, %v2897
        %v3240 = vsel %vm3188, %v2703, %v2899
        %v3241 = vsel %vm3188, %v2704, %v2901
        %v3242 = vsel %vm3188, %v2705, %v2903
        %v3243 = vsel %vm3188, %v2706, %v2905
        %v3244 = vsel %vm3188, %v2707, %v2907
        %v3245 = vsel %vm3188, %v2708, %v2909
        %v3246 = vsel %vm3188, %v2709, %v2911
        %v3247 = vsel %vm3188, %v2710, %v2913
        %v3248 = vsel %vm3188, %v2711, %v2915
        %v3249 = vsel %vm3188, %v2712, %v2917
        %v3250 = vsel %vm3188, %v2713, %v2919
        %v3251 = vsel %vm3188, %v2714, %v2921
        %v3252 = vsel %vm3188, %v2715, %v2923
        %vm3253 = vcmask 588800
        %v3254 = vsel %vm3253, %v3189, %v2997
        %v3255 = vsel %vm3253, %v3190, %v2999
        %v3256 = vsel %vm3253, %v3191, %v3001
        %v3257 = vsel %vm3253, %v3192, %v3003
        %v3258 = vsel %vm3253, %v3193, %v3005
        %v3259 = vsel %vm3253, %v3194, %v3007
        %v3260 = vsel %vm3253, %v3195, %v3009
        %v3261 = vsel %vm3253, %v3196, %v3011
        %v3262 = vsel %vm3253, %v3197, %v3013
        %v3263 = vsel %vm3253, %v3198, %v3015
        %v3264 = vsel %vm3253, %v3199, %v3017
        %v3265 = vsel %vm3253, %v3200, %v3019
        %v3266 = vsel %vm3253, %v3201, %v3021
        %v3267 = vsel %vm3253, %v3202, %v3023
        %v3268 = vsel %vm3253, %v3203, %v3025
        %v3269 = vsel %vm3253, %v3204, %v3027
        %v3270 = vsel %vm3253, %v3205, %v3029
        %v3271 = vsel %vm3253, %v3206, %v3031
        %v3272 = vsel %vm3253, %v3207, %v3033
        %v3273 = vsel %vm3253, %v3208, %v3035
        %v3274 = vsel %vm3253, %v3209, %v3037
        %v3275 = vsel %vm3253, %v3210, %v3039
        %v3276 = vsel %vm3253, %v3211, %v3041
        %v3277 = vsel %vm3253, %v3212, %v3043
        %v3278 = vsel %vm3253, %v3213, %v3045
        %v3279 = vsel %vm3253, %v3214, %v3047
        %v3280 = vsel %vm3253, %v3215, %v3049
        %v3281 = vsel %vm3253, %v3216, %v3051
        %v3282 = vsel %vm3253, %v3217, %v3053
        %v3283 = vsel %vm3253, %v3218, %v3055
        %v3284 = vsel %vm3253, %v3219, %v3057
        %v3285 = vsel %vm3253, %v3220, %v3059
        %v3286 = vsel %vm3253, %v3221, %v3061
        %v3287 = vsel %vm3253, %v3222, %v3063
        %v3288 = vsel %vm3253, %v3223, %v3065
        %v3289 = vsel %vm3253, %v3224, %v3067
        %v3290 = vsel %vm3253, %v3225, %v3069
        %v3291 = vsel %vm3253, %v3226, %v3071
        %v3292 = vsel %vm3253, %v3227, %v3073
        %v3293 = vsel %vm3253, %v3228, %v3075
        %v3294 = vsel %vm3253, %v3229, %v3077
        %v3295 = vsel %vm3253, %v3230, %v3079
        %v3296 = vsel %vm3253, %v3231, %v3081
        %v3297 = vsel %vm3253, %v3232, %v3083
        %v3298 = vsel %vm3253, %v3233, %v3085
        %v3299 = vsel %vm3253, %v3234, %v3087
        %v3300 = vsel %vm3253, %v3235, %v3089
        %v3301 = vsel %vm3253, %v3236, %v3091
        %v3302 = vsel %vm3253, %v3237, %v3093
        %v3303 = vsel %vm3253, %v3238, %v3095
        %v3304 = vsel %vm3253, %v3239, %v3097
        %v3305 = vsel %vm3253, %v3240, %v3099
        %v3306 = vsel %vm3253, %v3241, %v3101
        %v3307 = vsel %vm3253, %v3242, %v3103
        %v3308 = vsel %vm3253, %v3243, %v3105
        %v3309 = vsel %vm3253, %v3244, %v3107
        %v3310 = vsel %vm3253, %v3245, %v3109
        %v3311 = vsel %vm3253, %v3246, %v3111
        %v3312 = vsel %vm3253, %v3247, %v3113
        %v3313 = vsel %vm3253, %v3248, %v3115
        %v3314 = vsel %vm3253, %v3249, %v3117
        %v3315 = vsel %vm3253, %v3250, %v3119
        %v3316 = vsel %vm3253, %v3251, %v3121
        %v3317 = vsel %vm3253, %v3252, %v3123
        %v3318 = vld [vmem:[%s1] sm:$0xff]
        %v3319 = vld [vmem:[%s1 + $0x8] sm:$0xff]
        %v3320 = vld [vmem:[%s1 + $0x10] sm:$0xff]
        %v3321 = vld [vmem:[%s1 + $0x18] sm:$0xff]
        %v3322 = vld [vmem:[%s1 + $0x20] sm:$0xff]
        %v3323 = vld [vmem:[%s1 + $0x28] sm:$0xff]
        %v3324 = vld [vmem:[%s1 + $0x30] sm:$0xff]
        %v3325 = vld [vmem:[%s1 + $0x38] sm:$0xff]
        %v3326 = vld [vmem:[%s1 + $0x40] sm:$0xff]
        %v3327 = vld [vmem:[%s1 + $0x48] sm:$0xff]
        %v3328 = vld [vmem:[%s1 + $0x50] sm:$0xff]
        %v3329 = vld [vmem:[%s1 + $0x58] sm:$0xff]
        %v3330 = vld [vmem:[%s1 + $0x60] sm:$0xff]
        %v3331 = vld [vmem:[%s1 + $0x68] sm:$0xf]
        %vm3332 = vcmask 883712
        %v3334 = vsel %vm3332, %v3254, 0
        %v3337 = vsel %vm3332, %v3255, 0
        %v3340 = vsel %vm3332, %v3256, 0
        %v3343 = vsel %vm3332, %v3257, 0
        %v3346 = vsel %vm3332, %v3258, 0
        %v3349 = vsel %vm3332, %v3259, 0
        %v3352 = vsel %vm3332, %v3260, 0
        %v3355 = vsel %vm3332, %v3261, 0
        %v3358 = vsel %vm3332, %v3262, 0
        %v3361 = vsel %vm3332, %v3263, 0
        %v3364 = vsel %vm3332, %v3264, 0
        %v3367 = vsel %vm3332, %v3265, 0
        %v3370 = vsel %vm3332, %v3266, 0
        %v3373 = vsel %vm3332, %v3267, 0
        %v3376 = vsel %vm3332, %v3268, 0
        %v3379 = vsel %vm3332, %v3269, 0
        %v3382 = vsel %vm3332, %v3270, 0
        %v3385 = vsel %vm3332, %v3271, 0
        %v3388 = vsel %vm3332, %v3272, 0
        %v3391 = vsel %vm3332, %v3273, 0
        %v3394 = vsel %vm3332, %v3274, 0
        %v3397 = vsel %vm3332, %v3275, 0
        %v3400 = vsel %vm3332, %v3276, 0
        %v3403 = vsel %vm3332, %v3277, 0
        %v3406 = vsel %vm3332, %v3278, 0
        %v3409 = vsel %vm3332, %v3279, 0
        %v3412 = vsel %vm3332, %v3280, 0
        %v3415 = vsel %vm3332, %v3281, 0
        %v3418 = vsel %vm3332, %v3282, 0
        %v3421 = vsel %vm3332, %v3283, 0
        %v3424 = vsel %vm3332, %v3284, 0
        %v3427 = vsel %vm3332, %v3285, 0
        %v3430 = vsel %vm3332, %v3286, 0
        %v3433 = vsel %vm3332, %v3287, 0
        %v3436 = vsel %vm3332, %v3288, 0
        %v3439 = vsel %vm3332, %v3289, 0
        %v3442 = vsel %vm3332, %v3290, 0
        %v3445 = vsel %vm3332, %v3291, 0
        %v3448 = vsel %vm3332, %v3292, 0
        %v3451 = vsel %vm3332, %v3293, 0
        %v3454 = vsel %vm3332, %v3294, 0
        %v3457 = vsel %vm3332, %v3295, 0
        %v3460 = vsel %vm3332, %v3296, 0
        %v3463 = vsel %vm3332, %v3297, 0
        %v3466 = vsel %vm3332, %v3298, 0
        %v3469 = vsel %vm3332, %v3299, 0
        %v3472 = vsel %vm3332, %v3300, 0
        %v3475 = vsel %vm3332, %v3301, 0
        %v3478 = vsel %vm3332, %v3302, 0
        %v3481 = vsel %vm3332, %v3303, 0
        %v3484 = vsel %vm3332, %v3304, 0
        %v3487 = vsel %vm3332, %v3305, 0
        %v3490 = vsel %vm3332, %v3306, 0
        %v3493 = vsel %vm3332, %v3307, 0
        %v3496 = vsel %vm3332, %v3308, 0
        %v3499 = vsel %vm3332, %v3309, 0
        %v3502 = vsel %vm3332, %v3310, 0
        %v3505 = vsel %vm3332, %v3311, 0
        %v3508 = vsel %vm3332, %v3312, 0
        %v3511 = vsel %vm3332, %v3313, 0
        %v3514 = vsel %vm3332, %v3314, 0
        %v3517 = vsel %vm3332, %v3315, 0
        %v3520 = vsel %vm3332, %v3316, 0
        %v3523 = vsel %vm3332, %v3317, 0
        %vm3525 = vcmask 1043456
        %v3527 = vsel %vm3525, %v3331, 0
        %3529 = vmatprep.subr.mxu0 0.0
        %3530 = vmatpush1.msra.mxu0 0.0
        %3531 = vmatprep.subr.mxu0 0.0
        %3532 = vmatpush1.msra.mxu0 0.0
        %3533 = vmatprep.subr.mxu0 0.0
        %3534 = vmatpush1.msra.mxu0 %v3527
        %3535 = vmatprep.subr.mxu0 0.0
        %3536 = vmatpush1.msra.mxu0 %v3330
        %3537 = vmatprep.subr.mxu0 0.0
        %3538 = vmatpush1.msra.mxu0 %v3329
        %3539 = vmatprep.subr.mxu0 0.0
        %3540 = vmatpush1.msra.mxu0 %v3328
        %3541 = vmatprep.subr.mxu0 0.0
        %3542 = vmatpush1.msra.mxu0 %v3327
        %3543 = vmatprep.subr.mxu0 0.0
        %3544 = vmatpush1.msra.mxu0 %v3326
        %3545 = vmatprep.subr.mxu0 0.0
        %3546 = vmatpush1.msra.mxu0 %v3325
        %3547 = vmatprep.subr.mxu0 0.0
        %3548 = vmatpush1.msra.mxu0 %v3324
        %3549 = vmatprep.subr.mxu0 0.0
        %3550 = vmatpush1.msra.mxu0 %v3323
        %3551 = vmatprep.subr.mxu0 0.0
        %3552 = vmatpush1.msra.mxu0 %v3322
        %3553 = vmatprep.subr.mxu0 0.0
        %3554 = vmatpush1.msra.mxu0 %v3321
        %3555 = vmatprep.subr.mxu0 0.0
        %3556 = vmatpush1.msra.mxu0 %v3320
        %3557 = vmatprep.subr.mxu0 0.0
        %3558 = vmatpush1.msra.mxu0 %v3319
        %3559 = vmatprep.subr.mxu0 0.0
        %3560 = vmatpush1.msra.mxu0 %v3318
        %3561 = vmatprep.subr.mxu0 0.0
        %3562 = vmatpush2.msra.mxu0 0.0
        %3563 = vmatprep.subr.mxu0 0.0
        %3564 = vmatpush2.msra.mxu0 0.0
        %3565 = vmatprep.subr.mxu0 0.0
        %3566 = vmatpush2.msra.mxu0 0.0
        %3567 = vmatprep.subr.mxu0 0.0
        %3568 = vmatpush2.msra.mxu0 0.0
        %3569 = vmatprep.subr.mxu0 0.0
        %3570 = vmatpush2.msra.mxu0 0.0
        %3571 = vmatprep.subr.mxu0 0.0
        %3572 = vmatpush2.msra.mxu0 0.0
        %3573 = vmatprep.subr.mxu0 0.0
        %3574 = vmatpush2.msra.mxu0 0.0
        %3575 = vmatprep.subr.mxu0 0.0
        %3576 = vmatpush2.msra.mxu0 0.0
        %3577 = vmatprep.subr.mxu0 0.0
        %3578 = vmatpush2.msra.mxu0 0.0
        %3579 = vmatprep.subr.mxu0 0.0
        %3580 = vmatpush2.msra.mxu0 0.0
        %3581 = vmatprep.subr.mxu0 0.0
        %3582 = vmatpush2.msra.mxu0 0.0
        %3583 = vmatprep.subr.mxu0 0.0
        %3584 = vmatpush2.msra.mxu0 0.0
        %3585 = vmatprep.subr.mxu0 0.0
        %3586 = vmatpush2.msra.mxu0 0.0
        %3587 = vmatprep.subr.mxu0 0.0
        %3588 = vmatpush2.msra.mxu0 0.0
        %3589 = vmatprep.subr.mxu0 0.0
        %3590 = vmatpush2.msra.mxu0 0.0
        %3591 = vmatprep.subr.mxu0 0.0
        %3592 = vmatpush2.msra.mxu0 0.0
        %3593 = vmatprep.mubr.f32.mxu0 0.0
        %3594 = vmatmul.mubr.f32.gmra.mxu0 %v3334
        %v3595 = vpop.f32.mrf.mxu0
        %v3596 = vadd.f32 0.0, %v3595
        %v3597 = vpop.f32.mrf.mxu0
        %3598 = vmatprep.mubr.f32.mxu0 0.0
        %3599 = vmatmul.mubr.f32.gmra.mxu0 %v3337
        %v3600 = vpop.f32.mrf.mxu0
        %v3601 = vadd.f32 0.0, %v3600
        %v3602 = vpop.f32.mrf.mxu0
        %3603 = vmatprep.mubr.f32.mxu0 0.0
        %3604 = vmatmul.mubr.f32.gmra.mxu0 %v3340
        %v3605 = vpop.f32.mrf.mxu0
        %v3606 = vadd.f32 0.0, %v3605
        %v3607 = vpop.f32.mrf.mxu0
        %3608 = vmatprep.mubr.f32.mxu0 0.0
        %3609 = vmatmul.mubr.f32.gmra.mxu0 %v3343
        %v3610 = vpop.f32.mrf.mxu0
        %v3611 = vadd.f32 0.0, %v3610
        %v3612 = vpop.f32.mrf.mxu0
        %3613 = vmatprep.mubr.f32.mxu0 0.0
        %3614 = vmatmul.mubr.f32.gmra.mxu0 %v3346
        %v3615 = vpop.f32.mrf.mxu0
        %v3616 = vadd.f32 0.0, %v3615
        %v3617 = vpop.f32.mrf.mxu0
        %3618 = vmatprep.mubr.f32.mxu0 0.0
        %3619 = vmatmul.mubr.f32.gmra.mxu0 %v3349
        %v3620 = vpop.f32.mrf.mxu0
        %v3621 = vadd.f32 0.0, %v3620
        %v3622 = vpop.f32.mrf.mxu0
        %3623 = vmatprep.mubr.f32.mxu0 0.0
        %3624 = vmatmul.mubr.f32.gmra.mxu0 %v3352
        %v3625 = vpop.f32.mrf.mxu0
        %v3626 = vadd.f32 0.0, %v3625
        %v3627 = vpop.f32.mrf.mxu0
        %3628 = vmatprep.mubr.f32.mxu0 0.0
        %3629 = vmatmul.mubr.f32.gmra.mxu0 %v3355
        %v3630 = vpop.f32.mrf.mxu0
        %v3631 = vadd.f32 0.0, %v3630
        %v3632 = vpop.f32.mrf.mxu0
        %3633 = vmatprep.mubr.f32.mxu0 0.0
        %3634 = vmatmul.mubr.f32.gmra.mxu0 %v3358
        %v3635 = vpop.f32.mrf.mxu0
        %v3636 = vadd.f32 0.0, %v3635
        %v3637 = vpop.f32.mrf.mxu0
        %3638 = vmatprep.mubr.f32.mxu0 0.0
        %3639 = vmatmul.mubr.f32.gmra.mxu0 %v3361
        %v3640 = vpop.f32.mrf.mxu0
        %v3641 = vadd.f32 0.0, %v3640
        %v3642 = vpop.f32.mrf.mxu0
        %3643 = vmatprep.mubr.f32.mxu0 0.0
        %3644 = vmatmul.mubr.f32.gmra.mxu0 %v3364
        %v3645 = vpop.f32.mrf.mxu0
        %v3646 = vadd.f32 0.0, %v3645
        %v3647 = vpop.f32.mrf.mxu0
        %3648 = vmatprep.mubr.f32.mxu0 0.0
        %3649 = vmatmul.mubr.f32.gmra.mxu0 %v3367
        %v3650 = vpop.f32.mrf.mxu0
        %v3651 = vadd.f32 0.0, %v3650
        %v3652 = vpop.f32.mrf.mxu0
        %3653 = vmatprep.mubr.f32.mxu0 0.0
        %3654 = vmatmul.mubr.f32.gmra.mxu0 %v3370
        %v3655 = vpop.f32.mrf.mxu0
        %v3656 = vadd.f32 0.0, %v3655
        %v3657 = vpop.f32.mrf.mxu0
        %3658 = vmatprep.mubr.f32.mxu0 0.0
        %3659 = vmatmul.mubr.f32.gmra.mxu0 %v3373
        %v3660 = vpop.f32.mrf.mxu0
        %v3661 = vadd.f32 0.0, %v3660
        %v3662 = vpop.f32.mrf.mxu0
        %3663 = vmatprep.mubr.f32.mxu0 0.0
        %3664 = vmatmul.mubr.f32.gmra.mxu0 %v3376
        %v3665 = vpop.f32.mrf.mxu0
        %v3666 = vadd.f32 0.0, %v3665
        %v3667 = vpop.f32.mrf.mxu0
        %3668 = vmatprep.mubr.f32.mxu0 0.0
        %3669 = vmatmul.mubr.f32.gmra.mxu0 %v3379
        %v3670 = vpop.f32.mrf.mxu0
        %v3671 = vadd.f32 0.0, %v3670
        %v3672 = vpop.f32.mrf.mxu0
        %3673 = vmatprep.mubr.f32.mxu0 0.0
        %3674 = vmatmul.mubr.f32.gmra.mxu0 %v3382
        %v3675 = vpop.f32.mrf.mxu0
        %v3676 = vadd.f32 0.0, %v3675
        %v3677 = vpop.f32.mrf.mxu0
        %3678 = vmatprep.mubr.f32.mxu0 0.0
        %3679 = vmatmul.mubr.f32.gmra.mxu0 %v3385
        %v3680 = vpop.f32.mrf.mxu0
        %v3681 = vadd.f32 0.0, %v3680
        %v3682 = vpop.f32.mrf.mxu0
        %3683 = vmatprep.mubr.f32.mxu0 0.0
        %3684 = vmatmul.mubr.f32.gmra.mxu0 %v3388
        %v3685 = vpop.f32.mrf.mxu0
        %v3686 = vadd.f32 0.0, %v3685
        %v3687 = vpop.f32.mrf.mxu0
        %3688 = vmatprep.mubr.f32.mxu0 0.0
        %3689 = vmatmul.mubr.f32.gmra.mxu0 %v3391
        %v3690 = vpop.f32.mrf.mxu0
        %v3691 = vadd.f32 0.0, %v3690
        %v3692 = vpop.f32.mrf.mxu0
        %3693 = vmatprep.mubr.f32.mxu0 0.0
        %3694 = vmatmul.mubr.f32.gmra.mxu0 %v3394
        %v3695 = vpop.f32.mrf.mxu0
        %v3696 = vadd.f32 0.0, %v3695
        %v3697 = vpop.f32.mrf.mxu0
        %3698 = vmatprep.mubr.f32.mxu0 0.0
        %3699 = vmatmul.mubr.f32.gmra.mxu0 %v3397
        %v3700 = vpop.f32.mrf.mxu0
        %v3701 = vadd.f32 0.0, %v3700
        %v3702 = vpop.f32.mrf.mxu0
        %3703 = vmatprep.mubr.f32.mxu0 0.0
        %3704 = vmatmul.mubr.f32.gmra.mxu0 %v3400
        %v3705 = vpop.f32.mrf.mxu0
        %v3706 = vadd.f32 0.0, %v3705
        %v3707 = vpop.f32.mrf.mxu0
        %3708 = vmatprep.mubr.f32.mxu0 0.0
        %3709 = vmatmul.mubr.f32.gmra.mxu0 %v3403
        %v3710 = vpop.f32.mrf.mxu0
        %v3711 = vadd.f32 0.0, %v3710
        %v3712 = vpop.f32.mrf.mxu0
        %3713 = vmatprep.mubr.f32.mxu0 0.0
        %3714 = vmatmul.mubr.f32.gmra.mxu0 %v3406
        %v3715 = vpop.f32.mrf.mxu0
        %v3716 = vadd.f32 0.0, %v3715
        %v3717 = vpop.f32.mrf.mxu0
        %3718 = vmatprep.mubr.f32.mxu0 0.0
        %3719 = vmatmul.mubr.f32.gmra.mxu0 %v3409
        %v3720 = vpop.f32.mrf.mxu0
        %v3721 = vadd.f32 0.0, %v3720
        %v3722 = vpop.f32.mrf.mxu0
        %3723 = vmatprep.mubr.f32.mxu0 0.0
        %3724 = vmatmul.mubr.f32.gmra.mxu0 %v3412
        %v3725 = vpop.f32.mrf.mxu0
        %v3726 = vadd.f32 0.0, %v3725
        %v3727 = vpop.f32.mrf.mxu0
        %3728 = vmatprep.mubr.f32.mxu0 0.0
        %3729 = vmatmul.mubr.f32.gmra.mxu0 %v3415
        %v3730 = vpop.f32.mrf.mxu0
        %v3731 = vadd.f32 0.0, %v3730
        %v3732 = vpop.f32.mrf.mxu0
        %3733 = vmatprep.mubr.f32.mxu0 0.0
        %3734 = vmatmul.mubr.f32.gmra.mxu0 %v3418
        %v3735 = vpop.f32.mrf.mxu0
        %v3736 = vadd.f32 0.0, %v3735
        %v3737 = vpop.f32.mrf.mxu0
        %3738 = vmatprep.mubr.f32.mxu0 0.0
        %3739 = vmatmul.mubr.f32.gmra.mxu0 %v3421
        %v3740 = vpop.f32.mrf.mxu0
        %v3741 = vadd.f32 0.0, %v3740
        %v3742 = vpop.f32.mrf.mxu0
        %3743 = vmatprep.mubr.f32.mxu0 0.0
        %3744 = vmatmul.mubr.f32.gmra.mxu0 %v3424
        %v3745 = vpop.f32.mrf.mxu0
        %v3746 = vadd.f32 0.0, %v3745
        %v3747 = vpop.f32.mrf.mxu0
        %3748 = vmatprep.mubr.f32.mxu0 0.0
        %3749 = vmatmul.mubr.f32.gmra.mxu0 %v3427
        %v3750 = vpop.f32.mrf.mxu0
        %v3751 = vadd.f32 0.0, %v3750
        %v3752 = vpop.f32.mrf.mxu0
        %3753 = vmatprep.mubr.f32.mxu0 0.0
        %3754 = vmatmul.mubr.f32.gmra.mxu0 %v3430
        %v3755 = vpop.f32.mrf.mxu0
        %v3756 = vadd.f32 0.0, %v3755
        %v3757 = vpop.f32.mrf.mxu0
        %3758 = vmatprep.mubr.f32.mxu0 0.0
        %3759 = vmatmul.mubr.f32.gmra.mxu0 %v3433
        %v3760 = vpop.f32.mrf.mxu0
        %v3761 = vadd.f32 0.0, %v3760
        %v3762 = vpop.f32.mrf.mxu0
        %3763 = vmatprep.mubr.f32.mxu0 0.0
        %3764 = vmatmul.mubr.f32.gmra.mxu0 %v3436
        %v3765 = vpop.f32.mrf.mxu0
        %v3766 = vadd.f32 0.0, %v3765
        %v3767 = vpop.f32.mrf.mxu0
        %3768 = vmatprep.mubr.f32.mxu0 0.0
        %3769 = vmatmul.mubr.f32.gmra.mxu0 %v3439
        %v3770 = vpop.f32.mrf.mxu0
        %v3771 = vadd.f32 0.0, %v3770
        %v3772 = vpop.f32.mrf.mxu0
        %3773 = vmatprep.mubr.f32.mxu0 0.0
        %3774 = vmatmul.mubr.f32.gmra.mxu0 %v3442
        %v3775 = vpop.f32.mrf.mxu0
        %v3776 = vadd.f32 0.0, %v3775
        %v3777 = vpop.f32.mrf.mxu0
        %3778 = vmatprep.mubr.f32.mxu0 0.0
        %3779 = vmatmul.mubr.f32.gmra.mxu0 %v3445
        %v3780 = vpop.f32.mrf.mxu0
        %v3781 = vadd.f32 0.0, %v3780
        %v3782 = vpop.f32.mrf.mxu0
        %3783 = vmatprep.mubr.f32.mxu0 0.0
        %3784 = vmatmul.mubr.f32.gmra.mxu0 %v3448
        %v3785 = vpop.f32.mrf.mxu0
        %v3786 = vadd.f32 0.0, %v3785
        %v3787 = vpop.f32.mrf.mxu0
        %3788 = vmatprep.mubr.f32.mxu0 0.0
        %3789 = vmatmul.mubr.f32.gmra.mxu0 %v3451
        %v3790 = vpop.f32.mrf.mxu0
        %v3791 = vadd.f32 0.0, %v3790
        %v3792 = vpop.f32.mrf.mxu0
        %3793 = vmatprep.mubr.f32.mxu0 0.0
        %3794 = vmatmul.mubr.f32.gmra.mxu0 %v3454
        %v3795 = vpop.f32.mrf.mxu0
        %v3796 = vadd.f32 0.0, %v3795
        %v3797 = vpop.f32.mrf.mxu0
        %3798 = vmatprep.mubr.f32.mxu0 0.0
        %3799 = vmatmul.mubr.f32.gmra.mxu0 %v3457
        %v3800 = vpop.f32.mrf.mxu0
        %v3801 = vadd.f32 0.0, %v3800
        %v3802 = vpop.f32.mrf.mxu0
        %3803 = vmatprep.mubr.f32.mxu0 0.0
        %3804 = vmatmul.mubr.f32.gmra.mxu0 %v3460
        %v3805 = vpop.f32.mrf.mxu0
        %v3806 = vadd.f32 0.0, %v3805
        %v3807 = vpop.f32.mrf.mxu0
        %3808 = vmatprep.mubr.f32.mxu0 0.0
        %3809 = vmatmul.mubr.f32.gmra.mxu0 %v3463
        %v3810 = vpop.f32.mrf.mxu0
        %v3811 = vadd.f32 0.0, %v3810
        %v3812 = vpop.f32.mrf.mxu0
        %3813 = vmatprep.mubr.f32.mxu0 0.0
        %3814 = vmatmul.mubr.f32.gmra.mxu0 %v3466
        %v3815 = vpop.f32.mrf.mxu0
        %v3816 = vadd.f32 0.0, %v3815
        %v3817 = vpop.f32.mrf.mxu0
        %3818 = vmatprep.mubr.f32.mxu0 0.0
        %3819 = vmatmul.mubr.f32.gmra.mxu0 %v3469
        %v3820 = vpop.f32.mrf.mxu0
        %v3821 = vadd.f32 0.0, %v3820
        %v3822 = vpop.f32.mrf.mxu0
        %3823 = vmatprep.mubr.f32.mxu0 0.0
        %3824 = vmatmul.mubr.f32.gmra.mxu0 %v3472
        %v3825 = vpop.f32.mrf.mxu0
        %v3826 = vadd.f32 0.0, %v3825
        %v3827 = vpop.f32.mrf.mxu0
        %3828 = vmatprep.mubr.f32.mxu0 0.0
        %3829 = vmatmul.mubr.f32.gmra.mxu0 %v3475
        %v3830 = vpop.f32.mrf.mxu0
        %v3831 = vadd.f32 0.0, %v3830
        %v3832 = vpop.f32.mrf.mxu0
        %3833 = vmatprep.mubr.f32.mxu0 0.0
        %3834 = vmatmul.mubr.f32.gmra.mxu0 %v3478
        %v3835 = vpop.f32.mrf.mxu0
        %v3836 = vadd.f32 0.0, %v3835
        %v3837 = vpop.f32.mrf.mxu0
        %3838 = vmatprep.mubr.f32.mxu0 0.0
        %3839 = vmatmul.mubr.f32.gmra.mxu0 %v3481
        %v3840 = vpop.f32.mrf.mxu0
        %v3841 = vadd.f32 0.0, %v3840
        %v3842 = vpop.f32.mrf.mxu0
        %3843 = vmatprep.mubr.f32.mxu0 0.0
        %3844 = vmatmul.mubr.f32.gmra.mxu0 %v3484
        %v3845 = vpop.f32.mrf.mxu0
        %v3846 = vadd.f32 0.0, %v3845
        %v3847 = vpop.f32.mrf.mxu0
        %3848 = vmatprep.mubr.f32.mxu0 0.0
        %3849 = vmatmul.mubr.f32.gmra.mxu0 %v3487
        %v3850 = vpop.f32.mrf.mxu0
        %v3851 = vadd.f32 0.0, %v3850
        %v3852 = vpop.f32.mrf.mxu0
        %3853 = vmatprep.mubr.f32.mxu0 0.0
        %3854 = vmatmul.mubr.f32.gmra.mxu0 %v3490
        %v3855 = vpop.f32.mrf.mxu0
        %v3856 = vadd.f32 0.0, %v3855
        %v3857 = vpop.f32.mrf.mxu0
        %3858 = vmatprep.mubr.f32.mxu0 0.0
        %3859 = vmatmul.mubr.f32.gmra.mxu0 %v3493
        %v3860 = vpop.f32.mrf.mxu0
        %v3861 = vadd.f32 0.0, %v3860
        %v3862 = vpop.f32.mrf.mxu0
        %3863 = vmatprep.mubr.f32.mxu0 0.0
        %3864 = vmatmul.mubr.f32.gmra.mxu0 %v3496
        %v3865 = vpop.f32.mrf.mxu0
        %v3866 = vadd.f32 0.0, %v3865
        %v3867 = vpop.f32.mrf.mxu0
        %3868 = vmatprep.mubr.f32.mxu0 0.0
        %3869 = vmatmul.mubr.f32.gmra.mxu0 %v3499
        %v3870 = vpop.f32.mrf.mxu0
        %v3871 = vadd.f32 0.0, %v3870
        %v3872 = vpop.f32.mrf.mxu0
        %3873 = vmatprep.mubr.f32.mxu0 0.0
        %3874 = vmatmul.mubr.f32.gmra.mxu0 %v3502
        %v3875 = vpop.f32.mrf.mxu0
        %v3876 = vadd.f32 0.0, %v3875
        %v3877 = vpop.f32.mrf.mxu0
        %3878 = vmatprep.mubr.f32.mxu0 0.0
        %3879 = vmatmul.mubr.f32.gmra.mxu0 %v3505
        %v3880 = vpop.f32.mrf.mxu0
        %v3881 = vadd.f32 0.0, %v3880
        %v3882 = vpop.f32.mrf.mxu0
        %3883 = vmatprep.mubr.f32.mxu0 0.0
        %3884 = vmatmul.mubr.f32.gmra.mxu0 %v3508
        %v3885 = vpop.f32.mrf.mxu0
        %v3886 = vadd.f32 0.0, %v3885
        %v3887 = vpop.f32.mrf.mxu0
        %3888 = vmatprep.mubr.f32.mxu0 0.0
        %3889 = vmatmul.mubr.f32.gmra.mxu0 %v3511
        %v3890 = vpop.f32.mrf.mxu0
        %v3891 = vadd.f32 0.0, %v3890
        %v3892 = vpop.f32.mrf.mxu0
        %3893 = vmatprep.mubr.f32.mxu0 0.0
        %3894 = vmatmul.mubr.f32.gmra.mxu0 %v3514
        %v3895 = vpop.f32.mrf.mxu0
        %v3896 = vadd.f32 0.0, %v3895
        %v3897 = vpop.f32.mrf.mxu0
        %3898 = vmatprep.mubr.f32.mxu0 0.0
        %3899 = vmatmul.mubr.f32.gmra.mxu0 %v3517
        %v3900 = vpop.f32.mrf.mxu0
        %v3901 = vadd.f32 0.0, %v3900
        %v3902 = vpop.f32.mrf.mxu0
        %3903 = vmatprep.mubr.f32.mxu0 0.0
        %3904 = vmatmul.mubr.f32.gmra.mxu0 %v3520
        %v3905 = vpop.f32.mrf.mxu0
        %v3906 = vadd.f32 0.0, %v3905
        %v3907 = vpop.f32.mrf.mxu0
        %3908 = vmatprep.mubr.f32.mxu0 0.0
        %3909 = vmatmul.mubr.f32.gmra.mxu0 %v3523
        %v3910 = vpop.f32.mrf.mxu0
        %v3911 = vadd.f32 0.0, %v3910
        %v3912 = vpop.f32.mrf.mxu0
        %3913 = vdwg.mxu0
        %v3914 = vld [vmem:[%s2] sm:$0x1]
        %v3916 = vlaneseq
        %v3917 = vshrl.u32 %v3916, 7
        %v3918 = vsub.s32 0, %v3917
        %v3919 = vrot.slane %v3914, %v3918
        %v3921 = vmul.f32 %v3596, %v3919
        %v3922 = vmul.f32 %v3601, %v3919
        %v3923 = vmul.f32 %v3606, %v3919
        %v3924 = vmul.f32 %v3611, %v3919
        %v3925 = vmul.f32 %v3616, %v3919
        %v3926 = vmul.f32 %v3621, %v3919
        %v3927 = vmul.f32 %v3626, %v3919
        %v3928 = vmul.f32 %v3631, %v3919
        %v3929 = vmul.f32 %v3636, %v3919
        %v3930 = vmul.f32 %v3641, %v3919
        %v3931 = vmul.f32 %v3646, %v3919
        %v3932 = vmul.f32 %v3651, %v3919
        %v3933 = vmul.f32 %v3656, %v3919
        %v3934 = vmul.f32 %v3661, %v3919
        %v3935 = vmul.f32 %v3666, %v3919
        %v3936 = vmul.f32 %v3671, %v3919
        %v3937 = vmul.f32 %v3676, %v3919
        %v3938 = vmul.f32 %v3681, %v3919
        %v3939 = vmul.f32 %v3686, %v3919
        %v3940 = vmul.f32 %v3691, %v3919
        %v3941 = vmul.f32 %v3696, %v3919
        %v3942 = vmul.f32 %v3701, %v3919
        %v3943 = vmul.f32 %v3706, %v3919
        %v3944 = vmul.f32 %v3711, %v3919
        %v3945 = vmul.f32 %v3716, %v3919
        %v3946 = vmul.f32 %v3721, %v3919
        %v3947 = vmul.f32 %v3726, %v3919
        %v3948 = vmul.f32 %v3731, %v3919
        %v3949 = vmul.f32 %v3736, %v3919
        %v3950 = vmul.f32 %v3741, %v3919
        %v3951 = vmul.f32 %v3746, %v3919
        %v3952 = vmul.f32 %v3751, %v3919
        %v3953 = vmul.f32 %v3756, %v3919
        %v3954 = vmul.f32 %v3761, %v3919
        %v3955 = vmul.f32 %v3766, %v3919
        %v3956 = vmul.f32 %v3771, %v3919
        %v3957 = vmul.f32 %v3776, %v3919
        %v3958 = vmul.f32 %v3781, %v3919
        %v3959 = vmul.f32 %v3786, %v3919
        %v3960 = vmul.f32 %v3791, %v3919
        %v3961 = vmul.f32 %v3796, %v3919
        %v3962 = vmul.f32 %v3801, %v3919
        %v3963 = vmul.f32 %v3806, %v3919
        %v3964 = vmul.f32 %v3811, %v3919
        %v3965 = vmul.f32 %v3816, %v3919
        %v3966 = vmul.f32 %v3821, %v3919
        %v3967 = vmul.f32 %v3826, %v3919
        %v3968 = vmul.f32 %v3831, %v3919
        %v3969 = vmul.f32 %v3836, %v3919
        %v3970 = vmul.f32 %v3841, %v3919
        %v3971 = vmul.f32 %v3846, %v3919
        %v3972 = vmul.f32 %v3851, %v3919
        %v3973 = vmul.f32 %v3856, %v3919
        %v3974 = vmul.f32 %v3861, %v3919
        %v3975 = vmul.f32 %v3866, %v3919
        %v3976 = vmul.f32 %v3871, %v3919
        %v3977 = vmul.f32 %v3876, %v3919
        %v3978 = vmul.f32 %v3881, %v3919
        %v3979 = vmul.f32 %v3886, %v3919
        %v3980 = vmul.f32 %v3891, %v3919
        %v3981 = vmul.f32 %v3896, %v3919
        %v3982 = vmul.f32 %v3901, %v3919
        %v3983 = vmul.f32 %v3906, %v3919
        %v3984 = vmul.f32 %v3911, %v3919
        %v3985 = vld [vmem:[%s3] sm:$0x1]
        %v3987 = vlaneseq
        %v3988 = vshrl.u32 %v3987, 7
        %v3989 = vsub.s32 0, %v3988
        %v3990 = vrot.slane %v3985, %v3989
        %v3992 = vadd.f32 %v3921, %v3990
        %v3993 = vadd.f32 %v3922, %v3990
        %v3994 = vadd.f32 %v3923, %v3990
        %v3995 = vadd.f32 %v3924, %v3990
        %v3996 = vadd.f32 %v3925, %v3990
        %v3997 = vadd.f32 %v3926, %v3990
        %v3998 = vadd.f32 %v3927, %v3990
        %v3999 = vadd.f32 %v3928, %v3990
        %v4000 = vadd.f32 %v3929, %v3990
        %v4001 = vadd.f32 %v3930, %v3990
        %v4002 = vadd.f32 %v3931, %v3990
        %v4003 = vadd.f32 %v3932, %v3990
        %v4004 = vadd.f32 %v3933, %v3990
        %v4005 = vadd.f32 %v3934, %v3990
        %v4006 = vadd.f32 %v3935, %v3990
        %v4007 = vadd.f32 %v3936, %v3990
        %v4008 = vadd.f32 %v3937, %v3990
        %v4009 = vadd.f32 %v3938, %v3990
        %v4010 = vadd.f32 %v3939, %v3990
        %v4011 = vadd.f32 %v3940, %v3990
        %v4012 = vadd.f32 %v3941, %v3990
        %v4013 = vadd.f32 %v3942, %v3990
        %v4014 = vadd.f32 %v3943, %v3990
        %v4015 = vadd.f32 %v3944, %v3990
        %v4016 = vadd.f32 %v3945, %v3990
        %v4017 = vadd.f32 %v3946, %v3990
        %v4018 = vadd.f32 %v3947, %v3990
        %v4019 = vadd.f32 %v3948, %v3990
        %v4020 = vadd.f32 %v3949, %v3990
        %v4021 = vadd.f32 %v3950, %v3990
        %v4022 = vadd.f32 %v3951, %v3990
        %v4023 = vadd.f32 %v3952, %v3990
        %v4024 = vadd.f32 %v3953, %v3990
        %v4025 = vadd.f32 %v3954, %v3990
        %v4026 = vadd.f32 %v3955, %v3990
        %v4027 = vadd.f32 %v3956, %v3990
        %v4028 = vadd.f32 %v3957, %v3990
        %v4029 = vadd.f32 %v3958, %v3990
        %v4030 = vadd.f32 %v3959, %v3990
        %v4031 = vadd.f32 %v3960, %v3990
        %v4032 = vadd.f32 %v3961, %v3990
        %v4033 = vadd.f32 %v3962, %v3990
        %v4034 = vadd.f32 %v3963, %v3990
        %v4035 = vadd.f32 %v3964, %v3990
        %v4036 = vadd.f32 %v3965, %v3990
        %v4037 = vadd.f32 %v3966, %v3990
        %v4038 = vadd.f32 %v3967, %v3990
        %v4039 = vadd.f32 %v3968, %v3990
        %v4040 = vadd.f32 %v3969, %v3990
        %v4041 = vadd.f32 %v3970, %v3990
        %v4042 = vadd.f32 %v3971, %v3990
        %v4043 = vadd.f32 %v3972, %v3990
        %v4044 = vadd.f32 %v3973, %v3990
        %v4045 = vadd.f32 %v3974, %v3990
        %v4046 = vadd.f32 %v3975, %v3990
        %v4047 = vadd.f32 %v3976, %v3990
        %v4048 = vadd.f32 %v3977, %v3990
        %v4049 = vadd.f32 %v3978, %v3990
        %v4050 = vadd.f32 %v3979, %v3990
        %v4051 = vadd.f32 %v3980, %v3990
        %v4052 = vadd.f32 %v3981, %v3990
        %v4053 = vadd.f32 %v3982, %v3990
        %v4054 = vadd.f32 %v3983, %v3990
        %v4055 = vadd.f32 %v3984, %v3990
        %v4056 = vmax.f32 %v3992, 0.0
        %v4057 = vmax.f32 %v3993, 0.0
        %v4058 = vmax.f32 %v3994, 0.0
        %v4059 = vmax.f32 %v3995, 0.0
        %v4060 = vmax.f32 %v3996, 0.0
        %v4061 = vmax.f32 %v3997, 0.0
        %v4062 = vmax.f32 %v3998, 0.0
        %v4063 = vmax.f32 %v3999, 0.0
        %v4064 = vmax.f32 %v4000, 0.0
        %v4065 = vmax.f32 %v4001, 0.0
        %v4066 = vmax.f32 %v4002, 0.0
        %v4067 = vmax.f32 %v4003, 0.0
        %v4068 = vmax.f32 %v4004, 0.0
        %v4069 = vmax.f32 %v4005, 0.0
        %v4070 = vmax.f32 %v4006, 0.0
        %v4071 = vmax.f32 %v4007, 0.0
        %v4072 = vmax.f32 %v4008, 0.0
        %v4073 = vmax.f32 %v4009, 0.0
        %v4074 = vmax.f32 %v4010, 0.0
        %v4075 = vmax.f32 %v4011, 0.0
        %v4076 = vmax.f32 %v4012, 0.0
        %v4077 = vmax.f32 %v4013, 0.0
        %v4078 = vmax.f32 %v4014, 0.0
        %v4079 = vmax.f32 %v4015, 0.0
        %v4080 = vmax.f32 %v4016, 0.0
        %v4081 = vmax.f32 %v4017, 0.0
        %v4082 = vmax.f32 %v4018, 0.0
        %v4083 = vmax.f32 %v4019, 0.0
        %v4084 = vmax.f32 %v4020, 0.0
        %v4085 = vmax.f32 %v4021, 0.0
        %v4086 = vmax.f32 %v4022, 0.0
        %v4087 = vmax.f32 %v4023, 0.0
        %v4088 = vmax.f32 %v4024, 0.0
        %v4089 = vmax.f32 %v4025, 0.0
        %v4090 = vmax.f32 %v4026, 0.0
        %v4091 = vmax.f32 %v4027, 0.0
        %v4092 = vmax.f32 %v4028, 0.0
        %v4093 = vmax.f32 %v4029, 0.0
        %v4094 = vmax.f32 %v4030, 0.0
        %v4095 = vmax.f32 %v4031, 0.0
        %v4096 = vmax.f32 %v4032, 0.0
        %v4097 = vmax.f32 %v4033, 0.0
        %v4098 = vmax.f32 %v4034, 0.0
        %v4099 = vmax.f32 %v4035, 0.0
        %v4100 = vmax.f32 %v4036, 0.0
        %v4101 = vmax.f32 %v4037, 0.0
        %v4102 = vmax.f32 %v4038, 0.0
        %v4103 = vmax.f32 %v4039, 0.0
        %v4104 = vmax.f32 %v4040, 0.0
        %v4105 = vmax.f32 %v4041, 0.0
        %v4106 = vmax.f32 %v4042, 0.0
        %v4107 = vmax.f32 %v4043, 0.0
        %v4108 = vmax.f32 %v4044, 0.0
        %v4109 = vmax.f32 %v4045, 0.0
        %v4110 = vmax.f32 %v4046, 0.0
        %v4111 = vmax.f32 %v4047, 0.0
        %v4112 = vmax.f32 %v4048, 0.0
        %v4113 = vmax.f32 %v4049, 0.0
        %v4114 = vmax.f32 %v4050, 0.0
        %v4115 = vmax.f32 %v4051, 0.0
        %v4116 = vmax.f32 %v4052, 0.0
        %v4117 = vmax.f32 %v4053, 0.0
        %v4118 = vmax.f32 %v4054, 0.0
        %v4119 = vmax.f32 %v4055, 0.0
        %4120 = vst [vmem:[%s190] sm:$0xff] %v4056
        %4121 = vst [vmem:[%s190 + $0x8] sm:$0xff] %v4057
        %4122 = vst [vmem:[%s190 + $0x10] sm:$0xff] %v4058
        %4123 = vst [vmem:[%s190 + $0x18] sm:$0xff] %v4059
        %4124 = vst [vmem:[%s190 + $0x20] sm:$0xff] %v4060
        %4125 = vst [vmem:[%s190 + $0x28] sm:$0xff] %v4061
        %4126 = vst [vmem:[%s190 + $0x30] sm:$0xff] %v4062
        %4127 = vst [vmem:[%s190 + $0x38] sm:$0xff] %v4063
        %4128 = vst [vmem:[%s190 + $0x40] sm:$0xff] %v4064
        %4129 = vst [vmem:[%s190 + $0x48] sm:$0xff] %v4065
        %4130 = vst [vmem:[%s190 + $0x50] sm:$0xff] %v4066
        %4131 = vst [vmem:[%s190 + $0x58] sm:$0xff] %v4067
        %4132 = vst [vmem:[%s190 + $0x60] sm:$0xff] %v4068
        %4133 = vst [vmem:[%s190 + $0x68] sm:$0xff] %v4069
        %4134 = vst [vmem:[%s190 + $0x70] sm:$0xff] %v4070
        %4135 = vst [vmem:[%s190 + $0x78] sm:$0xff] %v4071
        %4136 = vst [vmem:[%s190 + $0x80] sm:$0xff] %v4072
        %4137 = vst [vmem:[%s190 + $0x88] sm:$0xff] %v4073
        %4138 = vst [vmem:[%s190 + $0x90] sm:$0xff] %v4074
        %4139 = vst [vmem:[%s190 + $0x98] sm:$0xff] %v4075
        %4140 = vst [vmem:[%s190 + $0xa0] sm:$0xff] %v4076
        %4141 = vst [vmem:[%s190 + $0xa8] sm:$0xff] %v4077
        %4142 = vst [vmem:[%s190 + $0xb0] sm:$0xff] %v4078
        %4143 = vst [vmem:[%s190 + $0xb8] sm:$0xff] %v4079
        %4144 = vst [vmem:[%s190 + $0xc0] sm:$0xff] %v4080
        %4145 = vst [vmem:[%s190 + $0xc8] sm:$0xff] %v4081
        %4146 = vst [vmem:[%s190 + $0xd0] sm:$0xff] %v4082
        %4147 = vst [vmem:[%s190 + $0xd8] sm:$0xff] %v4083
        %4148 = vst [vmem:[%s190 + $0xe0] sm:$0xff] %v4084
        %4149 = vst [vmem:[%s190 + $0xe8] sm:$0xff] %v4085
        %4150 = vst [vmem:[%s190 + $0xf0] sm:$0xff] %v4086
        %4151 = vst [vmem:[%s190 + $0xf8] sm:$0xff] %v4087
        %4152 = vst [vmem:[%s190 + $0x100] sm:$0xff] %v4088
        %4153 = vst [vmem:[%s190 + $0x108] sm:$0xff] %v4089
        %4154 = vst [vmem:[%s190 + $0x110] sm:$0xff] %v4090
        %4155 = vst [vmem:[%s190 + $0x118] sm:$0xff] %v4091
        %4156 = vst [vmem:[%s190 + $0x120] sm:$0xff] %v4092
        %4157 = vst [vmem:[%s190 + $0x128] sm:$0xff] %v4093
        %4158 = vst [vmem:[%s190 + $0x130] sm:$0xff] %v4094
        %4159 = vst [vmem:[%s190 + $0x138] sm:$0xff] %v4095
        %4160 = vst [vmem:[%s190 + $0x140] sm:$0xff] %v4096
        %4161 = vst [vmem:[%s190 + $0x148] sm:$0xff] %v4097
        %4162 = vst [vmem:[%s190 + $0x150] sm:$0xff] %v4098
        %4163 = vst [vmem:[%s190 + $0x158] sm:$0xff] %v4099
        %4164 = vst [vmem:[%s190 + $0x160] sm:$0xff] %v4100
        %4165 = vst [vmem:[%s190 + $0x168] sm:$0xff] %v4101
        %4166 = vst [vmem:[%s190 + $0x170] sm:$0xff] %v4102
        %4167 = vst [vmem:[%s190 + $0x178] sm:$0xff] %v4103
        %4168 = vst [vmem:[%s190 + $0x180] sm:$0xff] %v4104
        %4169 = vst [vmem:[%s190 + $0x188] sm:$0xff] %v4105
        %4170 = vst [vmem:[%s190 + $0x190] sm:$0xff] %v4106
        %4171 = vst [vmem:[%s190 + $0x198] sm:$0xff] %v4107
        %4172 = vst [vmem:[%s190 + $0x1a0] sm:$0xff] %v4108
        %4173 = vst [vmem:[%s190 + $0x1a8] sm:$0xff] %v4109
        %4174 = vst [vmem:[%s190 + $0x1b0] sm:$0xff] %v4110
        %4175 = vst [vmem:[%s190 + $0x1b8] sm:$0xff] %v4111
        %4176 = vst [vmem:[%s190 + $0x1c0] sm:$0xff] %v4112
        %4177 = vst [vmem:[%s190 + $0x1c8] sm:$0xff] %v4113
        %4178 = vst [vmem:[%s190 + $0x1d0] sm:$0xff] %v4114
        %4179 = vst [vmem:[%s190 + $0x1d8] sm:$0xff] %v4115
        %4180 = vst [vmem:[%s190 + $0x1e0] sm:$0xff] %v4116
        %4181 = vst [vmem:[%s190 + $0x1e8] sm:$0xff] %v4117
        %4182 = vst [vmem:[%s190 + $0x1f0] sm:$0xff] %v4118
        %4183 = vst [vmem:[%s190 + $0x1f8] sm:$0xff] %v4119
        %s4184 = sand.u32 %s115, 1
        %s4185 = scalar_lea.sflag [#allocation3], %s4184
        %s4186 = sand.u32 %s115, 1
        %s4187 = smul.addr %s4186, 512
        %s4188 = scalar_lea.vmem [#allocation2], %s4187
        // Predicated region
        $region37: #{tpu_custom_call.1} parent=35 // pred_check
          %p4189 = pneg %p125
        $region38: #{tpu_custom_call.1} parent=35 // pred_check_branch
          %4191 = sbr.rel (%p4189) target = $region40
        $region39: #{tpu_custom_call.1} parent=35 // pred_region
          %s4193 = ssub.s32 8192, 8192
          %4194 = vsyncadd %s4185, %s4193
          %s4195 = smul.addr %s18, 64
          %s4196 = smul.addr %s4195, 128
          %s4197 = scalar_lea.hbm %s4, %s4196
          %s4198 = sshll.u32 %s4188, 4
          %s4199 = int_to_ptr.vmem [resolvable:$true] %s4198
          %4204 = dma.vmem_to_hbm [thread:$0]  %s4199, 8192, %s4197, %s4185, 128, 128, 8
        $region40: #{tpu_custom_call.1} parent=35 // pred_fallthru
          _
      $region36: #{tpu_custom_call.1} parent=5 // pred_fallthru
        _
      %p4205 = scmp.le.s32.totalorder 2, %s13
      // Predicated region
      $region41: #{tpu_custom_call.1} parent=5 // pred_check
        %p4206 = pneg %p4205
      $region42: #{tpu_custom_call.1} parent=5 // pred_check_branch
        %4208 = sbr.rel (%p4206) target = $region44
      $region43: #{tpu_custom_call.1} parent=5 // pred_region
        %s4209 = ssub.s32 %s13, 2
        // Predicated region
        $region45: #{tpu_custom_call.1} parent=43 // pred_check
          %p4210 = pneg %p131
        $region46: #{tpu_custom_call.1} parent=43 // pred_check_branch
          %4212 = sbr.rel (%p4210) target = $region48
        $region47: #{tpu_custom_call.1} parent=43 // pred_region
          %s4213 = sand.u32 %s116, 1
          %s4214 = scalar_lea.sflag [#allocation3], %s4213
          %s4215 = sand.u32 %s116, 1
          %s4216 = smul.addr %s4215, 512
          %s4217 = scalar_lea.vmem [#allocation2], %s4216
          %4218 = dma.done %s4214, 8192
        $region48: #{tpu_custom_call.1} parent=43 // pred_fallthru
          _
      $region44: #{tpu_custom_call.1} parent=5 // pred_fallthru
        _
    $region6: #{tpu_custom_call.1} parent=1 // loop_footer
      %s17 = sadd.s32 1, %s13
    $region7: #{tpu_custom_call.1} parent=1 // loop_footer_branch
      %12 = sbr.rel target = $region3
    $region8: #{tpu_custom_call.1} parent=1 // loop_exit
      _
    %4219 = vsyncpa [#allocation3], 1
    %s4220 = scalar_lea.sflag [#allocation3], 1
    %4221 = vsyncpa %s4220, 1

</llo_original>
